<compile_context>
chip_gen: v7x
topology: tpu7x:2x2x1
jax: 0.10.0
libtpu: 0.0.40
codegen_flags: <defaults>
</compile_context>

<pallas_src>
import functools

import jax
import jax.numpy as jnp
from jax.experimental import pallas as pl
from jax.experimental.pallas import tpu as pltpu

LRELU_SLOPE = 0.2
BN_EPS = 1e-5          # PyTorch BatchNorm2d default eps
MAX_TM = 512           # M tile: big enough to amortize per-step overhead,
                       # small enough for v7x's 64 MiB VMEM with bf16 buffers.


# ------------------------------ helpers ------------------------------------ #

def _round_up(a, b):
    return (a + b - 1) // b * b


def _tile_m(m):
    """Pick the M tile. Full-array block (no pad) when M <= MAX_TM."""
    if m <= MAX_TM:
        return m, m
    return MAX_TM, _round_up(m, MAX_TM)


def _pad_rows(x, mp):
    m = x.shape[0]
    return x if mp == m else jnp.pad(x, ((0, mp - m), (0, 0)))


def _vmem_limit(tm, k, c, out_bytes):
    # double-buffered bf16 patches + resident bf16 weights
    # + double-buffered output + scratch/slack; clamped so it is valid on
    # v5e (128 MiB), v6e (128 MiB) and v7x (64 MiB physical) alike.
    need = 2 * tm * k * 2 + k * c * 2 + 2 * tm * c * out_bytes + (1 << 20)
    return int(min(max(2 * need, 16 * 2**20), 32 * 2**20))


# ----------------------------- Pallas kernels ------------------------------ #

def _mm_lrelu_kernel(x_ref, w_ref, o_ref):
    """One M tile of LeakyReLU(x @ w) on the MXU (f32 accumulation)."""
    acc = jnp.dot(x_ref[...], w_ref[...], preferred_element_type=jnp.float32)
    o_ref[...] = jnp.where(acc > 0, acc, LRELU_SLOPE * acc).astype(o_ref.dtype)


def _mm_bn_lrelu_kernel(x_ref, w_ref, g_ref, b_ref, o_ref, sum_sc, sq_sc, *,
                        m_total):
    """Fused conv-matmul + BatchNorm(batch stats, biased var) + LeakyReLU.

    grid = (2, m_tiles), phase-major:
      phase 0: matmul tile, accumulate per-channel sum / sum-of-squares.
      phase 1: matmul tile again (cheap), normalize + scale/shift + LeakyReLU.
    """
    phase = pl.program_id(0)
    tile = pl.program_id(1)

    acc = jnp.dot(x_ref[...], w_ref[...], preferred_element_type=jnp.float32)

    @pl.when((phase == 0) & (tile == 0))
    def _():
        sum_sc[...] = jnp.zeros_like(sum_sc)
        sq_sc[...] = jnp.zeros_like(sq_sc)

    @pl.when(phase == 0)
    def _():
        sum_sc[...] += jnp.sum(acc, axis=0, keepdims=True)
        sq_sc[...] += jnp.sum(acc * acc, axis=0, keepdims=True)

    @pl.when(phase == 1)
    def _():
        inv_m = 1.0 / float(m_total)         # padded rows are exact zeros -> stats exact
        mean = sum_sc[...] * inv_m
        var = sq_sc[...] * inv_m - mean * mean
        y = (acc - mean) * jax.lax.rsqrt(var + BN_EPS) * g_ref[...] + b_ref[...]
        o_ref[...] = jnp.where(y > 0, y, LRELU_SLOPE * y).astype(o_ref.dtype)


def _rowdot_sigmoid_kernel(x_ref, w_ref, o_ref):
    """conv5: C_out == 1 -> VPU multiply + lane reduce + sigmoid (no MXU padding)."""
    x = x_ref[...].astype(jnp.float32)
    w = w_ref[...].astype(jnp.float32)        # (1, K), broadcasts over rows
    o_ref[...] = jax.nn.sigmoid(jnp.sum(x * w, axis=-1, keepdims=True))


# ------------------------------ layer wrappers ------------------------------ #

def conv_lrelu(patches, wmat):
    """LeakyReLU(patches @ wmat): (M, K) @ (K, C) -> (M, C) bf16."""
    m, k = patches.shape
    c = wmat.shape[1]
    tm, mp = _tile_m(m)
    xp = _pad_rows(patches, mp)
    out = pl.pallas_call(
        _mm_lrelu_kernel,
        out_shape=jax.ShapeDtypeStruct((mp, c), jnp.bfloat16),
        grid=(mp // tm,),
        in_specs=[
            pl.BlockSpec((tm, k), lambda i: (i, 0)),     # patches tile
            pl.BlockSpec((k, c), lambda i: (0, 0)),      # weights, resident
        ],
        out_specs=pl.BlockSpec((tm, c), lambda i: (i, 0)),
        compiler_params=pltpu.CompilerParams(
            dimension_semantics=("parallel",),
            vmem_limit_bytes=_vmem_limit(tm, k, c, 2),
        ),
    )(xp, wmat)
    return out[:m] if mp != m else out


def conv_bn_lrelu(patches, wmat, gamma, beta):
    """Fused conv + BatchNorm(training stats) + LeakyReLU: (M, K)@(K, C) -> (M, C) bf16."""
    m, k = patches.shape
    c = wmat.shape[1]
    tm, mp = _tile_m(m)
    xp = _pad_rows(patches, mp)
    n_tiles = mp // tm
    out = pl.pallas_call(
        functools.partial(_mm_bn_lrelu_kernel, m_total=m),
        out_shape=jax.ShapeDtypeStruct((mp, c), jnp.bfloat16),
        grid=(2, n_tiles),                                # phase-major
        in_specs=[
            pl.BlockSpec((tm, k), lambda p, j: (j, 0)),   # patches tile (read each phase)
            pl.BlockSpec((k, c), lambda p, j: (0, 0)),    # weights, resident
            pl.BlockSpec((1, c), lambda p, j: (0, 0)),    # gamma
            pl.BlockSpec((1, c), lambda p, j: (0, 0)),    # beta
        ],
        # Phase 0 parks the (unwritten) output window on block 0; phase 1 maps
        # block j, so every HBM writeback carries valid phase-1 data exactly once.
        out_specs=pl.BlockSpec((tm, c), lambda p, j: (p * j, 0)),
        scratch_shapes=[
            pltpu.VMEM((1, c), jnp.float32),              # per-channel sum
            pltpu.VMEM((1, c), jnp.float32),              # per-channel sum of squares
        ],
        compiler_params=pltpu.CompilerParams(
            dimension_semantics=("arbitrary", "arbitrary"),
            vmem_limit_bytes=_vmem_limit(tm, k, c, 2),
        ),
    )(xp, wmat, gamma.reshape(1, c), beta.reshape(1, c))
    return out[:m] if mp != m else out


def rowdot_sigmoid(patches, wrow):
    """sigmoid(patches @ wrow.T) with C_out == 1. patches: (M, K), wrow: (1, K)."""
    m, _ = patches.shape
    return pl.pallas_call(
        _rowdot_sigmoid_kernel,
        out_shape=jax.ShapeDtypeStruct((m, 1), jnp.float32),
    )(patches, wrow)


# ------------------------------ JAX glue ----------------------------------- #

def im2col_nhwc(x, k, stride, pad):
    """NHWC -> (N*oh*ow, k*k*C) patch matrix, column order (kh, kw, c)."""
    n, h, w, c = x.shape
    xp = jnp.pad(x, ((0, 0), (pad, pad), (pad, pad), (0, 0)))
    oh = (h + 2 * pad - k) // stride + 1
    ow = (w + 2 * pad - k) // stride + 1
    taps = [xp[:, ki:ki + stride * oh:stride, kj:kj + stride * ow:stride, :]
            for ki in range(k) for kj in range(k)]
    patches = jnp.stack(taps, axis=3)                     # (n, oh, ow, k*k, c)
    return patches.reshape(n * oh * ow, k * k * c), oh, ow


def discriminator_forward(x_nchw, params):
    n = x_nchw.shape[0]
    # One-time layout change: NCHW -> NHWC, cast to bf16.  Channels sit on the
    # lane axis for every downstream kernel; no per-layer transposes.
    x = jnp.transpose(x_nchw, (0, 2, 3, 1)).astype(jnp.bfloat16)

    # conv1 (IC -> DF, k4 s2 p1) + LeakyReLU
    p, oh, ow = im2col_nhwc(x, 4, 2, 1)
    y = conv_lrelu(p, params["w1"])
    x = y.reshape(n, oh, ow, -1)

    # conv2/3/4: conv + BatchNorm(training stats) + LeakyReLU, one fused call each
    for i in (2, 3, 4):
        p, oh, ow = im2col_nhwc(x, 4, 2, 1)
        y = conv_bn_lrelu(p, params[f"w{i}"], params[f"g{i}"], params[f"b{i}"])
        x = y.reshape(n, oh, ow, -1)

    # conv5 (8*DF -> 1, k4 s1 p0) + Sigmoid
    p, oh, ow = im2col_nhwc(x, 4, 1, 0)
    out = rowdot_sigmoid(p, params["w5"])                 # (n, 1)

    return out.reshape(n, -1)                             # == out.view(N, -1)


# ------------------------------- params ------------------------------------- #

def init_params(key, input_channels, df):
    """DCGAN-style init in PyTorch layout (Cout, Cin, kh, kw)."""
    ks = jax.random.split(key, 5)
    std = 0.02
    raw = {
        "w1": jax.random.normal(ks[0], (df, input_channels, 4, 4), jnp.float32) * std,
        "w2": jax.random.normal(ks[1], (df * 2, df, 4, 4), jnp.float32) * std,
        "w3": jax.random.normal(ks[2], (df * 4, df * 2, 4, 4), jnp.float32) * std,
        "w4": jax.random.normal(ks[3], (df * 8, df * 4, 4, 4), jnp.float32) * std,
        "w5": jax.random.normal(ks[4], (1, df * 8, 4, 4), jnp.float32) * std,
    }
    for i, c in ((2, df * 2), (3, df * 4), (4, df * 8)):
        raw[f"g{i}"] = jnp.ones((c,), jnp.float32)    # BatchNorm2d default gamma
        raw[f"b{i}"] = jnp.zeros((c,), jnp.float32)   # BatchNorm2d default beta
    return raw


def prep_params(raw):
    """PyTorch (Cout,Cin,kh,kw) -> bf16 matmul layout matching the im2col column order."""
    p = {}
    for i in (1, 2, 3, 4):
        w = raw[f"w{i}"]
        p[f"w{i}"] = (jnp.transpose(w, (2, 3, 1, 0))      # (kh, kw, Cin, Cout)
                      .reshape(-1, w.shape[0])            # (kh*kw*Cin, Cout)
                      .astype(jnp.bfloat16))
        if i > 1:
            p[f"g{i}"] = raw[f"g{i}"]
            p[f"b{i}"] = raw[f"b{i}"]
    w5 = raw["w5"]                                        # (1, Cin, 4, 4)
    p["w5"] = (jnp.transpose(w5, (2, 3, 1, 0))
               .reshape(-1, 1).T                          # (1, kh*kw*Cin)
               .astype(jnp.bfloat16))
    return p


# ------------------------------- main --------------------------------------- #

if __name__ == "__main__":
    # Small config: args.input_channels=3, args.df=8. Spatial size 64 is the
    # minimum the architecture implies (four stride-2 convs then a valid 4x4 conv).
    batch, input_channels, df, size = 2, 3, 8, 64

    key = jax.random.PRNGKey(0)
    k_x, k_p = jax.random.split(key)
    x = jax.random.normal(k_x, (batch, input_channels, size, size), jnp.float32)
    params = prep_params(init_params(k_p, input_channels, df))

    out = jax.jit(discriminator_forward)(x, params)
    out = jax.block_until_ready(out)

    assert out.shape == (batch, 1), out.shape
    assert bool(jnp.all(jnp.isfinite(out)))
    assert bool(jnp.all((out >= 0.0) & (out <= 1.0)))  # sigmoid output
    print("KERNEL_OK")
</pallas_src>

<mosaic_0001>
module attributes {stable_mosaic.version = 11 : i64} {
  func.func @_mm_lrelu_kernel(%arg0: i32, %arg1: memref<512x48xbf16, #tpu.memory_space<vmem>>, %arg2: memref<48x8xbf16, #tpu.memory_space<vmem>>, %arg3: memref<512x8xbf16, #tpu.memory_space<vmem>>) attributes {dimension_semantics = [#tpu.dimension_semantics<parallel>], iteration_bounds = array<i64: 4>, scalar_prefetch = 0 : i64, scratch_operands = 0 : i64, tpu.core_type = #tpu.core_type<tc>, window_params = [{transform_indices = @transform_0, window_bounds = array<i64: 512, 48>}, {pipeline_mode = #tpu.pipeline_mode<synchronous>, transform_indices = @transform_1, window_bounds = array<i64: 48, 8>}, {transform_indices = @transform_2, window_bounds = array<i64: 512, 8>}]} {
    %c0 = arith.constant 0 : index
    %c0_0 = arith.constant 0 : index
    %0 = vector.load %arg1[%c0, %c0_0] : memref<512x48xbf16, #tpu.memory_space<vmem>>, vector<512x48xbf16>
    %c0_1 = arith.constant 0 : index
    %c0_2 = arith.constant 0 : index
    %1 = vector.load %arg2[%c0_1, %c0_2] : memref<48x8xbf16, #tpu.memory_space<vmem>>, vector<48x8xbf16>
    %cst = arith.constant dense<0.000000e+00> : vector<512x8xf32>
    %2 = tpu.matmul %0, %1, %cst {dimension_numbers = #tpu.dot_dimension_numbers<[1], [0], [0], [1], [0, 0, 1, 1], [], []>} : vector<512x48xbf16>, vector<48x8xbf16>, vector<512x8xf32> -> vector<512x8xf32>
    %cst_3 = arith.constant 0.000000e+00 : f32
    %3 = vector.broadcast %cst_3 : f32 to vector<512x8xf32>
    %4 = arith.cmpf ogt, %2, %3 : vector<512x8xf32>
    %cst_4 = arith.constant 2.000000e-01 : f32
    %5 = vector.broadcast %cst_4 : f32 to vector<512x8xf32>
    %6 = arith.mulf %5, %2 : vector<512x8xf32>
    %7 = arith.select %4, %2, %6 : vector<512x8xi1>, vector<512x8xf32>
    %8 = arith.truncf %7 : vector<512x8xf32> to vector<512x8xbf16>
    %c0_5 = arith.constant 0 : index
    %c0_6 = arith.constant 0 : index
    %9 = vector.load %arg3[%c0_5, %c0_6] : memref<512x8xbf16, #tpu.memory_space<vmem>>, vector<512x8xbf16>
    tpu.vector_store %arg3[%c0_5, %c0_6], %8 {strides = array<i32>} : memref<512x8xbf16, #tpu.memory_space<vmem>>, vector<512x8xbf16>,
    return
  }
  func.func @transform_0(%arg0: i32) -> (i32, i32) {
    %c0_i32 = arith.constant 0 : i32
    %c0_i32_0 = arith.constant 0 : i32
    return %arg0, %c0_i32 : i32, i32
  }
  func.func @transform_1(%arg0: i32) -> (i32, i32) {
    %c0_i32 = arith.constant 0 : i32
    %c0_i32_0 = arith.constant 0 : i32
    %c0_i32_1 = arith.constant 0 : i32
    return %c0_i32, %c0_i32_0 : i32, i32
  }
  func.func @transform_2(%arg0: i32) -> (i32, i32) {
    %c0_i32 = arith.constant 0 : i32
    %c0_i32_0 = arith.constant 0 : i32
    return %arg0, %c0_i32 : i32, i32
  }
}

module attributes {stable_mosaic.version = 11 : i64} {
  func.func @_mm_bn_lrelu_kernel(%arg0: i32, %arg1: i32, %arg2: memref<512x128xbf16, #tpu.memory_space<vmem>>, %arg3: memref<128x16xbf16, #tpu.memory_space<vmem>>, %arg4: memref<1x16xf32, #tpu.memory_space<vmem>>, %arg5: memref<1x16xf32, #tpu.memory_space<vmem>>, %arg6: memref<512x16xbf16, #tpu.memory_space<vmem>>, %arg7: memref<1x16xf32, #tpu.memory_space<vmem>>, %arg8: memref<1x16xf32, #tpu.memory_space<vmem>>) attributes {dimension_semantics = [#tpu.dimension_semantics<arbitrary>, #tpu.dimension_semantics<arbitrary>], iteration_bounds = array<i64: 2, 1>, scalar_prefetch = 0 : i64, scratch_operands = 2 : i64, tpu.core_type = #tpu.core_type<tc>, window_params = [{transform_indices = @transform_0, window_bounds = array<i64: 512, 128>}, {pipeline_mode = #tpu.pipeline_mode<synchronous>, transform_indices = @transform_1, window_bounds = array<i64: 128, 16>}, {pipeline_mode = #tpu.pipeline_mode<synchronous>, transform_indices = @transform_2, window_bounds = array<i64: 1, 16>}, {pipeline_mode = #tpu.pipeline_mode<synchronous>, transform_indices = @transform_3, window_bounds = array<i64: 1, 16>}, {transform_indices = @transform_4, window_bounds = array<i64: 512, 16>}]} {
    %c0 = arith.constant 0 : index
    %c0_0 = arith.constant 0 : index
    %0 = vector.load %arg2[%c0, %c0_0] : memref<512x128xbf16, #tpu.memory_space<vmem>>, vector<512x128xbf16>
    %c0_1 = arith.constant 0 : index
    %c0_2 = arith.constant 0 : index
    %1 = vector.load %arg3[%c0_1, %c0_2] : memref<128x16xbf16, #tpu.memory_space<vmem>>, vector<128x16xbf16>
    %cst = arith.constant dense<0.000000e+00> : vector<512x16xf32>
    %2 = tpu.matmul %0, %1, %cst {dimension_numbers = #tpu.dot_dimension_numbers<[1], [0], [0], [1], [0, 0, 1, 1], [], []>} : vector<512x128xbf16>, vector<128x16xbf16>, vector<512x16xf32> -> vector<512x16xf32>
    %c0_i32 = arith.constant 0 : i32
    %3 = arith.cmpi eq, %arg0, %c0_i32 : i32
    %c0_i32_3 = arith.constant 0 : i32
    %4 = arith.cmpi eq, %arg1, %c0_i32_3 : i32
    %5 = arith.andi %3, %4 : i1
    %6 = arith.extui %5 : i1 to i32
    %c0_i32_4 = arith.constant 0 : i32
    %7 = arith.cmpi ne, %6, %c0_i32_4 : i32
    scf.if %7 {
      %cst_8 = arith.constant 0.000000e+00 : f32
      %14 = vector.broadcast %cst_8 : f32 to vector<1x16xf32>
      %c0_9 = arith.constant 0 : index
      %c0_10 = arith.constant 0 : index
      %15 = vector.load %arg7[%c0_9, %c0_10] : memref<1x16xf32, #tpu.memory_space<vmem>>, vector<1x16xf32>
      tpu.vector_store %arg7[%c0_9, %c0_10], %14 {strides = array<i32>} : memref<1x16xf32, #tpu.memory_space<vmem>>, vector<1x16xf32>,
      %cst_11 = arith.constant 0.000000e+00 : f32
      %16 = vector.broadcast %cst_11 : f32 to vector<1x16xf32>
      %c0_12 = arith.constant 0 : index
      %c0_13 = arith.constant 0 : index
      %17 = vector.load %arg8[%c0_12, %c0_13] : memref<1x16xf32, #tpu.memory_space<vmem>>, vector<1x16xf32>
      tpu.vector_store %arg8[%c0_12, %c0_13], %16 {strides = array<i32>} : memref<1x16xf32, #tpu.memory_space<vmem>>, vector<1x16xf32>,
    } else {
    }
    %c0_i32_5 = arith.constant 0 : i32
    %8 = arith.cmpi eq, %arg0, %c0_i32_5 : i32
    %9 = arith.extui %8 : i1 to i32
    %c0_i32_6 = arith.constant 0 : i32
    %10 = arith.cmpi ne, %9, %c0_i32_6 : i32
    scf.if %10 {
      %c0_8 = arith.constant 0 : index
      %c0_9 = arith.constant 0 : index
      %14 = vector.load %arg7[%c0_8, %c0_9] : memref<1x16xf32, #tpu.memory_space<vmem>>, vector<1x16xf32>
      %cst_10 = arith.constant dense<0.000000e+00> : vector<16xf32>
      %15 = vector.multi_reduction <add>, %2, %cst_10 [0] : vector<512x16xf32> to vector<16xf32>
      %16 = vector.shape_cast %15 : vector<16xf32> to vector<1x16xf32>
      %17 = arith.addf %14, %16 : vector<1x16xf32>
      %c0_11 = arith.constant 0 : index
      %c0_12 = arith.constant 0 : index
      %18 = vector.load %arg7[%c0_11, %c0_12] : memref<1x16xf32, #tpu.memory_space<vmem>>, vector<1x16xf32>
      tpu.vector_store %arg7[%c0_11, %c0_12], %17 {strides = array<i32>} : memref<1x16xf32, #tpu.memory_space<vmem>>, vector<1x16xf32>,
      %c0_13 = arith.constant 0 : index
      %c0_14 = arith.constant 0 : index
      %19 = vector.load %arg8[%c0_13, %c0_14] : memref<1x16xf32, #tpu.memory_space<vmem>>, vector<1x16xf32>
      %20 = arith.mulf %2, %2 : vector<512x16xf32>
      %cst_15 = arith.constant dense<0.000000e+00> : vector<16xf32>
      %21 = vector.multi_reduction <add>, %20, %cst_15 [0] : vector<512x16xf32> to vector<16xf32>
      %22 = vector.shape_cast %21 : vector<16xf32> to vector<1x16xf32>
      %23 = arith.addf %19, %22 : vector<1x16xf32>
      %c0_16 = arith.constant 0 : index
      %c0_17 = arith.constant 0 : index
      %24 = vector.load %arg8[%c0_16, %c0_17] : memref<1x16xf32, #tpu.memory_space<vmem>>, vector<1x16xf32>
      tpu.vector_store %arg8[%c0_16, %c0_17], %23 {strides = array<i32>} : memref<1x16xf32, #tpu.memory_space<vmem>>, vector<1x16xf32>,
    } else {
    }
    %c1_i32 = arith.constant 1 : i32
    %11 = arith.cmpi eq, %arg0, %c1_i32 : i32
    %12 = arith.extui %11 : i1 to i32
    %c0_i32_7 = arith.constant 0 : i32
    %13 = arith.cmpi ne, %12, %c0_i32_7 : i32
    scf.if %13 {
      %c0_8 = arith.constant 0 : index
      %c0_9 = arith.constant 0 : index
      %14 = vector.load %arg7[%c0_8, %c0_9] : memref<1x16xf32, #tpu.memory_space<vmem>>, vector<1x16xf32>
      %cst_10 = arith.constant 0.001953125 : f32
      %15 = vector.broadcast %cst_10 : f32 to vector<1x16xf32>
      %16 = arith.mulf %14, %15 : vector<1x16xf32>
      %c0_11 = arith.constant 0 : index
      %c0_12 = arith.constant 0 : index
      %17 = vector.load %arg8[%c0_11, %c0_12] : memref<1x16xf32, #tpu.memory_space<vmem>>, vector<1x16xf32>
      %cst_13 = arith.constant 0.001953125 : f32
      %18 = vector.broadcast %cst_13 : f32 to vector<1x16xf32>
      %19 = arith.mulf %17, %18 : vector<1x16xf32>
      %20 = arith.mulf %16, %16 : vector<1x16xf32>
      %21 = arith.subf %19, %20 : vector<1x16xf32>
      %22 = vector.broadcast %16 : vector<1x16xf32> to vector<512x16xf32>
      %23 = arith.subf %2, %22 : vector<512x16xf32>
      %cst_14 = arith.constant 9.99999974E-6 : f32
      %24 = vector.broadcast %cst_14 : f32 to vector<1x16xf32>
      %25 = arith.addf %21, %24 : vector<1x16xf32>
      %26 = math.rsqrt %25 : vector<1x16xf32>
      %27 = vector.broadcast %26 : vector<1x16xf32> to vector<512x16xf32>
      %28 = arith.mulf %23, %27 : vector<512x16xf32>
      %c0_15 = arith.constant 0 : index
      %c0_16 = arith.constant 0 : index
      %29 = vector.load %arg4[%c0_15, %c0_16] : memref<1x16xf32, #tpu.memory_space<vmem>>, vector<1x16xf32>
      %30 = vector.broadcast %29 : vector<1x16xf32> to vector<512x16xf32>
      %31 = arith.mulf %28, %30 : vector<512x16xf32>
      %c0_17 = arith.constant 0 : index
      %c0_18 = arith.constant 0 : index
      %32 = vector.load %arg5[%c0_17, %c0_18] : memref<1x16xf32, #tpu.memory_space<vmem>>, vector<1x16xf32>
      %33 = vector.broadcast %32 : vector<1x16xf32> to vector<512x16xf32>
      %34 = arith.addf %31, %33 : vector<512x16xf32>
      %cst_19 = arith.constant 0.000000e+00 : f32
      %35 = vector.broadcast %cst_19 : f32 to vector<512x16xf32>
      %36 = arith.cmpf ogt, %34, %35 : vector<512x16xf32>
      %cst_20 = arith.constant 2.000000e-01 : f32
      %37 = vector.broadcast %cst_20 : f32 to vector<512x16xf32>
      %38 = arith.mulf %37, %34 : vector<512x16xf32>
      %39 = arith.select %36, %34, %38 : vector<512x16xi1>, vector<512x16xf32>
      %40 = arith.truncf %39 : vector<512x16xf32> to vector<512x16xbf16>
      %c0_21 = arith.constant 0 : index
      %c0_22 = arith.constant 0 : index
      %41 = vector.load %arg6[%c0_21, %c0_22] : memref<512x16xbf16, #tpu.memory_space<vmem>>, vector<512x16xbf16>
      tpu.vector_store %arg6[%c0_21, %c0_22], %40 {strides = array<i32>} : memref<512x16xbf16, #tpu.memory_space<vmem>>, vector<512x16xbf16>,
    } else {
    }
    return
  }
  func.func @transform_0(%arg0: i32, %arg1: i32) -> (i32, i32) {
    %c0_i32 = arith.constant 0 : i32
    %c0_i32_0 = arith.constant 0 : i32
    return %arg1, %c0_i32 : i32, i32
  }
  func.func @transform_1(%arg0: i32, %arg1: i32) -> (i32, i32) {
    %c0_i32 = arith.constant 0 : i32
    %c0_i32_0 = arith.constant 0 : i32
    %c0_i32_1 = arith.constant 0 : i32
    return %c0_i32, %c0_i32_0 : i32, i32
  }
  func.func @transform_2(%arg0: i32, %arg1: i32) -> (i32, i32) {
    %c0_i32 = arith.constant 0 : i32
    %c0_i32_0 = arith.constant 0 : i32
    %c0_i32_1 = arith.constant 0 : i32
    return %c0_i32, %c0_i32_0 : i32, i32
  }
  func.func @transform_3(%arg0: i32, %arg1: i32) -> (i32, i32) {
    %c0_i32 = arith.constant 0 : i32
    %c0_i32_0 = arith.constant 0 : i32
    %c0_i32_1 = arith.constant 0 : i32
    return %c0_i32, %c0_i32_0 : i32, i32
  }
  func.func @transform_4(%arg0: i32, %arg1: i32) -> (i32, i32) {
    %0 = arith.muli %arg0, %arg1 : i32
    %c0_i32 = arith.constant 0 : i32
    %c0_i32_0 = arith.constant 0 : i32
    return %0, %c0_i32 : i32, i32
  }
}

module attributes {stable_mosaic.version = 11 : i64} {
  func.func @_mm_bn_lrelu_kernel(%arg0: i32, %arg1: i32, %arg2: memref<128x256xbf16, #tpu.memory_space<vmem>>, %arg3: memref<256x32xbf16, #tpu.memory_space<vmem>>, %arg4: memref<1x32xf32, #tpu.memory_space<vmem>>, %arg5: memref<1x32xf32, #tpu.memory_space<vmem>>, %arg6: memref<128x32xbf16, #tpu.memory_space<vmem>>, %arg7: memref<1x32xf32, #tpu.memory_space<vmem>>, %arg8: memref<1x32xf32, #tpu.memory_space<vmem>>) attributes {dimension_semantics = [#tpu.dimension_semantics<arbitrary>, #tpu.dimension_semantics<arbitrary>], iteration_bounds = array<i64: 2, 1>, scalar_prefetch = 0 : i64, scratch_operands = 2 : i64, tpu.core_type = #tpu.core_type<tc>, window_params = [{transform_indices = @transform_0, window_bounds = array<i64: 128, 256>}, {pipeline_mode = #tpu.pipeline_mode<synchronous>, transform_indices = @transform_1, window_bounds = array<i64: 256, 32>}, {pipeline_mode = #tpu.pipeline_mode<synchronous>, transform_indices = @transform_2, window_bounds = array<i64: 1, 32>}, {pipeline_mode = #tpu.pipeline_mode<synchronous>, transform_indices = @transform_3, window_bounds = array<i64: 1, 32>}, {transform_indices = @transform_4, window_bounds = array<i64: 128, 32>}]} {
    %c0 = arith.constant 0 : index
    %c0_0 = arith.constant 0 : index
    %0 = vector.load %arg2[%c0, %c0_0] : memref<128x256xbf16, #tpu.memory_space<vmem>>, vector<128x256xbf16>
    %c0_1 = arith.constant 0 : index
    %c0_2 = arith.constant 0 : index
    %1 = vector.load %arg3[%c0_1, %c0_2] : memref<256x32xbf16, #tpu.memory_space<vmem>>, vector<256x32xbf16>
    %cst = arith.constant dense<0.000000e+00> : vector<128x32xf32>
    %2 = tpu.matmul %0, %1, %cst {dimension_numbers = #tpu.dot_dimension_numbers<[1], [0], [0], [1], [0, 0, 1, 1], [], []>} : vector<128x256xbf16>, vector<256x32xbf16>, vector<128x32xf32> -> vector<128x32xf32>
    %c0_i32 = arith.constant 0 : i32
    %3 = arith.cmpi eq, %arg0, %c0_i32 : i32
    %c0_i32_3 = arith.constant 0 : i32
    %4 = arith.cmpi eq, %arg1, %c0_i32_3 : i32
    %5 = arith.andi %3, %4 : i1
    %6 = arith.extui %5 : i1 to i32
    %c0_i32_4 = arith.constant 0 : i32
    %7 = arith.cmpi ne, %6, %c0_i32_4 : i32
    scf.if %7 {
      %cst_8 = arith.constant 0.000000e+00 : f32
      %14 = vector.broadcast %cst_8 : f32 to vector<1x32xf32>
      %c0_9 = arith.constant 0 : index
      %c0_10 = arith.constant 0 : index
      %15 = vector.load %arg7[%c0_9, %c0_10] : memref<1x32xf32, #tpu.memory_space<vmem>>, vector<1x32xf32>
      tpu.vector_store %arg7[%c0_9, %c0_10], %14 {strides = array<i32>} : memref<1x32xf32, #tpu.memory_space<vmem>>, vector<1x32xf32>,
      %cst_11 = arith.constant 0.000000e+00 : f32
      %16 = vector.broadcast %cst_11 : f32 to vector<1x32xf32>
      %c0_12 = arith.constant 0 : index
      %c0_13 = arith.constant 0 : index
      %17 = vector.load %arg8[%c0_12, %c0_13] : memref<1x32xf32, #tpu.memory_space<vmem>>, vector<1x32xf32>
      tpu.vector_store %arg8[%c0_12, %c0_13], %16 {strides = array<i32>} : memref<1x32xf32, #tpu.memory_space<vmem>>, vector<1x32xf32>,
    } else {
    }
    %c0_i32_5 = arith.constant 0 : i32
    %8 = arith.cmpi eq, %arg0, %c0_i32_5 : i32
    %9 = arith.extui %8 : i1 to i32
    %c0_i32_6 = arith.constant 0 : i32
    %10 = arith.cmpi ne, %9, %c0_i32_6 : i32
    scf.if %10 {
      %c0_8 = arith.constant 0 : index
      %c0_9 = arith.constant 0 : index
      %14 = vector.load %arg7[%c0_8, %c0_9] : memref<1x32xf32, #tpu.memory_space<vmem>>, vector<1x32xf32>
      %cst_10 = arith.constant dense<0.000000e+00> : vector<32xf32>
      %15 = vector.multi_reduction <add>, %2, %cst_10 [0] : vector<128x32xf32> to vector<32xf32>
      %16 = vector.shape_cast %15 : vector<32xf32> to vector<1x32xf32>
      %17 = arith.addf %14, %16 : vector<1x32xf32>
      %c0_11 = arith.constant 0 : index
      %c0_12 = arith.constant 0 : index
      %18 = vector.load %arg7[%c0_11, %c0_12] : memref<1x32xf32, #tpu.memory_space<vmem>>, vector<1x32xf32>
      tpu.vector_store %arg7[%c0_11, %c0_12], %17 {strides = array<i32>} : memref<1x32xf32, #tpu.memory_space<vmem>>, vector<1x32xf32>,
      %c0_13 = arith.constant 0 : index
      %c0_14 = arith.constant 0 : index
      %19 = vector.load %arg8[%c0_13, %c0_14] : memref<1x32xf32, #tpu.memory_space<vmem>>, vector<1x32xf32>
      %20 = arith.mulf %2, %2 : vector<128x32xf32>
      %cst_15 = arith.constant dense<0.000000e+00> : vector<32xf32>
      %21 = vector.multi_reduction <add>, %20, %cst_15 [0] : vector<128x32xf32> to vector<32xf32>
      %22 = vector.shape_cast %21 : vector<32xf32> to vector<1x32xf32>
      %23 = arith.addf %19, %22 : vector<1x32xf32>
      %c0_16 = arith.constant 0 : index
      %c0_17 = arith.constant 0 : index
      %24 = vector.load %arg8[%c0_16, %c0_17] : memref<1x32xf32, #tpu.memory_space<vmem>>, vector<1x32xf32>
      tpu.vector_store %arg8[%c0_16, %c0_17], %23 {strides = array<i32>} : memref<1x32xf32, #tpu.memory_space<vmem>>, vector<1x32xf32>,
    } else {
    }
    %c1_i32 = arith.constant 1 : i32
    %11 = arith.cmpi eq, %arg0, %c1_i32 : i32
    %12 = arith.extui %11 : i1 to i32
    %c0_i32_7 = arith.constant 0 : i32
    %13 = arith.cmpi ne, %12, %c0_i32_7 : i32
    scf.if %13 {
      %c0_8 = arith.constant 0 : index
      %c0_9 = arith.constant 0 : index
      %14 = vector.load %arg7[%c0_8, %c0_9] : memref<1x32xf32, #tpu.memory_space<vmem>>, vector<1x32xf32>
      %cst_10 = arith.constant 7.812500e-03 : f32
      %15 = vector.broadcast %cst_10 : f32 to vector<1x32xf32>
      %16 = arith.mulf %14, %15 : vector<1x32xf32>
      %c0_11 = arith.constant 0 : index
      %c0_12 = arith.constant 0 : index
      %17 = vector.load %arg8[%c0_11, %c0_12] : memref<1x32xf32, #tpu.memory_space<vmem>>, vector<1x32xf32>
      %cst_13 = arith.constant 7.812500e-03 : f32
      %18 = vector.broadcast %cst_13 : f32 to vector<1x32xf32>
      %19 = arith.mulf %17, %18 : vector<1x32xf32>
      %20 = arith.mulf %16, %16 : vector<1x32xf32>
      %21 = arith.subf %19, %20 : vector<1x32xf32>
      %22 = vector.broadcast %16 : vector<1x32xf32> to vector<128x32xf32>
      %23 = arith.subf %2, %22 : vector<128x32xf32>
      %cst_14 = arith.constant 9.99999974E-6 : f32
      %24 = vector.broadcast %cst_14 : f32 to vector<1x32xf32>
      %25 = arith.addf %21, %24 : vector<1x32xf32>
      %26 = math.rsqrt %25 : vector<1x32xf32>
      %27 = vector.broadcast %26 : vector<1x32xf32> to vector<128x32xf32>
      %28 = arith.mulf %23, %27 : vector<128x32xf32>
      %c0_15 = arith.constant 0 : index
      %c0_16 = arith.constant 0 : index
      %29 = vector.load %arg4[%c0_15, %c0_16] : memref<1x32xf32, #tpu.memory_space<vmem>>, vector<1x32xf32>
      %30 = vector.broadcast %29 : vector<1x32xf32> to vector<128x32xf32>
      %31 = arith.mulf %28, %30 : vector<128x32xf32>
      %c0_17 = arith.constant 0 : index
      %c0_18 = arith.constant 0 : index
      %32 = vector.load %arg5[%c0_17, %c0_18] : memref<1x32xf32, #tpu.memory_space<vmem>>, vector<1x32xf32>
      %33 = vector.broadcast %32 : vector<1x32xf32> to vector<128x32xf32>
      %34 = arith.addf %31, %33 : vector<128x32xf32>
      %cst_19 = arith.constant 0.000000e+00 : f32
      %35 = vector.broadcast %cst_19 : f32 to vector<128x32xf32>
      %36 = arith.cmpf ogt, %34, %35 : vector<128x32xf32>
      %cst_20 = arith.constant 2.000000e-01 : f32
      %37 = vector.broadcast %cst_20 : f32 to vector<128x32xf32>
      %38 = arith.mulf %37, %34 : vector<128x32xf32>
      %39 = arith.select %36, %34, %38 : vector<128x32xi1>, vector<128x32xf32>
      %40 = arith.truncf %39 : vector<128x32xf32> to vector<128x32xbf16>
      %c0_21 = arith.constant 0 : index
      %c0_22 = arith.constant 0 : index
      %41 = vector.load %arg6[%c0_21, %c0_22] : memref<128x32xbf16, #tpu.memory_space<vmem>>, vector<128x32xbf16>
      tpu.vector_store %arg6[%c0_21, %c0_22], %40 {strides = array<i32>} : memref<128x32xbf16, #tpu.memory_space<vmem>>, vector<128x32xbf16>,
    } else {
    }
    return
  }
  func.func @transform_0(%arg0: i32, %arg1: i32) -> (i32, i32) {
    %c0_i32 = arith.constant 0 : i32
    %c0_i32_0 = arith.constant 0 : i32
    return %arg1, %c0_i32 : i32, i32
  }
  func.func @transform_1(%arg0: i32, %arg1: i32) -> (i32, i32) {
    %c0_i32 = arith.constant 0 : i32
    %c0_i32_0 = arith.constant 0 : i32
    %c0_i32_1 = arith.constant 0 : i32
    return %c0_i32, %c0_i32_0 : i32, i32
  }
  func.func @transform_2(%arg0: i32, %arg1: i32) -> (i32, i32) {
    %c0_i32 = arith.constant 0 : i32
    %c0_i32_0 = arith.constant 0 : i32
    %c0_i32_1 = arith.constant 0 : i32
    return %c0_i32, %c0_i32_0 : i32, i32
  }
  func.func @transform_3(%arg0: i32, %arg1: i32) -> (i32, i32) {
    %c0_i32 = arith.constant 0 : i32
    %c0_i32_0 = arith.constant 0 : i32
    %c0_i32_1 = arith.constant 0 : i32
    return %c0_i32, %c0_i32_0 : i32, i32
  }
  func.func @transform_4(%arg0: i32, %arg1: i32) -> (i32, i32) {
    %0 = arith.muli %arg0, %arg1 : i32
    %c0_i32 = arith.constant 0 : i32
    %c0_i32_0 = arith.constant 0 : i32
    return %0, %c0_i32 : i32, i32
  }
}

module attributes {stable_mosaic.version = 11 : i64} {
  func.func @_mm_bn_lrelu_kernel(%arg0: i32, %arg1: i32, %arg2: memref<32x512xbf16, #tpu.memory_space<vmem>>, %arg3: memref<512x64xbf16, #tpu.memory_space<vmem>>, %arg4: memref<1x64xf32, #tpu.memory_space<vmem>>, %arg5: memref<1x64xf32, #tpu.memory_space<vmem>>, %arg6: memref<32x64xbf16, #tpu.memory_space<vmem>>, %arg7: memref<1x64xf32, #tpu.memory_space<vmem>>, %arg8: memref<1x64xf32, #tpu.memory_space<vmem>>) attributes {dimension_semantics = [#tpu.dimension_semantics<arbitrary>, #tpu.dimension_semantics<arbitrary>], iteration_bounds = array<i64: 2, 1>, scalar_prefetch = 0 : i64, scratch_operands = 2 : i64, tpu.core_type = #tpu.core_type<tc>, window_params = [{transform_indices = @transform_0, window_bounds = array<i64: 32, 512>}, {pipeline_mode = #tpu.pipeline_mode<synchronous>, transform_indices = @transform_1, window_bounds = array<i64: 512, 64>}, {pipeline_mode = #tpu.pipeline_mode<synchronous>, transform_indices = @transform_2, window_bounds = array<i64: 1, 64>}, {pipeline_mode = #tpu.pipeline_mode<synchronous>, transform_indices = @transform_3, window_bounds = array<i64: 1, 64>}, {transform_indices = @transform_4, window_bounds = array<i64: 32, 64>}]} {
    %c0 = arith.constant 0 : index
    %c0_0 = arith.constant 0 : index
    %0 = vector.load %arg2[%c0, %c0_0] : memref<32x512xbf16, #tpu.memory_space<vmem>>, vector<32x512xbf16>
    %c0_1 = arith.constant 0 : index
    %c0_2 = arith.constant 0 : index
    %1 = vector.load %arg3[%c0_1, %c0_2] : memref<512x64xbf16, #tpu.memory_space<vmem>>, vector<512x64xbf16>
    %cst = arith.constant dense<0.000000e+00> : vector<32x64xf32>
    %2 = tpu.matmul %0, %1, %cst {dimension_numbers = #tpu.dot_dimension_numbers<[1], [0], [0], [1], [0, 0, 1, 1], [], []>} : vector<32x512xbf16>, vector<512x64xbf16>, vector<32x64xf32> -> vector<32x64xf32>
    %c0_i32 = arith.constant 0 : i32
    %3 = arith.cmpi eq, %arg0, %c0_i32 : i32
    %c0_i32_3 = arith.constant 0 : i32
    %4 = arith.cmpi eq, %arg1, %c0_i32_3 : i32
    %5 = arith.andi %3, %4 : i1
    %6 = arith.extui %5 : i1 to i32
    %c0_i32_4 = arith.constant 0 : i32
    %7 = arith.cmpi ne, %6, %c0_i32_4 : i32
    scf.if %7 {
      %cst_8 = arith.constant 0.000000e+00 : f32
      %14 = vector.broadcast %cst_8 : f32 to vector<1x64xf32>
      %c0_9 = arith.constant 0 : index
      %c0_10 = arith.constant 0 : index
      %15 = vector.load %arg7[%c0_9, %c0_10] : memref<1x64xf32, #tpu.memory_space<vmem>>, vector<1x64xf32>
      tpu.vector_store %arg7[%c0_9, %c0_10], %14 {strides = array<i32>} : memref<1x64xf32, #tpu.memory_space<vmem>>, vector<1x64xf32>,
      %cst_11 = arith.constant 0.000000e+00 : f32
      %16 = vector.broadcast %cst_11 : f32 to vector<1x64xf32>
      %c0_12 = arith.constant 0 : index
      %c0_13 = arith.constant 0 : index
      %17 = vector.load %arg8[%c0_12, %c0_13] : memref<1x64xf32, #tpu.memory_space<vmem>>, vector<1x64xf32>
      tpu.vector_store %arg8[%c0_12, %c0_13], %16 {strides = array<i32>} : memref<1x64xf32, #tpu.memory_space<vmem>>, vector<1x64xf32>,
    } else {
    }
    %c0_i32_5 = arith.constant 0 : i32
    %8 = arith.cmpi eq, %arg0, %c0_i32_5 : i32
    %9 = arith.extui %8 : i1 to i32
    %c0_i32_6 = arith.constant 0 : i32
    %10 = arith.cmpi ne, %9, %c0_i32_6 : i32
    scf.if %10 {
      %c0_8 = arith.constant 0 : index
      %c0_9 = arith.constant 0 : index
      %14 = vector.load %arg7[%c0_8, %c0_9] : memref<1x64xf32, #tpu.memory_space<vmem>>, vector<1x64xf32>
      %cst_10 = arith.constant dense<0.000000e+00> : vector<64xf32>
      %15 = vector.multi_reduction <add>, %2, %cst_10 [0] : vector<32x64xf32> to vector<64xf32>
      %16 = vector.shape_cast %15 : vector<64xf32> to vector<1x64xf32>
      %17 = arith.addf %14, %16 : vector<1x64xf32>
      %c0_11 = arith.constant 0 : index
      %c0_12 = arith.constant 0 : index
      %18 = vector.load %arg7[%c0_11, %c0_12] : memref<1x64xf32, #tpu.memory_space<vmem>>, vector<1x64xf32>
      tpu.vector_store %arg7[%c0_11, %c0_12], %17 {strides = array<i32>} : memref<1x64xf32, #tpu.memory_space<vmem>>, vector<1x64xf32>,
      %c0_13 = arith.constant 0 : index
      %c0_14 = arith.constant 0 : index
      %19 = vector.load %arg8[%c0_13, %c0_14] : memref<1x64xf32, #tpu.memory_space<vmem>>, vector<1x64xf32>
      %20 = arith.mulf %2, %2 : vector<32x64xf32>
      %cst_15 = arith.constant dense<0.000000e+00> : vector<64xf32>
      %21 = vector.multi_reduction <add>, %20, %cst_15 [0] : vector<32x64xf32> to vector<64xf32>
      %22 = vector.shape_cast %21 : vector<64xf32> to vector<1x64xf32>
      %23 = arith.addf %19, %22 : vector<1x64xf32>
      %c0_16 = arith.constant 0 : index
      %c0_17 = arith.constant 0 : index
      %24 = vector.load %arg8[%c0_16, %c0_17] : memref<1x64xf32, #tpu.memory_space<vmem>>, vector<1x64xf32>
      tpu.vector_store %arg8[%c0_16, %c0_17], %23 {strides = array<i32>} : memref<1x64xf32, #tpu.memory_space<vmem>>, vector<1x64xf32>,
    } else {
    }
    %c1_i32 = arith.constant 1 : i32
    %11 = arith.cmpi eq, %arg0, %c1_i32 : i32
    %12 = arith.extui %11 : i1 to i32
    %c0_i32_7 = arith.constant 0 : i32
    %13 = arith.cmpi ne, %12, %c0_i32_7 : i32
    scf.if %13 {
      %c0_8 = arith.constant 0 : index
      %c0_9 = arith.constant 0 : index
      %14 = vector.load %arg7[%c0_8, %c0_9] : memref<1x64xf32, #tpu.memory_space<vmem>>, vector<1x64xf32>
      %cst_10 = arith.constant 3.125000e-02 : f32
      %15 = vector.broadcast %cst_10 : f32 to vector<1x64xf32>
      %16 = arith.mulf %14, %15 : vector<1x64xf32>
      %c0_11 = arith.constant 0 : index
      %c0_12 = arith.constant 0 : index
      %17 = vector.load %arg8[%c0_11, %c0_12] : memref<1x64xf32, #tpu.memory_space<vmem>>, vector<1x64xf32>
      %cst_13 = arith.constant 3.125000e-02 : f32
      %18 = vector.broadcast %cst_13 : f32 to vector<1x64xf32>
      %19 = arith.mulf %17, %18 : vector<1x64xf32>
      %20 = arith.mulf %16, %16 : vector<1x64xf32>
      %21 = arith.subf %19, %20 : vector<1x64xf32>
      %22 = vector.broadcast %16 : vector<1x64xf32> to vector<32x64xf32>
      %23 = arith.subf %2, %22 : vector<32x64xf32>
      %cst_14 = arith.constant 9.99999974E-6 : f32
      %24 = vector.broadcast %cst_14 : f32 to vector<1x64xf32>
      %25 = arith.addf %21, %24 : vector<1x64xf32>
      %26 = math.rsqrt %25 : vector<1x64xf32>
      %27 = vector.broadcast %26 : vector<1x64xf32> to vector<32x64xf32>
      %28 = arith.mulf %23, %27 : vector<32x64xf32>
      %c0_15 = arith.constant 0 : index
      %c0_16 = arith.constant 0 : index
      %29 = vector.load %arg4[%c0_15, %c0_16] : memref<1x64xf32, #tpu.memory_space<vmem>>, vector<1x64xf32>
      %30 = vector.broadcast %29 : vector<1x64xf32> to vector<32x64xf32>
      %31 = arith.mulf %28, %30 : vector<32x64xf32>
      %c0_17 = arith.constant 0 : index
      %c0_18 = arith.constant 0 : index
      %32 = vector.load %arg5[%c0_17, %c0_18] : memref<1x64xf32, #tpu.memory_space<vmem>>, vector<1x64xf32>
      %33 = vector.broadcast %32 : vector<1x64xf32> to vector<32x64xf32>
      %34 = arith.addf %31, %33 : vector<32x64xf32>
      %cst_19 = arith.constant 0.000000e+00 : f32
      %35 = vector.broadcast %cst_19 : f32 to vector<32x64xf32>
      %36 = arith.cmpf ogt, %34, %35 : vector<32x64xf32>
      %cst_20 = arith.constant 2.000000e-01 : f32
      %37 = vector.broadcast %cst_20 : f32 to vector<32x64xf32>
      %38 = arith.mulf %37, %34 : vector<32x64xf32>
      %39 = arith.select %36, %34, %38 : vector<32x64xi1>, vector<32x64xf32>
      %40 = arith.truncf %39 : vector<32x64xf32> to vector<32x64xbf16>
      %c0_21 = arith.constant 0 : index
      %c0_22 = arith.constant 0 : index
      %41 = vector.load %arg6[%c0_21, %c0_22] : memref<32x64xbf16, #tpu.memory_space<vmem>>, vector<32x64xbf16>
      tpu.vector_store %arg6[%c0_21, %c0_22], %40 {strides = array<i32>} : memref<32x64xbf16, #tpu.memory_space<vmem>>, vector<32x64xbf16>,
    } else {
    }
    return
  }
  func.func @transform_0(%arg0: i32, %arg1: i32) -> (i32, i32) {
    %c0_i32 = arith.constant 0 : i32
    %c0_i32_0 = arith.constant 0 : i32
    return %arg1, %c0_i32 : i32, i32
  }
  func.func @transform_1(%arg0: i32, %arg1: i32) -> (i32, i32) {
    %c0_i32 = arith.constant 0 : i32
    %c0_i32_0 = arith.constant 0 : i32
    %c0_i32_1 = arith.constant 0 : i32
    return %c0_i32, %c0_i32_0 : i32, i32
  }
  func.func @transform_2(%arg0: i32, %arg1: i32) -> (i32, i32) {
    %c0_i32 = arith.constant 0 : i32
    %c0_i32_0 = arith.constant 0 : i32
    %c0_i32_1 = arith.constant 0 : i32
    return %c0_i32, %c0_i32_0 : i32, i32
  }
  func.func @transform_3(%arg0: i32, %arg1: i32) -> (i32, i32) {
    %c0_i32 = arith.constant 0 : i32
    %c0_i32_0 = arith.constant 0 : i32
    %c0_i32_1 = arith.constant 0 : i32
    return %c0_i32, %c0_i32_0 : i32, i32
  }
  func.func @transform_4(%arg0: i32, %arg1: i32) -> (i32, i32) {
    %0 = arith.muli %arg0, %arg1 : i32
    %c0_i32 = arith.constant 0 : i32
    %c0_i32_0 = arith.constant 0 : i32
    return %0, %c0_i32 : i32, i32
  }
}

module attributes {stable_mosaic.version = 11 : i64} {
  func.func @_rowdot_sigmoid_kernel(%arg0: memref<2x1024xbf16, #tpu.memory_space<vmem>>, %arg1: memref<1x1024xbf16, #tpu.memory_space<vmem>>, %arg2: memref<2x1xf32, #tpu.memory_space<vmem>>) attributes {dimension_semantics = [], scalar_prefetch = 0 : i64, scratch_operands = 0 : i64, tpu.core_type = #tpu.core_type<tc>} {
    %c0 = arith.constant 0 : index
    %c0_0 = arith.constant 0 : index
    %0 = vector.load %arg0[%c0, %c0_0] : memref<2x1024xbf16, #tpu.memory_space<vmem>>, vector<2x1024xbf16>
    %1 = arith.extf %0 : vector<2x1024xbf16> to vector<2x1024xf32>
    %c0_1 = arith.constant 0 : index
    %c0_2 = arith.constant 0 : index
    %2 = vector.load %arg1[%c0_1, %c0_2] : memref<1x1024xbf16, #tpu.memory_space<vmem>>, vector<1x1024xbf16>
    %3 = arith.extf %2 : vector<1x1024xbf16> to vector<1x1024xf32>
    %4 = vector.broadcast %3 : vector<1x1024xf32> to vector<2x1024xf32>
    %5 = arith.mulf %1, %4 : vector<2x1024xf32>
    %cst = arith.constant dense<0.000000e+00> : vector<2xf32>
    %6 = vector.multi_reduction <add>, %5, %cst [1] : vector<2x1024xf32> to vector<2xf32>
    %7 = vector.shape_cast %6 : vector<2xf32> to vector<2x1xf32>
    %8 = arith.negf %7 : vector<2x1xf32>
    %9 = math.exp %8 : vector<2x1xf32>
    %cst_3 = arith.constant 1.000000e+00 : f32
    %10 = vector.broadcast %cst_3 : f32 to vector<2x1xf32>
    %11 = arith.addf %10, %9 : vector<2x1xf32>
    %12 = arith.divf %10, %11 : vector<2x1xf32>
    %c0_4 = arith.constant 0 : index
    %c0_5 = arith.constant 0 : index
    %13 = vector.load %arg2[%c0_4, %c0_5] : memref<2x1xf32, #tpu.memory_space<vmem>>, vector<2x1xf32>
    tpu.vector_store %arg2[%c0_4, %c0_5], %12 {strides = array<i32>} : memref<2x1xf32, #tpu.memory_space<vmem>>, vector<2x1xf32>,
    return
  }
}

</mosaic_0001>

<llo_original>
// kernel: discriminator_forward.5
$region0: #{discriminator_forward.5}
  #allocation0 [shape = 'u32[]', space=smem, size = 0x4, offset = 0x4, fixed_abs, tag = 'smem constant byte address 0x4 - core index']
  #allocation1 [shape = 'u32[144,128]{1,0:T(1,128)}', space=vmem, size = 0x12000, scoped, tag = 'internal scratch']
  %s0 = inlined_call_operand.vmem [shape: bf16[2048,48], index: 0, kind: input, shape index: {}]
  %s1 = inlined_call_operand.vmem [shape: bf16[48,8], index: 1, kind: input, shape index: {}]
  %s2 = inlined_call_operand.vmem [shape: bf16[2048,8], index: 2, kind: output, shape index: {}]
  %s3 = sld [smem:[#allocation0]]
  $region41: #{discriminator_forward.5} parent=0
    _
  %s5 = ssub.s32 1, %s3
  %s6 = scalar_select 0, %s5, %s3
  loop: start=0, step=1, limit=6
  $region2: #{discriminator_forward.5} parent=0 // loop_pre_header
    _
  $region3: #{discriminator_forward.5} parent=0 // loop_header
    %s8 = sphi 0, %s12
    %p9 = scmp.ge.s32.totalorder %s8, 6
    %s18 = sphi 0, %s20
    %s21 = sphi 0, %s18
    %s22 = sphi 0, %s21
    %s38 = sphi 0, %s22
    %s42 = sphi 0, %s42
    %s44 = sphi 0, %s42
    %s45 = sphi 0, %s44
    %s59 = sphi 0, %s45
    %s65 = sphi 0, %s67
    %s68 = sphi 0, %s65
    %s69 = sphi 0, %s68
    %s85 = sphi 0, %s69
  $region4: #{discriminator_forward.5} parent=0 // loop_header_branch
    %11 = sbr.rel (%p9) target = $region8
  $region5: #{discriminator_forward.5} parent=0 // loop_body
    %s13 = ssub.s32 %s8, 1
    %s14 = ssub.s32 %s8, 2
    %s15 = sadd.s32 %s8, 1
    %s16 = ssub.s32 %s8, %s15
    %p17 = scmp.eq.s32.totalorder %s16, 0
    %s19 = sadd.s32 %s18, 1
    %s20 = scalar_select %p17, %s18, %s19
    %p23 = pneg %p17
    %p24 = scmp.eq.s32.totalorder %s8, 3
    %p25 = por %p23, %p24
    %p26 = scmp.ne.s32.totalorder %s18, %s21
    %p27 = scmp.eq.s32.totalorder %s8, 0
    %p28 = por %p26, %p27
    %p29 = scmp.ne.s32.totalorder %s18, %s21
    %p30 = scmp.eq.s32.totalorder %s13, 3
    %p31 = por %p29, %p30
    %p32 = scmp.ne.s32.totalorder %s21, %s22
    %p33 = scmp.eq.s32.totalorder %s13, 0
    %p34 = por %p32, %p33
    %p35 = scmp.ne.s32.totalorder %s21, %s22
    %p36 = scmp.eq.s32.totalorder %s14, 3
    %p37 = por %p35, %p36
    %p39 = scmp.ne.s32.totalorder %s22, %s38
    %p40 = scmp.eq.s32.totalorder %s14, 0
    %p41 = por %p39, %p40
    %s43 = sadd.s32 %s42, 1
    %p46 = scmp.eq.s32.totalorder %s8, 3
    %p47 = scmp.ne.s32.totalorder %s42, %s44
    %p48 = scmp.eq.s32.totalorder %s8, 0
    %p49 = por %p47, %p48
    %p50 = scmp.ne.s32.totalorder %s42, %s44
    %p51 = scmp.eq.s32.totalorder %s13, 3
    %p52 = por %p50, %p51
    %p53 = scmp.ne.s32.totalorder %s44, %s45
    %p54 = scmp.eq.s32.totalorder %s13, 0
    %p55 = por %p53, %p54
    %p56 = scmp.ne.s32.totalorder %s44, %s45
    %p57 = scmp.eq.s32.totalorder %s14, 3
    %p58 = por %p56, %p57
    %p60 = scmp.ne.s32.totalorder %s45, %s59
    %p61 = scmp.eq.s32.totalorder %s14, 0
    %p62 = por %p60, %p61
    %s63 = ssub.s32 %s8, %s15
    %p64 = scmp.eq.s32.totalorder %s63, 0
    %s66 = sadd.s32 %s65, 1
    %s67 = scalar_select %p64, %s65, %s66
    %p70 = pneg %p64
    %p71 = scmp.eq.s32.totalorder %s8, 3
    %p72 = por %p70, %p71
    %p73 = scmp.ne.s32.totalorder %s65, %s68
    %p74 = scmp.eq.s32.totalorder %s8, 0
    %p75 = por %p73, %p74
    %p76 = scmp.ne.s32.totalorder %s65, %s68
    %p77 = scmp.eq.s32.totalorder %s13, 3
    %p78 = por %p76, %p77
    %p79 = scmp.ne.s32.totalorder %s68, %s69
    %p80 = scmp.eq.s32.totalorder %s13, 0
    %p81 = por %p79, %p80
    %p82 = scmp.ne.s32.totalorder %s68, %s69
    %p83 = scmp.eq.s32.totalorder %s14, 3
    %p84 = por %p82, %p83
    %p86 = scmp.ne.s32.totalorder %s69, %s85
    %p87 = scmp.eq.s32.totalorder %s14, 0
    %p88 = por %p86, %p87
    %p89 = scmp.le.s32.totalorder 1, %s8
    %p90 = scmp.lt.s32.totalorder %s8, 5
    %p91 = pnand %p89, %p90
    %p92 = pneg %p91
    // Predicated region
    $region9: #{discriminator_forward.5} parent=5 // pred_check
      _
    $region10: #{discriminator_forward.5} parent=5 // pred_check_branch
      %94 = sbr.rel (%p91) target = $region12
    $region11: #{discriminator_forward.5} parent=5 // pred_region
      %s95 = ssub.s32 %s8, 1
      // Predicated region
      $region13: #{discriminator_forward.5} parent=11 // pred_check
        %p96 = pneg %p55
      $region14: #{discriminator_forward.5} parent=11 // pred_check_branch
        %98 = sbr.rel (%p96) target = $region16
      $region15: #{discriminator_forward.5} parent=11 // pred_region
        _
      $region16: #{discriminator_forward.5} parent=11 // pred_fallthru
        _
    $region12: #{discriminator_forward.5} parent=5 // pred_fallthru
      _
    %p99 = scmp.lt.s32.totalorder %s8, 4
    // Predicated region
    $region17: #{discriminator_forward.5} parent=5 // pred_check
      %p100 = pneg %p99
    $region18: #{discriminator_forward.5} parent=5 // pred_check_branch
      %102 = sbr.rel (%p100) target = $region20
    $region19: #{discriminator_forward.5} parent=5 // pred_region
      // Predicated region
      $region21: #{discriminator_forward.5} parent=19 // pred_check
        %p103 = pneg %p28
      $region22: #{discriminator_forward.5} parent=19 // pred_check_branch
        %105 = sbr.rel (%p103) target = $region24
      $region23: #{discriminator_forward.5} parent=19 // pred_region
        %s106 = smul.u32 64, %s8
        %p107 = scmp.lt.s32.totalorder %s106, 255
        %s108 = scalar_select %p107, %s106, 255
        %s109 = smul.addr %s108, 4
        %s110 = scalar_lea.vmem %s0, %s109
        %s111 = smul.u32 64, %s8
      $region24: #{discriminator_forward.5} parent=19 // pred_fallthru
        _
    $region20: #{discriminator_forward.5} parent=5 // pred_fallthru
      _
    %p112 = scmp.le.s32.totalorder 1, %s8
    %p113 = scmp.lt.s32.totalorder %s8, 5
    %p114 = pnand %p112, %p113
    %p115 = pneg %p114
    // Predicated region
    $region25: #{discriminator_forward.5} parent=5 // pred_check
      _
    $region26: #{discriminator_forward.5} parent=5 // pred_check_branch
      %117 = sbr.rel (%p114) target = $region28
    $region27: #{discriminator_forward.5} parent=5 // pred_region
      %s118 = ssub.s32 %s8, 1
      %s119 = smul.u32 64, %s13
      %p120 = scmp.lt.s32.totalorder %s119, 255
      %s121 = scalar_select %p120, %s119, 255
      %s122 = smul.addr %s121, 4
      %s123 = scalar_lea.vmem %s0, %s122
      %p124 = pneg %p34
      %p125 = pneg %p31
      %p126 = pneg %p55
      %p127 = pneg %p52
      %p128 = pneg %p81
      %p129 = pneg %p78
      %s130 = smul.u32 64, %s13
      %p131 = scmp.lt.s32.totalorder %s130, 255
      %s132 = scalar_select %p131, %s130, 255
      %s133 = smul.addr %s132, 4
      %s134 = scalar_lea.vmem %s2, %s133
      %s135 = smul.u32 64, %s13
      %p136 = scmp.lt.s32.totalorder %s135, 255
      %s137 = scalar_select %p136, %s135, 255
      %s138 = smul.addr %s137, 4
      %s139 = scalar_lea.vmem %s0, %s138
      %s140 = smul.u32 64, %s13
      %s141 = smul.u32 64, %s13
      %p142 = scmp.lt.s32.totalorder %s141, 255
      %s143 = scalar_select %p142, %s141, 255
      %s144 = smul.addr %s143, 4
      %s145 = scalar_lea.vmem %s2, %s144
      %s146 = smul.u32 64, %s13
      %v148 = vld [vmem:[%s139] sm:$0xf]
      %v149 = vld [vmem:[%s139 + $0x4] sm:$0xf]
      %v150 = vld [vmem:[%s139 + $0x8] sm:$0xf]
      %v151 = vld [vmem:[%s139 + $0xc] sm:$0xf]
      %v152 = vld [vmem:[%s139 + $0x10] sm:$0xf]
      %v153 = vld [vmem:[%s139 + $0x14] sm:$0xf]
      %v154 = vld [vmem:[%s139 + $0x18] sm:$0xf]
      %v155 = vld [vmem:[%s139 + $0x1c] sm:$0xf]
      %v156 = vld [vmem:[%s139 + $0x20] sm:$0xf]
      %v157 = vld [vmem:[%s139 + $0x24] sm:$0xf]
      %v158 = vld [vmem:[%s139 + $0x28] sm:$0xf]
      %v159 = vld [vmem:[%s139 + $0x2c] sm:$0xf]
      %v160 = vld [vmem:[%s139 + $0x30] sm:$0xf]
      %v161 = vld [vmem:[%s139 + $0x34] sm:$0xf]
      %v162 = vld [vmem:[%s139 + $0x38] sm:$0xf]
      %v163 = vld [vmem:[%s139 + $0x3c] sm:$0xf]
      %v164 = vld [vmem:[%s139 + $0x40] sm:$0xf]
      %v165 = vld [vmem:[%s139 + $0x44] sm:$0xf]
      %v166 = vld [vmem:[%s139 + $0x48] sm:$0xf]
      %v167 = vld [vmem:[%s139 + $0x4c] sm:$0xf]
      %v168 = vld [vmem:[%s139 + $0x50] sm:$0xf]
      %v169 = vld [vmem:[%s139 + $0x54] sm:$0xf]
      %v170 = vld [vmem:[%s139 + $0x58] sm:$0xf]
      %v171 = vld [vmem:[%s139 + $0x5c] sm:$0xf]
      %v172 = vld [vmem:[%s139 + $0x60] sm:$0xf]
      %v173 = vld [vmem:[%s139 + $0x64] sm:$0xf]
      %v174 = vld [vmem:[%s139 + $0x68] sm:$0xf]
      %v175 = vld [vmem:[%s139 + $0x6c] sm:$0xf]
      %v176 = vld [vmem:[%s139 + $0x70] sm:$0xf]
      %v177 = vld [vmem:[%s139 + $0x74] sm:$0xf]
      %v178 = vld [vmem:[%s139 + $0x78] sm:$0xf]
      %v179 = vld [vmem:[%s139 + $0x7c] sm:$0xf]
      %v180 = vld [vmem:[%s139 + $0x80] sm:$0xf]
      %v181 = vld [vmem:[%s139 + $0x84] sm:$0xf]
      %v182 = vld [vmem:[%s139 + $0x88] sm:$0xf]
      %v183 = vld [vmem:[%s139 + $0x8c] sm:$0xf]
      %v184 = vld [vmem:[%s139 + $0x90] sm:$0xf]
      %v185 = vld [vmem:[%s139 + $0x94] sm:$0xf]
      %v186 = vld [vmem:[%s139 + $0x98] sm:$0xf]
      %v187 = vld [vmem:[%s139 + $0x9c] sm:$0xf]
      %v188 = vld [vmem:[%s139 + $0xa0] sm:$0xf]
      %v189 = vld [vmem:[%s139 + $0xa4] sm:$0xf]
      %v190 = vld [vmem:[%s139 + $0xa8] sm:$0xf]
      %v191 = vld [vmem:[%s139 + $0xac] sm:$0xf]
      %v192 = vld [vmem:[%s139 + $0xb0] sm:$0xf]
      %v193 = vld [vmem:[%s139 + $0xb4] sm:$0xf]
      %v194 = vld [vmem:[%s139 + $0xb8] sm:$0xf]
      %v195 = vld [vmem:[%s139 + $0xbc] sm:$0xf]
      %v196 = vld [vmem:[%s139 + $0xc0] sm:$0xf]
      %v197 = vld [vmem:[%s139 + $0xc4] sm:$0xf]
      %v198 = vld [vmem:[%s139 + $0xc8] sm:$0xf]
      %v199 = vld [vmem:[%s139 + $0xcc] sm:$0xf]
      %v200 = vld [vmem:[%s139 + $0xd0] sm:$0xf]
      %v201 = vld [vmem:[%s139 + $0xd4] sm:$0xf]
      %v202 = vld [vmem:[%s139 + $0xd8] sm:$0xf]
      %v203 = vld [vmem:[%s139 + $0xdc] sm:$0xf]
      %v204 = vld [vmem:[%s139 + $0xe0] sm:$0xf]
      %v205 = vld [vmem:[%s139 + $0xe4] sm:$0xf]
      %v206 = vld [vmem:[%s139 + $0xe8] sm:$0xf]
      %v207 = vld [vmem:[%s139 + $0xec] sm:$0xf]
      %v208 = vld [vmem:[%s139 + $0xf0] sm:$0xf]
      %v209 = vld [vmem:[%s139 + $0xf4] sm:$0xf]
      %v210 = vld [vmem:[%s139 + $0xf8] sm:$0xf]
      %v211 = vld [vmem:[%s139 + $0xfc] sm:$0xf]
      %v212 = vld [vmem:[%s1] sm:$0xf]
      %v213 = vld [vmem:[%s1 + $0x4] sm:$0xf]
      %v214 = vld [vmem:[%s1 + $0x8] sm:$0xf]
      %v215 = vld [vmem:[%s1 + $0xc] sm:$0xf]
      %v216 = vld [vmem:[%s1 + $0x10] sm:$0xf]
      %v217 = vld [vmem:[%s1 + $0x14] sm:$0xf]
      %v282 = vunpack.c.l.b16 %v148
      %v283 = vunpack.c.l.b16 %v149
      %v284 = vunpack.c.l.b16 %v150
      %v285 = vunpack.c.l.b16 %v151
      %v286 = vunpack.c.l.b16 %v152
      %v287 = vunpack.c.l.b16 %v153
      %v288 = vunpack.c.l.b16 %v154
      %v289 = vunpack.c.l.b16 %v155
      %v290 = vunpack.c.l.b16 %v156
      %v291 = vunpack.c.l.b16 %v157
      %v292 = vunpack.c.l.b16 %v158
      %v293 = vunpack.c.l.b16 %v159
      %v294 = vunpack.c.l.b16 %v160
      %v295 = vunpack.c.l.b16 %v161
      %v296 = vunpack.c.l.b16 %v162
      %v297 = vunpack.c.l.b16 %v163
      %v298 = vunpack.c.l.b16 %v164
      %v299 = vunpack.c.l.b16 %v165
      %v300 = vunpack.c.l.b16 %v166
      %v301 = vunpack.c.l.b16 %v167
      %v302 = vunpack.c.l.b16 %v168
      %v303 = vunpack.c.l.b16 %v169
      %v304 = vunpack.c.l.b16 %v170
      %v305 = vunpack.c.l.b16 %v171
      %v306 = vunpack.c.l.b16 %v172
      %v307 = vunpack.c.l.b16 %v173
      %v308 = vunpack.c.l.b16 %v174
      %v309 = vunpack.c.l.b16 %v175
      %v310 = vunpack.c.l.b16 %v176
      %v311 = vunpack.c.l.b16 %v177
      %v312 = vunpack.c.l.b16 %v178
      %v313 = vunpack.c.l.b16 %v179
      %v314 = vunpack.c.l.b16 %v180
      %v315 = vunpack.c.l.b16 %v181
      %v316 = vunpack.c.l.b16 %v182
      %v317 = vunpack.c.l.b16 %v183
      %v318 = vunpack.c.l.b16 %v184
      %v319 = vunpack.c.l.b16 %v185
      %v320 = vunpack.c.l.b16 %v186
      %v321 = vunpack.c.l.b16 %v187
      %v322 = vunpack.c.l.b16 %v188
      %v323 = vunpack.c.l.b16 %v189
      %v324 = vunpack.c.l.b16 %v190
      %v325 = vunpack.c.l.b16 %v191
      %v326 = vunpack.c.l.b16 %v192
      %v327 = vunpack.c.l.b16 %v193
      %v328 = vunpack.c.l.b16 %v194
      %v329 = vunpack.c.l.b16 %v195
      %v330 = vunpack.c.l.b16 %v196
      %v331 = vunpack.c.l.b16 %v197
      %v332 = vunpack.c.l.b16 %v198
      %v333 = vunpack.c.l.b16 %v199
      %v334 = vunpack.c.l.b16 %v200
      %v335 = vunpack.c.l.b16 %v201
      %v336 = vunpack.c.l.b16 %v202
      %v337 = vunpack.c.l.b16 %v203
      %v338 = vunpack.c.l.b16 %v204
      %v339 = vunpack.c.l.b16 %v205
      %v340 = vunpack.c.l.b16 %v206
      %v341 = vunpack.c.l.b16 %v207
      %v342 = vunpack.c.l.b16 %v208
      %v343 = vunpack.c.l.b16 %v209
      %v344 = vunpack.c.l.b16 %v210
      %v345 = vunpack.c.l.b16 %v211
      %v346 = vpack.c.b16 %v283, %v282
      %v347 = vpack.c.b16 %v285, %v284
      %v348 = vpack.c.b16 %v287, %v286
      %v349 = vpack.c.b16 %v289, %v288
      %v350 = vpack.c.b16 %v291, %v290
      %v351 = vpack.c.b16 %v293, %v292
      %v352 = vpack.c.b16 %v295, %v294
      %v353 = vpack.c.b16 %v297, %v296
      %v354 = vpack.c.b16 %v299, %v298
      %v355 = vpack.c.b16 %v301, %v300
      %v356 = vpack.c.b16 %v303, %v302
      %v357 = vpack.c.b16 %v305, %v304
      %v358 = vpack.c.b16 %v307, %v306
      %v359 = vpack.c.b16 %v309, %v308
      %v360 = vpack.c.b16 %v311, %v310
      %v361 = vpack.c.b16 %v313, %v312
      %v362 = vpack.c.b16 %v315, %v314
      %v363 = vpack.c.b16 %v317, %v316
      %v364 = vpack.c.b16 %v319, %v318
      %v365 = vpack.c.b16 %v321, %v320
      %v366 = vpack.c.b16 %v323, %v322
      %v367 = vpack.c.b16 %v325, %v324
      %v368 = vpack.c.b16 %v327, %v326
      %v369 = vpack.c.b16 %v329, %v328
      %v370 = vpack.c.b16 %v331, %v330
      %v371 = vpack.c.b16 %v333, %v332
      %v372 = vpack.c.b16 %v335, %v334
      %v373 = vpack.c.b16 %v337, %v336
      %v374 = vpack.c.b16 %v339, %v338
      %v375 = vpack.c.b16 %v341, %v340
      %v376 = vpack.c.b16 %v343, %v342
      %v377 = vpack.c.b16 %v345, %v344
      %v384 = vunpack.c.l.b16 %v212
      %v385 = vunpack.c.l.b16 %v213
      %v386 = vunpack.c.l.b16 %v214
      %v387 = vunpack.c.l.b16 %v215
      %v388 = vunpack.c.l.b16 %v216
      %v389 = vunpack.c.l.b16 %v217
      %v390 = vpack.c.b16 %v385, %v384
      %v391 = vpack.c.b16 %v387, %v386
      %v392 = vpack.c.b16 %v389, %v388
      %vm396 = vcmask 392192
      %v398 = vsel %vm396, %v346, 0
      %v401 = vsel %vm396, %v347, 0
      %v404 = vsel %vm396, %v348, 0
      %v407 = vsel %vm396, %v349, 0
      %v410 = vsel %vm396, %v350, 0
      %v413 = vsel %vm396, %v351, 0
      %v416 = vsel %vm396, %v352, 0
      %v419 = vsel %vm396, %v353, 0
      %v422 = vsel %vm396, %v354, 0
      %v425 = vsel %vm396, %v355, 0
      %v428 = vsel %vm396, %v356, 0
      %v431 = vsel %vm396, %v357, 0
      %v434 = vsel %vm396, %v358, 0
      %v437 = vsel %vm396, %v359, 0
      %v440 = vsel %vm396, %v360, 0
      %v443 = vsel %vm396, %v361, 0
      %v446 = vsel %vm396, %v362, 0
      %v449 = vsel %vm396, %v363, 0
      %v452 = vsel %vm396, %v364, 0
      %v455 = vsel %vm396, %v365, 0
      %v458 = vsel %vm396, %v366, 0
      %v461 = vsel %vm396, %v367, 0
      %v464 = vsel %vm396, %v368, 0
      %v467 = vsel %vm396, %v369, 0
      %v470 = vsel %vm396, %v370, 0
      %v473 = vsel %vm396, %v371, 0
      %v476 = vsel %vm396, %v372, 0
      %v479 = vsel %vm396, %v373, 0
      %v482 = vsel %vm396, %v374, 0
      %v485 = vsel %vm396, %v375, 0
      %v488 = vsel %vm396, %v376, 0
      %v491 = vsel %vm396, %v377, 0
      %493 = vmatprep.subr.bf16.mxu0 0
      %494 = vmatpush1.bf16.msra.mxu0 %v390
      %495 = vmatprep.subr.bf16.mxu0 0
      %496 = vmatpush1.bf16.msra.mxu0 %v391
      %497 = vmatprep.subr.bf16.mxu0 0
      %498 = vmatpush1.bf16.msra.mxu0 %v392
      %499 = vmatprep.subr.bf16.mxu0 0
      %500 = vmatpush1.bf16.msra.mxu0 0
      %501 = vmatprep.subr.bf16.mxu0 0
      %502 = vmatpush1.bf16.msra.mxu0 0
      %503 = vmatprep.subr.bf16.mxu0 0
      %504 = vmatpush1.bf16.msra.mxu0 0
      %505 = vmatprep.subr.bf16.mxu0 0
      %506 = vmatpush1.bf16.msra.mxu0 0
      %507 = vmatprep.subr.bf16.mxu0 0
      %508 = vmatpush1.bf16.msra.mxu0 0
      %509 = vmatprep.subr.bf16.mxu0 0
      %510 = vmatpush1.bf16.msra.mxu0 0
      %511 = vmatprep.subr.bf16.mxu0 0
      %512 = vmatpush1.bf16.msra.mxu0 0
      %513 = vmatprep.subr.bf16.mxu0 0
      %514 = vmatpush1.bf16.msra.mxu0 0
      %515 = vmatprep.subr.bf16.mxu0 0
      %516 = vmatpush1.bf16.msra.mxu0 0
      %517 = vmatprep.subr.bf16.mxu0 0
      %518 = vmatpush1.bf16.msra.mxu0 0
      %519 = vmatprep.subr.bf16.mxu0 0
      %520 = vmatpush1.bf16.msra.mxu0 0
      %521 = vmatprep.subr.bf16.mxu0 0
      %522 = vmatpush1.bf16.msra.mxu0 0
      %523 = vmatprep.subr.bf16.mxu0 0
      %524 = vmatpush1.bf16.msra.mxu0 0
      %525 = vmatprep.mubr.bf16.mxu0 0
      %526 = vmatmul.mubr.bf16.gmra.mrb[0].mxu0 %v398
      %v527 = vpop.f32.mrb[0].mxu0
      %v528 = vadd.f32 0.0, %v527
      %v529 = vpop.f32.mrb[0].mxu0
      %v530 = vpop.f32.mrb[0].mxu0
      %v531 = vadd.f32 0.0, %v530
      %v532 = vpop.f32.mrb[0].mxu0
      %533 = vmatprep.mubr.bf16.mxu0 0
      %534 = vmatmul.mubr.bf16.gmra.mrb[0].mxu0 %v401
      %v535 = vpop.f32.mrb[0].mxu0
      %v536 = vadd.f32 0.0, %v535
      %v537 = vpop.f32.mrb[0].mxu0
      %v538 = vpop.f32.mrb[0].mxu0
      %v539 = vadd.f32 0.0, %v538
      %v540 = vpop.f32.mrb[0].mxu0
      %541 = vmatprep.mubr.bf16.mxu0 0
      %542 = vmatmul.mubr.bf16.gmra.mrb[0].mxu0 %v404
      %v543 = vpop.f32.mrb[0].mxu0
      %v544 = vadd.f32 0.0, %v543
      %v545 = vpop.f32.mrb[0].mxu0
      %v546 = vpop.f32.mrb[0].mxu0
      %v547 = vadd.f32 0.0, %v546
      %v548 = vpop.f32.mrb[0].mxu0
      %549 = vmatprep.mubr.bf16.mxu0 0
      %550 = vmatmul.mubr.bf16.gmra.mrb[0].mxu0 %v407
      %v551 = vpop.f32.mrb[0].mxu0
      %v552 = vadd.f32 0.0, %v551
      %v553 = vpop.f32.mrb[0].mxu0
      %v554 = vpop.f32.mrb[0].mxu0
      %v555 = vadd.f32 0.0, %v554
      %v556 = vpop.f32.mrb[0].mxu0
      %557 = vmatprep.mubr.bf16.mxu0 0
      %558 = vmatmul.mubr.bf16.gmra.mrb[0].mxu0 %v410
      %v559 = vpop.f32.mrb[0].mxu0
      %v560 = vadd.f32 0.0, %v559
      %v561 = vpop.f32.mrb[0].mxu0
      %v562 = vpop.f32.mrb[0].mxu0
      %v563 = vadd.f32 0.0, %v562
      %v564 = vpop.f32.mrb[0].mxu0
      %565 = vmatprep.mubr.bf16.mxu0 0
      %566 = vmatmul.mubr.bf16.gmra.mrb[0].mxu0 %v413
      %v567 = vpop.f32.mrb[0].mxu0
      %v568 = vadd.f32 0.0, %v567
      %v569 = vpop.f32.mrb[0].mxu0
      %v570 = vpop.f32.mrb[0].mxu0
      %v571 = vadd.f32 0.0, %v570
      %v572 = vpop.f32.mrb[0].mxu0
      %573 = vmatprep.mubr.bf16.mxu0 0
      %574 = vmatmul.mubr.bf16.gmra.mrb[0].mxu0 %v416
      %v575 = vpop.f32.mrb[0].mxu0
      %v576 = vadd.f32 0.0, %v575
      %v577 = vpop.f32.mrb[0].mxu0
      %v578 = vpop.f32.mrb[0].mxu0
      %v579 = vadd.f32 0.0, %v578
      %v580 = vpop.f32.mrb[0].mxu0
      %581 = vmatprep.mubr.bf16.mxu0 0
      %582 = vmatmul.mubr.bf16.gmra.mrb[0].mxu0 %v419
      %v583 = vpop.f32.mrb[0].mxu0
      %v584 = vadd.f32 0.0, %v583
      %v585 = vpop.f32.mrb[0].mxu0
      %v586 = vpop.f32.mrb[0].mxu0
      %v587 = vadd.f32 0.0, %v586
      %v588 = vpop.f32.mrb[0].mxu0
      %589 = vmatprep.mubr.bf16.mxu0 0
      %590 = vmatmul.mubr.bf16.gmra.mrb[0].mxu0 %v422
      %v591 = vpop.f32.mrb[0].mxu0
      %v592 = vadd.f32 0.0, %v591
      %v593 = vpop.f32.mrb[0].mxu0
      %v594 = vpop.f32.mrb[0].mxu0
      %v595 = vadd.f32 0.0, %v594
      %v596 = vpop.f32.mrb[0].mxu0
      %597 = vmatprep.mubr.bf16.mxu0 0
      %598 = vmatmul.mubr.bf16.gmra.mrb[0].mxu0 %v425
      %v599 = vpop.f32.mrb[0].mxu0
      %v600 = vadd.f32 0.0, %v599
      %v601 = vpop.f32.mrb[0].mxu0
      %v602 = vpop.f32.mrb[0].mxu0
      %v603 = vadd.f32 0.0, %v602
      %v604 = vpop.f32.mrb[0].mxu0
      %605 = vmatprep.mubr.bf16.mxu0 0
      %606 = vmatmul.mubr.bf16.gmra.mrb[0].mxu0 %v428
      %v607 = vpop.f32.mrb[0].mxu0
      %v608 = vadd.f32 0.0, %v607
      %v609 = vpop.f32.mrb[0].mxu0
      %v610 = vpop.f32.mrb[0].mxu0
      %v611 = vadd.f32 0.0, %v610
      %v612 = vpop.f32.mrb[0].mxu0
      %613 = vmatprep.mubr.bf16.mxu0 0
      %614 = vmatmul.mubr.bf16.gmra.mrb[0].mxu0 %v431
      %v615 = vpop.f32.mrb[0].mxu0
      %v616 = vadd.f32 0.0, %v615
      %v617 = vpop.f32.mrb[0].mxu0
      %v618 = vpop.f32.mrb[0].mxu0
      %v619 = vadd.f32 0.0, %v618
      %v620 = vpop.f32.mrb[0].mxu0
      %621 = vmatprep.mubr.bf16.mxu0 0
      %622 = vmatmul.mubr.bf16.gmra.mrb[0].mxu0 %v434
      %v623 = vpop.f32.mrb[0].mxu0
      %v624 = vadd.f32 0.0, %v623
      %v625 = vpop.f32.mrb[0].mxu0
      %v626 = vpop.f32.mrb[0].mxu0
      %v627 = vadd.f32 0.0, %v626
      %v628 = vpop.f32.mrb[0].mxu0
      %629 = vmatprep.mubr.bf16.mxu0 0
      %630 = vmatmul.mubr.bf16.gmra.mrb[0].mxu0 %v437
      %v631 = vpop.f32.mrb[0].mxu0
      %v632 = vadd.f32 0.0, %v631
      %v633 = vpop.f32.mrb[0].mxu0
      %v634 = vpop.f32.mrb[0].mxu0
      %v635 = vadd.f32 0.0, %v634
      %v636 = vpop.f32.mrb[0].mxu0
      %637 = vmatprep.mubr.bf16.mxu0 0
      %638 = vmatmul.mubr.bf16.gmra.mrb[0].mxu0 %v440
      %v639 = vpop.f32.mrb[0].mxu0
      %v640 = vadd.f32 0.0, %v639
      %v641 = vpop.f32.mrb[0].mxu0
      %v642 = vpop.f32.mrb[0].mxu0
      %v643 = vadd.f32 0.0, %v642
      %v644 = vpop.f32.mrb[0].mxu0
      %645 = vmatprep.mubr.bf16.mxu0 0
      %646 = vmatmul.mubr.bf16.gmra.mrb[0].mxu0 %v443
      %v647 = vpop.f32.mrb[0].mxu0
      %v648 = vadd.f32 0.0, %v647
      %v649 = vpop.f32.mrb[0].mxu0
      %v650 = vpop.f32.mrb[0].mxu0
      %v651 = vadd.f32 0.0, %v650
      %v652 = vpop.f32.mrb[0].mxu0
      %653 = vmatprep.mubr.bf16.mxu0 0
      %654 = vmatmul.mubr.bf16.gmra.mrb[0].mxu0 %v446
      %v655 = vpop.f32.mrb[0].mxu0
      %v656 = vadd.f32 0.0, %v655
      %v657 = vpop.f32.mrb[0].mxu0
      %v658 = vpop.f32.mrb[0].mxu0
      %v659 = vadd.f32 0.0, %v658
      %v660 = vpop.f32.mrb[0].mxu0
      %661 = vmatprep.mubr.bf16.mxu0 0
      %662 = vmatmul.mubr.bf16.gmra.mrb[0].mxu0 %v449
      %v663 = vpop.f32.mrb[0].mxu0
      %v664 = vadd.f32 0.0, %v663
      %v665 = vpop.f32.mrb[0].mxu0
      %v666 = vpop.f32.mrb[0].mxu0
      %v667 = vadd.f32 0.0, %v666
      %v668 = vpop.f32.mrb[0].mxu0
      %669 = vmatprep.mubr.bf16.mxu0 0
      %670 = vmatmul.mubr.bf16.gmra.mrb[0].mxu0 %v452
      %v671 = vpop.f32.mrb[0].mxu0
      %v672 = vadd.f32 0.0, %v671
      %v673 = vpop.f32.mrb[0].mxu0
      %v674 = vpop.f32.mrb[0].mxu0
      %v675 = vadd.f32 0.0, %v674
      %v676 = vpop.f32.mrb[0].mxu0
      %677 = vmatprep.mubr.bf16.mxu0 0
      %678 = vmatmul.mubr.bf16.gmra.mrb[0].mxu0 %v455
      %v679 = vpop.f32.mrb[0].mxu0
      %v680 = vadd.f32 0.0, %v679
      %v681 = vpop.f32.mrb[0].mxu0
      %v682 = vpop.f32.mrb[0].mxu0
      %v683 = vadd.f32 0.0, %v682
      %v684 = vpop.f32.mrb[0].mxu0
      %685 = vmatprep.mubr.bf16.mxu0 0
      %686 = vmatmul.mubr.bf16.gmra.mrb[0].mxu0 %v458
      %v687 = vpop.f32.mrb[0].mxu0
      %v688 = vadd.f32 0.0, %v687
      %v689 = vpop.f32.mrb[0].mxu0
      %v690 = vpop.f32.mrb[0].mxu0
      %v691 = vadd.f32 0.0, %v690
      %v692 = vpop.f32.mrb[0].mxu0
      %693 = vmatprep.mubr.bf16.mxu0 0
      %694 = vmatmul.mubr.bf16.gmra.mrb[0].mxu0 %v461
      %v695 = vpop.f32.mrb[0].mxu0
      %v696 = vadd.f32 0.0, %v695
      %v697 = vpop.f32.mrb[0].mxu0
      %v698 = vpop.f32.mrb[0].mxu0
      %v699 = vadd.f32 0.0, %v698
      %v700 = vpop.f32.mrb[0].mxu0
      %701 = vmatprep.mubr.bf16.mxu0 0
      %702 = vmatmul.mubr.bf16.gmra.mrb[0].mxu0 %v464
      %v703 = vpop.f32.mrb[0].mxu0
      %v704 = vadd.f32 0.0, %v703
      %v705 = vpop.f32.mrb[0].mxu0
      %v706 = vpop.f32.mrb[0].mxu0
      %v707 = vadd.f32 0.0, %v706
      %v708 = vpop.f32.mrb[0].mxu0
      %709 = vmatprep.mubr.bf16.mxu0 0
      %710 = vmatmul.mubr.bf16.gmra.mrb[0].mxu0 %v467
      %v711 = vpop.f32.mrb[0].mxu0
      %v712 = vadd.f32 0.0, %v711
      %v713 = vpop.f32.mrb[0].mxu0
      %v714 = vpop.f32.mrb[0].mxu0
      %v715 = vadd.f32 0.0, %v714
      %v716 = vpop.f32.mrb[0].mxu0
      %717 = vmatprep.mubr.bf16.mxu0 0
      %718 = vmatmul.mubr.bf16.gmra.mrb[0].mxu0 %v470
      %v719 = vpop.f32.mrb[0].mxu0
      %v720 = vadd.f32 0.0, %v719
      %v721 = vpop.f32.mrb[0].mxu0
      %v722 = vpop.f32.mrb[0].mxu0
      %v723 = vadd.f32 0.0, %v722
      %v724 = vpop.f32.mrb[0].mxu0
      %725 = vmatprep.mubr.bf16.mxu0 0
      %726 = vmatmul.mubr.bf16.gmra.mrb[0].mxu0 %v473
      %v727 = vpop.f32.mrb[0].mxu0
      %v728 = vadd.f32 0.0, %v727
      %v729 = vpop.f32.mrb[0].mxu0
      %v730 = vpop.f32.mrb[0].mxu0
      %v731 = vadd.f32 0.0, %v730
      %v732 = vpop.f32.mrb[0].mxu0
      %733 = vmatprep.mubr.bf16.mxu0 0
      %734 = vmatmul.mubr.bf16.gmra.mrb[0].mxu0 %v476
      %v735 = vpop.f32.mrb[0].mxu0
      %v736 = vadd.f32 0.0, %v735
      %v737 = vpop.f32.mrb[0].mxu0
      %v738 = vpop.f32.mrb[0].mxu0
      %v739 = vadd.f32 0.0, %v738
      %v740 = vpop.f32.mrb[0].mxu0
      %741 = vmatprep.mubr.bf16.mxu0 0
      %742 = vmatmul.mubr.bf16.gmra.mrb[0].mxu0 %v479
      %v743 = vpop.f32.mrb[0].mxu0
      %v744 = vadd.f32 0.0, %v743
      %v745 = vpop.f32.mrb[0].mxu0
      %v746 = vpop.f32.mrb[0].mxu0
      %v747 = vadd.f32 0.0, %v746
      %v748 = vpop.f32.mrb[0].mxu0
      %749 = vmatprep.mubr.bf16.mxu0 0
      %750 = vmatmul.mubr.bf16.gmra.mrb[0].mxu0 %v482
      %v751 = vpop.f32.mrb[0].mxu0
      %v752 = vadd.f32 0.0, %v751
      %v753 = vpop.f32.mrb[0].mxu0
      %v754 = vpop.f32.mrb[0].mxu0
      %v755 = vadd.f32 0.0, %v754
      %v756 = vpop.f32.mrb[0].mxu0
      %757 = vmatprep.mubr.bf16.mxu0 0
      %758 = vmatmul.mubr.bf16.gmra.mrb[0].mxu0 %v485
      %v759 = vpop.f32.mrb[0].mxu0
      %v760 = vadd.f32 0.0, %v759
      %v761 = vpop.f32.mrb[0].mxu0
      %v762 = vpop.f32.mrb[0].mxu0
      %v763 = vadd.f32 0.0, %v762
      %v764 = vpop.f32.mrb[0].mxu0
      %765 = vmatprep.mubr.bf16.mxu0 0
      %766 = vmatmul.mubr.bf16.gmra.mrb[0].mxu0 %v488
      %v767 = vpop.f32.mrb[0].mxu0
      %v768 = vadd.f32 0.0, %v767
      %v769 = vpop.f32.mrb[0].mxu0
      %v770 = vpop.f32.mrb[0].mxu0
      %v771 = vadd.f32 0.0, %v770
      %v772 = vpop.f32.mrb[0].mxu0
      %773 = vmatprep.mubr.bf16.mxu0 0
      %774 = vmatmul.mubr.bf16.gmra.mrb[0].mxu0 %v491
      %v775 = vpop.f32.mrb[0].mxu0
      %v776 = vadd.f32 0.0, %v775
      %v777 = vpop.f32.mrb[0].mxu0
      %v778 = vpop.f32.mrb[0].mxu0
      %v779 = vadd.f32 0.0, %v778
      %v780 = vpop.f32.mrb[0].mxu0
      %781 = vdwg.mxu0
      %vm782 = vcmp.gt.f32.partialorder %v528, 0.0
      %vm783 = vcmp.gt.f32.partialorder %v531, 0.0
      %vm784 = vcmp.gt.f32.partialorder %v536, 0.0
      %vm785 = vcmp.gt.f32.partialorder %v539, 0.0
      %vm786 = vcmp.gt.f32.partialorder %v544, 0.0
      %vm787 = vcmp.gt.f32.partialorder %v547, 0.0
      %vm788 = vcmp.gt.f32.partialorder %v552, 0.0
      %vm789 = vcmp.gt.f32.partialorder %v555, 0.0
      %vm790 = vcmp.gt.f32.partialorder %v560, 0.0
      %vm791 = vcmp.gt.f32.partialorder %v563, 0.0
      %vm792 = vcmp.gt.f32.partialorder %v568, 0.0
      %vm793 = vcmp.gt.f32.partialorder %v571, 0.0
      %vm794 = vcmp.gt.f32.partialorder %v576, 0.0
      %vm795 = vcmp.gt.f32.partialorder %v579, 0.0
      %vm796 = vcmp.gt.f32.partialorder %v584, 0.0
      %vm797 = vcmp.gt.f32.partialorder %v587, 0.0
      %vm798 = vcmp.gt.f32.partialorder %v592, 0.0
      %vm799 = vcmp.gt.f32.partialorder %v595, 0.0
      %vm800 = vcmp.gt.f32.partialorder %v600, 0.0
      %vm801 = vcmp.gt.f32.partialorder %v603, 0.0
      %vm802 = vcmp.gt.f32.partialorder %v608, 0.0
      %vm803 = vcmp.gt.f32.partialorder %v611, 0.0
      %vm804 = vcmp.gt.f32.partialorder %v616, 0.0
      %vm805 = vcmp.gt.f32.partialorder %v619, 0.0
      %vm806 = vcmp.gt.f32.partialorder %v624, 0.0
      %vm807 = vcmp.gt.f32.partialorder %v627, 0.0
      %vm808 = vcmp.gt.f32.partialorder %v632, 0.0
      %vm809 = vcmp.gt.f32.partialorder %v635, 0.0
      %vm810 = vcmp.gt.f32.partialorder %v640, 0.0
      %vm811 = vcmp.gt.f32.partialorder %v643, 0.0
      %vm812 = vcmp.gt.f32.partialorder %v648, 0.0
      %vm813 = vcmp.gt.f32.partialorder %v651, 0.0
      %vm814 = vcmp.gt.f32.partialorder %v656, 0.0
      %vm815 = vcmp.gt.f32.partialorder %v659, 0.0
      %vm816 = vcmp.gt.f32.partialorder %v664, 0.0
      %vm817 = vcmp.gt.f32.partialorder %v667, 0.0
      %vm818 = vcmp.gt.f32.partialorder %v672, 0.0
      %vm819 = vcmp.gt.f32.partialorder %v675, 0.0
      %vm820 = vcmp.gt.f32.partialorder %v680, 0.0
      %vm821 = vcmp.gt.f32.partialorder %v683, 0.0
      %vm822 = vcmp.gt.f32.partialorder %v688, 0.0
      %vm823 = vcmp.gt.f32.partialorder %v691, 0.0
      %vm824 = vcmp.gt.f32.partialorder %v696, 0.0
      %vm825 = vcmp.gt.f32.partialorder %v699, 0.0
      %vm826 = vcmp.gt.f32.partialorder %v704, 0.0
      %vm827 = vcmp.gt.f32.partialorder %v707, 0.0
      %vm828 = vcmp.gt.f32.partialorder %v712, 0.0
      %vm829 = vcmp.gt.f32.partialorder %v715, 0.0
      %vm830 = vcmp.gt.f32.partialorder %v720, 0.0
      %vm831 = vcmp.gt.f32.partialorder %v723, 0.0
      %vm832 = vcmp.gt.f32.partialorder %v728, 0.0
      %vm833 = vcmp.gt.f32.partialorder %v731, 0.0
      %vm834 = vcmp.gt.f32.partialorder %v736, 0.0
      %vm835 = vcmp.gt.f32.partialorder %v739, 0.0
      %vm836 = vcmp.gt.f32.partialorder %v744, 0.0
      %vm837 = vcmp.gt.f32.partialorder %v747, 0.0
      %vm838 = vcmp.gt.f32.partialorder %v752, 0.0
      %vm839 = vcmp.gt.f32.partialorder %v755, 0.0
      %vm840 = vcmp.gt.f32.partialorder %v760, 0.0
      %vm841 = vcmp.gt.f32.partialorder %v763, 0.0
      %vm842 = vcmp.gt.f32.partialorder %v768, 0.0
      %vm843 = vcmp.gt.f32.partialorder %v771, 0.0
      %vm844 = vcmp.gt.f32.partialorder %v776, 0.0
      %vm845 = vcmp.gt.f32.partialorder %v779, 0.0
      %v846 = vmul.f32 %v528, 0.2
      %v847 = vmul.f32 %v531, 0.2
      %v848 = vmul.f32 %v536, 0.2
      %v849 = vmul.f32 %v539, 0.2
      %v850 = vmul.f32 %v544, 0.2
      %v851 = vmul.f32 %v547, 0.2
      %v852 = vmul.f32 %v552, 0.2
      %v853 = vmul.f32 %v555, 0.2
      %v854 = vmul.f32 %v560, 0.2
      %v855 = vmul.f32 %v563, 0.2
      %v856 = vmul.f32 %v568, 0.2
      %v857 = vmul.f32 %v571, 0.2
      %v858 = vmul.f32 %v576, 0.2
      %v859 = vmul.f32 %v579, 0.2
      %v860 = vmul.f32 %v584, 0.2
      %v861 = vmul.f32 %v587, 0.2
      %v862 = vmul.f32 %v592, 0.2
      %v863 = vmul.f32 %v595, 0.2
      %v864 = vmul.f32 %v600, 0.2
      %v865 = vmul.f32 %v603, 0.2
      %v866 = vmul.f32 %v608, 0.2
      %v867 = vmul.f32 %v611, 0.2
      %v868 = vmul.f32 %v616, 0.2
      %v869 = vmul.f32 %v619, 0.2
      %v870 = vmul.f32 %v624, 0.2
      %v871 = vmul.f32 %v627, 0.2
      %v872 = vmul.f32 %v632, 0.2
      %v873 = vmul.f32 %v635, 0.2
      %v874 = vmul.f32 %v640, 0.2
      %v875 = vmul.f32 %v643, 0.2
      %v876 = vmul.f32 %v648, 0.2
      %v877 = vmul.f32 %v651, 0.2
      %v878 = vmul.f32 %v656, 0.2
      %v879 = vmul.f32 %v659, 0.2
      %v880 = vmul.f32 %v664, 0.2
      %v881 = vmul.f32 %v667, 0.2
      %v882 = vmul.f32 %v672, 0.2
      %v883 = vmul.f32 %v675, 0.2
      %v884 = vmul.f32 %v680, 0.2
      %v885 = vmul.f32 %v683, 0.2
      %v886 = vmul.f32 %v688, 0.2
      %v887 = vmul.f32 %v691, 0.2
      %v888 = vmul.f32 %v696, 0.2
      %v889 = vmul.f32 %v699, 0.2
      %v890 = vmul.f32 %v704, 0.2
      %v891 = vmul.f32 %v707, 0.2
      %v892 = vmul.f32 %v712, 0.2
      %v893 = vmul.f32 %v715, 0.2
      %v894 = vmul.f32 %v720, 0.2
      %v895 = vmul.f32 %v723, 0.2
      %v896 = vmul.f32 %v728, 0.2
      %v897 = vmul.f32 %v731, 0.2
      %v898 = vmul.f32 %v736, 0.2
      %v899 = vmul.f32 %v739, 0.2
      %v900 = vmul.f32 %v744, 0.2
      %v901 = vmul.f32 %v747, 0.2
      %v902 = vmul.f32 %v752, 0.2
      %v903 = vmul.f32 %v755, 0.2
      %v904 = vmul.f32 %v760, 0.2
      %v905 = vmul.f32 %v763, 0.2
      %v906 = vmul.f32 %v768, 0.2
      %v907 = vmul.f32 %v771, 0.2
      %v908 = vmul.f32 %v776, 0.2
      %v909 = vmul.f32 %v779, 0.2
      %v910 = vsel %vm782, %v528, %v846
      %v911 = vsel %vm783, %v531, %v847
      %v912 = vsel %vm784, %v536, %v848
      %v913 = vsel %vm785, %v539, %v849
      %v914 = vsel %vm786, %v544, %v850
      %v915 = vsel %vm787, %v547, %v851
      %v916 = vsel %vm788, %v552, %v852
      %v917 = vsel %vm789, %v555, %v853
      %v918 = vsel %vm790, %v560, %v854
      %v919 = vsel %vm791, %v563, %v855
      %v920 = vsel %vm792, %v568, %v856
      %v921 = vsel %vm793, %v571, %v857
      %v922 = vsel %vm794, %v576, %v858
      %v923 = vsel %vm795, %v579, %v859
      %v924 = vsel %vm796, %v584, %v860
      %v925 = vsel %vm797, %v587, %v861
      %v926 = vsel %vm798, %v592, %v862
      %v927 = vsel %vm799, %v595, %v863
      %v928 = vsel %vm800, %v600, %v864
      %v929 = vsel %vm801, %v603, %v865
      %v930 = vsel %vm802, %v608, %v866
      %v931 = vsel %vm803, %v611, %v867
      %v932 = vsel %vm804, %v616, %v868
      %v933 = vsel %vm805, %v619, %v869
      %v934 = vsel %vm806, %v624, %v870
      %v935 = vsel %vm807, %v627, %v871
      %v936 = vsel %vm808, %v632, %v872
      %v937 = vsel %vm809, %v635, %v873
      %v938 = vsel %vm810, %v640, %v874
      %v939 = vsel %vm811, %v643, %v875
      %v940 = vsel %vm812, %v648, %v876
      %v941 = vsel %vm813, %v651, %v877
      %v942 = vsel %vm814, %v656, %v878
      %v943 = vsel %vm815, %v659, %v879
      %v944 = vsel %vm816, %v664, %v880
      %v945 = vsel %vm817, %v667, %v881
      %v946 = vsel %vm818, %v672, %v882
      %v947 = vsel %vm819, %v675, %v883
      %v948 = vsel %vm820, %v680, %v884
      %v949 = vsel %vm821, %v683, %v885
      %v950 = vsel %vm822, %v688, %v886
      %v951 = vsel %vm823, %v691, %v887
      %v952 = vsel %vm824, %v696, %v888
      %v953 = vsel %vm825, %v699, %v889
      %v954 = vsel %vm826, %v704, %v890
      %v955 = vsel %vm827, %v707, %v891
      %v956 = vsel %vm828, %v712, %v892
      %v957 = vsel %vm829, %v715, %v893
      %v958 = vsel %vm830, %v720, %v894
      %v959 = vsel %vm831, %v723, %v895
      %v960 = vsel %vm832, %v728, %v896
      %v961 = vsel %vm833, %v731, %v897
      %v962 = vsel %vm834, %v736, %v898
      %v963 = vsel %vm835, %v739, %v899
      %v964 = vsel %vm836, %v744, %v900
      %v965 = vsel %vm837, %v747, %v901
      %v966 = vsel %vm838, %v752, %v902
      %v967 = vsel %vm839, %v755, %v903
      %v968 = vsel %vm840, %v760, %v904
      %v969 = vsel %vm841, %v763, %v905
      %v970 = vsel %vm842, %v768, %v906
      %v971 = vsel %vm843, %v771, %v907
      %v972 = vsel %vm844, %v776, %v908
      %v973 = vsel %vm845, %v779, %v909
      %v974 = vpack.c.bf16 %v911, %v910
      %v975 = vpack.c.bf16 %v913, %v912
      %v976 = vpack.c.bf16 %v915, %v914
      %v977 = vpack.c.bf16 %v917, %v916
      %v978 = vpack.c.bf16 %v919, %v918
      %v979 = vpack.c.bf16 %v921, %v920
      %v980 = vpack.c.bf16 %v923, %v922
      %v981 = vpack.c.bf16 %v925, %v924
      %v982 = vpack.c.bf16 %v927, %v926
      %v983 = vpack.c.bf16 %v929, %v928
      %v984 = vpack.c.bf16 %v931, %v930
      %v985 = vpack.c.bf16 %v933, %v932
      %v986 = vpack.c.bf16 %v935, %v934
      %v987 = vpack.c.bf16 %v937, %v936
      %v988 = vpack.c.bf16 %v939, %v938
      %v989 = vpack.c.bf16 %v941, %v940
      %v990 = vpack.c.bf16 %v943, %v942
      %v991 = vpack.c.bf16 %v945, %v944
      %v992 = vpack.c.bf16 %v947, %v946
      %v993 = vpack.c.bf16 %v949, %v948
      %v994 = vpack.c.bf16 %v951, %v950
      %v995 = vpack.c.bf16 %v953, %v952
      %v996 = vpack.c.bf16 %v955, %v954
      %v997 = vpack.c.bf16 %v957, %v956
      %v998 = vpack.c.bf16 %v959, %v958
      %v999 = vpack.c.bf16 %v961, %v960
      %v1000 = vpack.c.bf16 %v963, %v962
      %v1001 = vpack.c.bf16 %v965, %v964
      %v1002 = vpack.c.bf16 %v967, %v966
      %v1003 = vpack.c.bf16 %v969, %v968
      %v1004 = vpack.c.bf16 %v971, %v970
      %v1005 = vpack.c.bf16 %v973, %v972
      %v1038 = vunpack.c.l.b16 %v974
      %v1039 = vunpack.c.h.b16 %v974
      %v1040 = vunpack.c.l.b16 %v975
      %v1041 = vunpack.c.h.b16 %v975
      %v1042 = vunpack.c.l.b16 %v976
      %v1043 = vunpack.c.h.b16 %v976
      %v1044 = vunpack.c.l.b16 %v977
      %v1045 = vunpack.c.h.b16 %v977
      %v1046 = vunpack.c.l.b16 %v978
      %v1047 = vunpack.c.h.b16 %v978
      %v1048 = vunpack.c.l.b16 %v979
      %v1049 = vunpack.c.h.b16 %v979
      %v1050 = vunpack.c.l.b16 %v980
      %v1051 = vunpack.c.h.b16 %v980
      %v1052 = vunpack.c.l.b16 %v981
      %v1053 = vunpack.c.h.b16 %v981
      %v1054 = vunpack.c.l.b16 %v982
      %v1055 = vunpack.c.h.b16 %v982
      %v1056 = vunpack.c.l.b16 %v983
      %v1057 = vunpack.c.h.b16 %v983
      %v1058 = vunpack.c.l.b16 %v984
      %v1059 = vunpack.c.h.b16 %v984
      %v1060 = vunpack.c.l.b16 %v985
      %v1061 = vunpack.c.h.b16 %v985
      %v1062 = vunpack.c.l.b16 %v986
      %v1063 = vunpack.c.h.b16 %v986
      %v1064 = vunpack.c.l.b16 %v987
      %v1065 = vunpack.c.h.b16 %v987
      %v1066 = vunpack.c.l.b16 %v988
      %v1067 = vunpack.c.h.b16 %v988
      %v1068 = vunpack.c.l.b16 %v989
      %v1069 = vunpack.c.h.b16 %v989
      %v1070 = vunpack.c.l.b16 %v990
      %v1071 = vunpack.c.h.b16 %v990
      %v1072 = vunpack.c.l.b16 %v991
      %v1073 = vunpack.c.h.b16 %v991
      %v1074 = vunpack.c.l.b16 %v992
      %v1075 = vunpack.c.h.b16 %v992
      %v1076 = vunpack.c.l.b16 %v993
      %v1077 = vunpack.c.h.b16 %v993
      %v1078 = vunpack.c.l.b16 %v994
      %v1079 = vunpack.c.h.b16 %v994
      %v1080 = vunpack.c.l.b16 %v995
      %v1081 = vunpack.c.h.b16 %v995
      %v1082 = vunpack.c.l.b16 %v996
      %v1083 = vunpack.c.h.b16 %v996
      %v1084 = vunpack.c.l.b16 %v997
      %v1085 = vunpack.c.h.b16 %v997
      %v1086 = vunpack.c.l.b16 %v998
      %v1087 = vunpack.c.h.b16 %v998
      %v1088 = vunpack.c.l.b16 %v999
      %v1089 = vunpack.c.h.b16 %v999
      %v1090 = vunpack.c.l.b16 %v1000
      %v1091 = vunpack.c.h.b16 %v1000
      %v1092 = vunpack.c.l.b16 %v1001
      %v1093 = vunpack.c.h.b16 %v1001
      %v1094 = vunpack.c.l.b16 %v1002
      %v1095 = vunpack.c.h.b16 %v1002
      %v1096 = vunpack.c.l.b16 %v1003
      %v1097 = vunpack.c.h.b16 %v1003
      %v1098 = vunpack.c.l.b16 %v1004
      %v1099 = vunpack.c.h.b16 %v1004
      %v1100 = vunpack.c.l.b16 %v1005
      %v1101 = vunpack.c.h.b16 %v1005
      %v1102 = vpack.c.b16 %v1038, %v1038
      %v1103 = vpack.c.b16 %v1039, %v1039
      %v1104 = vpack.c.b16 %v1040, %v1040
      %v1105 = vpack.c.b16 %v1041, %v1041
      %v1106 = vpack.c.b16 %v1042, %v1042
      %v1107 = vpack.c.b16 %v1043, %v1043
      %v1108 = vpack.c.b16 %v1044, %v1044
      %v1109 = vpack.c.b16 %v1045, %v1045
      %v1110 = vpack.c.b16 %v1046, %v1046
      %v1111 = vpack.c.b16 %v1047, %v1047
      %v1112 = vpack.c.b16 %v1048, %v1048
      %v1113 = vpack.c.b16 %v1049, %v1049
      %v1114 = vpack.c.b16 %v1050, %v1050
      %v1115 = vpack.c.b16 %v1051, %v1051
      %v1116 = vpack.c.b16 %v1052, %v1052
      %v1117 = vpack.c.b16 %v1053, %v1053
      %v1118 = vpack.c.b16 %v1054, %v1054
      %v1119 = vpack.c.b16 %v1055, %v1055
      %v1120 = vpack.c.b16 %v1056, %v1056
      %v1121 = vpack.c.b16 %v1057, %v1057
      %v1122 = vpack.c.b16 %v1058, %v1058
      %v1123 = vpack.c.b16 %v1059, %v1059
      %v1124 = vpack.c.b16 %v1060, %v1060
      %v1125 = vpack.c.b16 %v1061, %v1061
      %v1126 = vpack.c.b16 %v1062, %v1062
      %v1127 = vpack.c.b16 %v1063, %v1063
      %v1128 = vpack.c.b16 %v1064, %v1064
      %v1129 = vpack.c.b16 %v1065, %v1065
      %v1130 = vpack.c.b16 %v1066, %v1066
      %v1131 = vpack.c.b16 %v1067, %v1067
      %v1132 = vpack.c.b16 %v1068, %v1068
      %v1133 = vpack.c.b16 %v1069, %v1069
      %v1134 = vpack.c.b16 %v1070, %v1070
      %v1135 = vpack.c.b16 %v1071, %v1071
      %v1136 = vpack.c.b16 %v1072, %v1072
      %v1137 = vpack.c.b16 %v1073, %v1073
      %v1138 = vpack.c.b16 %v1074, %v1074
      %v1139 = vpack.c.b16 %v1075, %v1075
      %v1140 = vpack.c.b16 %v1076, %v1076
      %v1141 = vpack.c.b16 %v1077, %v1077
      %v1142 = vpack.c.b16 %v1078, %v1078
      %v1143 = vpack.c.b16 %v1079, %v1079
      %v1144 = vpack.c.b16 %v1080, %v1080
      %v1145 = vpack.c.b16 %v1081, %v1081
      %v1146 = vpack.c.b16 %v1082, %v1082
      %v1147 = vpack.c.b16 %v1083, %v1083
      %v1148 = vpack.c.b16 %v1084, %v1084
      %v1149 = vpack.c.b16 %v1085, %v1085
      %v1150 = vpack.c.b16 %v1086, %v1086
      %v1151 = vpack.c.b16 %v1087, %v1087
      %v1152 = vpack.c.b16 %v1088, %v1088
      %v1153 = vpack.c.b16 %v1089, %v1089
      %v1154 = vpack.c.b16 %v1090, %v1090
      %v1155 = vpack.c.b16 %v1091, %v1091
      %v1156 = vpack.c.b16 %v1092, %v1092
      %v1157 = vpack.c.b16 %v1093, %v1093
      %v1158 = vpack.c.b16 %v1094, %v1094
      %v1159 = vpack.c.b16 %v1095, %v1095
      %v1160 = vpack.c.b16 %v1096, %v1096
      %v1161 = vpack.c.b16 %v1097, %v1097
      %v1162 = vpack.c.b16 %v1098, %v1098
      %v1163 = vpack.c.b16 %v1099, %v1099
      %v1164 = vpack.c.b16 %v1100, %v1100
      %v1165 = vpack.c.b16 %v1101, %v1101
      %vm1230 = vcmask 60416
      %1231 = vst.msk [vmem:[%s145] sm:$0xf] %vm1230, %v1102
      %1232 = vst.msk [vmem:[%s145 + $0x4] sm:$0xf] %vm1230, %v1103
      %1233 = vst.msk [vmem:[%s145 + $0x8] sm:$0xf] %vm1230, %v1104
      %1234 = vst.msk [vmem:[%s145 + $0xc] sm:$0xf] %vm1230, %v1105
      %1235 = vst.msk [vmem:[%s145 + $0x10] sm:$0xf] %vm1230, %v1106
      %1236 = vst.msk [vmem:[%s145 + $0x14] sm:$0xf] %vm1230, %v1107
      %1237 = vst.msk [vmem:[%s145 + $0x18] sm:$0xf] %vm1230, %v1108
      %1238 = vst.msk [vmem:[%s145 + $0x1c] sm:$0xf] %vm1230, %v1109
      %1239 = vst.msk [vmem:[%s145 + $0x20] sm:$0xf] %vm1230, %v1110
      %1240 = vst.msk [vmem:[%s145 + $0x24] sm:$0xf] %vm1230, %v1111
      %1241 = vst.msk [vmem:[%s145 + $0x28] sm:$0xf] %vm1230, %v1112
      %1242 = vst.msk [vmem:[%s145 + $0x2c] sm:$0xf] %vm1230, %v1113
      %1243 = vst.msk [vmem:[%s145 + $0x30] sm:$0xf] %vm1230, %v1114
      %1244 = vst.msk [vmem:[%s145 + $0x34] sm:$0xf] %vm1230, %v1115
      %1245 = vst.msk [vmem:[%s145 + $0x38] sm:$0xf] %vm1230, %v1116
      %1246 = vst.msk [vmem:[%s145 + $0x3c] sm:$0xf] %vm1230, %v1117
      %1247 = vst.msk [vmem:[%s145 + $0x40] sm:$0xf] %vm1230, %v1118
      %1248 = vst.msk [vmem:[%s145 + $0x44] sm:$0xf] %vm1230, %v1119
      %1249 = vst.msk [vmem:[%s145 + $0x48] sm:$0xf] %vm1230, %v1120
      %1250 = vst.msk [vmem:[%s145 + $0x4c] sm:$0xf] %vm1230, %v1121
      %1251 = vst.msk [vmem:[%s145 + $0x50] sm:$0xf] %vm1230, %v1122
      %1252 = vst.msk [vmem:[%s145 + $0x54] sm:$0xf] %vm1230, %v1123
      %1253 = vst.msk [vmem:[%s145 + $0x58] sm:$0xf] %vm1230, %v1124
      %1254 = vst.msk [vmem:[%s145 + $0x5c] sm:$0xf] %vm1230, %v1125
      %1255 = vst.msk [vmem:[%s145 + $0x60] sm:$0xf] %vm1230, %v1126
      %1256 = vst.msk [vmem:[%s145 + $0x64] sm:$0xf] %vm1230, %v1127
      %1257 = vst.msk [vmem:[%s145 + $0x68] sm:$0xf] %vm1230, %v1128
      %1258 = vst.msk [vmem:[%s145 + $0x6c] sm:$0xf] %vm1230, %v1129
      %1259 = vst.msk [vmem:[%s145 + $0x70] sm:$0xf] %vm1230, %v1130
      %1260 = vst.msk [vmem:[%s145 + $0x74] sm:$0xf] %vm1230, %v1131
      %1261 = vst.msk [vmem:[%s145 + $0x78] sm:$0xf] %vm1230, %v1132
      %1262 = vst.msk [vmem:[%s145 + $0x7c] sm:$0xf] %vm1230, %v1133
      %1263 = vst.msk [vmem:[%s145 + $0x80] sm:$0xf] %vm1230, %v1134
      %1264 = vst.msk [vmem:[%s145 + $0x84] sm:$0xf] %vm1230, %v1135
      %1265 = vst.msk [vmem:[%s145 + $0x88] sm:$0xf] %vm1230, %v1136
      %1266 = vst.msk [vmem:[%s145 + $0x8c] sm:$0xf] %vm1230, %v1137
      %1267 = vst.msk [vmem:[%s145 + $0x90] sm:$0xf] %vm1230, %v1138
      %1268 = vst.msk [vmem:[%s145 + $0x94] sm:$0xf] %vm1230, %v1139
      %1269 = vst.msk [vmem:[%s145 + $0x98] sm:$0xf] %vm1230, %v1140
      %1270 = vst.msk [vmem:[%s145 + $0x9c] sm:$0xf] %vm1230, %v1141
      %1271 = vst.msk [vmem:[%s145 + $0xa0] sm:$0xf] %vm1230, %v1142
      %1272 = vst.msk [vmem:[%s145 + $0xa4] sm:$0xf] %vm1230, %v1143
      %1273 = vst.msk [vmem:[%s145 + $0xa8] sm:$0xf] %vm1230, %v1144
      %1274 = vst.msk [vmem:[%s145 + $0xac] sm:$0xf] %vm1230, %v1145
      %1275 = vst.msk [vmem:[%s145 + $0xb0] sm:$0xf] %vm1230, %v1146
      %1276 = vst.msk [vmem:[%s145 + $0xb4] sm:$0xf] %vm1230, %v1147
      %1277 = vst.msk [vmem:[%s145 + $0xb8] sm:$0xf] %vm1230, %v1148
      %1278 = vst.msk [vmem:[%s145 + $0xbc] sm:$0xf] %vm1230, %v1149
      %1279 = vst.msk [vmem:[%s145 + $0xc0] sm:$0xf] %vm1230, %v1150
      %1280 = vst.msk [vmem:[%s145 + $0xc4] sm:$0xf] %vm1230, %v1151
      %1281 = vst.msk [vmem:[%s145 + $0xc8] sm:$0xf] %vm1230, %v1152
      %1282 = vst.msk [vmem:[%s145 + $0xcc] sm:$0xf] %vm1230, %v1153
      %1283 = vst.msk [vmem:[%s145 + $0xd0] sm:$0xf] %vm1230, %v1154
      %1284 = vst.msk [vmem:[%s145 + $0xd4] sm:$0xf] %vm1230, %v1155
      %1285 = vst.msk [vmem:[%s145 + $0xd8] sm:$0xf] %vm1230, %v1156
      %1286 = vst.msk [vmem:[%s145 + $0xdc] sm:$0xf] %vm1230, %v1157
      %1287 = vst.msk [vmem:[%s145 + $0xe0] sm:$0xf] %vm1230, %v1158
      %1288 = vst.msk [vmem:[%s145 + $0xe4] sm:$0xf] %vm1230, %v1159
      %1289 = vst.msk [vmem:[%s145 + $0xe8] sm:$0xf] %vm1230, %v1160
      %1290 = vst.msk [vmem:[%s145 + $0xec] sm:$0xf] %vm1230, %v1161
      %1291 = vst.msk [vmem:[%s145 + $0xf0] sm:$0xf] %vm1230, %v1162
      %1292 = vst.msk [vmem:[%s145 + $0xf4] sm:$0xf] %vm1230, %v1163
      %1293 = vst.msk [vmem:[%s145 + $0xf8] sm:$0xf] %vm1230, %v1164
      %1294 = vst.msk [vmem:[%s145 + $0xfc] sm:$0xf] %vm1230, %v1165
      %s1295 = smul.u32 64, %s13
      %p1296 = scmp.lt.s32.totalorder %s1295, 255
      %s1297 = scalar_select %p1296, %s1295, 255
      %s1298 = smul.addr %s1297, 4
      %s1299 = scalar_lea.vmem %s2, %s1298
      // Predicated region
      $region29: #{discriminator_forward.5} parent=27 // pred_check
        %p1300 = pneg %p78
      $region30: #{discriminator_forward.5} parent=27 // pred_check_branch
        %1302 = sbr.rel (%p1300) target = $region32
      $region31: #{discriminator_forward.5} parent=27 // pred_region
        %s1303 = smul.u32 64, %s13
      $region32: #{discriminator_forward.5} parent=27 // pred_fallthru
        _
    $region28: #{discriminator_forward.5} parent=5 // pred_fallthru
      _
    %p1304 = scmp.le.s32.totalorder 2, %s8
    // Predicated region
    $region33: #{discriminator_forward.5} parent=5 // pred_check
      %p1305 = pneg %p1304
    $region34: #{discriminator_forward.5} parent=5 // pred_check_branch
      %1307 = sbr.rel (%p1305) target = $region36
    $region35: #{discriminator_forward.5} parent=5 // pred_region
      %s1308 = ssub.s32 %s8, 2
      // Predicated region
      $region37: #{discriminator_forward.5} parent=35 // pred_check
        %p1309 = pneg %p84
      $region38: #{discriminator_forward.5} parent=35 // pred_check_branch
        %1311 = sbr.rel (%p1309) target = $region40
      $region39: #{discriminator_forward.5} parent=35 // pred_region
        %s1312 = smul.u32 64, %s14
        %p1313 = scmp.lt.s32.totalorder %s1312, 255
        %s1314 = scalar_select %p1313, %s1312, 255
        %s1315 = smul.addr %s1314, 4
        %s1316 = scalar_lea.vmem %s2, %s1315
      $region40: #{discriminator_forward.5} parent=35 // pred_fallthru
        _
    $region36: #{discriminator_forward.5} parent=5 // pred_fallthru
      _
  $region6: #{discriminator_forward.5} parent=0 // loop_footer
    %s12 = sadd.s32 1, %s8
  $region7: #{discriminator_forward.5} parent=0 // loop_footer_branch
    %7 = sbr.rel target = $region3
  $region8: #{discriminator_forward.5} parent=0 // loop_exit
    _

// kernel: discriminator_forward.6
$region0: #{discriminator_forward.6}
  #allocation0 [shape = 'u32[]', space=smem, size = 0x4, offset = 0x4, fixed_abs, tag = 'smem constant byte address 0x4 - core index']
  #allocation1 [shape = 'u32[144,128]{1,0:T(1,128)}', space=vmem, size = 0x12000, scoped, tag = 'internal scratch']
  #allocation2 [shape = 'f32[1,16]{1,0:T(1,128)}', space=vmem, size = 0x200, scoped, tag = 'scratch operand']
  #allocation3 [shape = 'f32[1,16]{1,0:T(1,128)}', space=vmem, size = 0x200, scoped, tag = 'scratch operand']
  %s0 = inlined_call_operand.vmem [shape: bf16[512,128], index: 0, kind: input, shape index: {}]
  %s1 = inlined_call_operand.vmem [shape: bf16[128,16], index: 1, kind: input, shape index: {}]
  %s2 = inlined_call_operand.vmem [shape: f32[1,16], index: 2, kind: input, shape index: {}]
  %s3 = inlined_call_operand.vmem [shape: f32[1,16], index: 3, kind: input, shape index: {}]
  %s4 = inlined_call_operand.vmem [shape: bf16[512,16], index: 4, kind: output, shape index: {}]
  %s5 = sld [smem:[#allocation0]]
  $region61: #{discriminator_forward.6} parent=0
    _
  %s7 = ssub.s32 1, %s5
  %s8 = scalar_select 0, %s7, %s5
  loop: start=0, step=1, limit=4
  $region2: #{discriminator_forward.6} parent=0 // loop_pre_header
    _
  $region3: #{discriminator_forward.6} parent=0 // loop_header
    %s10 = sphi 0, %s14
    %p11 = scmp.ge.s32.totalorder %s10, 4
    %s17 = sphi 0, %s29
    %s18 = sphi 0, %s25
    %s19 = sphi 0, %s17
    %s20 = sphi 0, %s18
    %s21 = sphi 0, %s19
    %s22 = sphi 0, %s20
    %s32 = sphi 0, %s34
    %s35 = sphi 0, %s32
    %s36 = sphi 0, %s35
    %s52 = sphi 0, %s36
    %s56 = sphi 0, %s56
    %s58 = sphi 0, %s56
    %s59 = sphi 0, %s58
    %s73 = sphi 0, %s59
    %s77 = sphi 0, %s77
    %s79 = sphi 0, %s77
    %s80 = sphi 0, %s79
    %s94 = sphi 0, %s80
    %s98 = sphi 0, %s98
    %s100 = sphi 0, %s98
    %s101 = sphi 0, %s100
    %s115 = sphi 0, %s101
    %s123 = sphi 0, %s125
    %s126 = sphi 0, %s123
    %s127 = sphi 0, %s126
    %s143 = sphi 0, %s127
  $region4: #{discriminator_forward.6} parent=0 // loop_header_branch
    %13 = sbr.rel (%p11) target = $region8
  $region5: #{discriminator_forward.6} parent=0 // loop_body
    %s15 = ssub.s32 %s10, 1
    %s16 = ssub.s32 %s10, 2
    %s23 = sadd.s32 1, %s18
    %p24 = scmp.ge.s32.totalorder %s23, 1
    %s25 = scalar_select %p24, 0, %s23
    %s26 = sadd.s32 1, %s17
    %s27 = scalar_select %p24, %s26, %s17
    %p28 = scmp.ge.s32.totalorder %s27, 2
    %s29 = scalar_select %p28, 0, %s27
    %s30 = ssub.s32 %s18, %s25
    %p31 = scmp.eq.s32.totalorder %s30, 0
    %s33 = sadd.s32 %s32, 1
    %s34 = scalar_select %p31, %s32, %s33
    %p37 = pneg %p31
    %p38 = scmp.eq.s32.totalorder %s10, 1
    %p39 = por %p37, %p38
    %p40 = scmp.ne.s32.totalorder %s32, %s35
    %p41 = scmp.eq.s32.totalorder %s10, 0
    %p42 = por %p40, %p41
    %p43 = scmp.ne.s32.totalorder %s32, %s35
    %p44 = scmp.eq.s32.totalorder %s15, 1
    %p45 = por %p43, %p44
    %p46 = scmp.ne.s32.totalorder %s35, %s36
    %p47 = scmp.eq.s32.totalorder %s15, 0
    %p48 = por %p46, %p47
    %p49 = scmp.ne.s32.totalorder %s35, %s36
    %p50 = scmp.eq.s32.totalorder %s16, 1
    %p51 = por %p49, %p50
    %p53 = scmp.ne.s32.totalorder %s36, %s52
    %p54 = scmp.eq.s32.totalorder %s16, 0
    %p55 = por %p53, %p54
    %s57 = sadd.s32 %s56, 1
    %p60 = scmp.eq.s32.totalorder %s10, 1
    %p61 = scmp.ne.s32.totalorder %s56, %s58
    %p62 = scmp.eq.s32.totalorder %s10, 0
    %p63 = por %p61, %p62
    %p64 = scmp.ne.s32.totalorder %s56, %s58
    %p65 = scmp.eq.s32.totalorder %s15, 1
    %p66 = por %p64, %p65
    %p67 = scmp.ne.s32.totalorder %s58, %s59
    %p68 = scmp.eq.s32.totalorder %s15, 0
    %p69 = por %p67, %p68
    %p70 = scmp.ne.s32.totalorder %s58, %s59
    %p71 = scmp.eq.s32.totalorder %s16, 1
    %p72 = por %p70, %p71
    %p74 = scmp.ne.s32.totalorder %s59, %s73
    %p75 = scmp.eq.s32.totalorder %s16, 0
    %p76 = por %p74, %p75
    %s78 = sadd.s32 %s77, 1
    %p81 = scmp.eq.s32.totalorder %s10, 1
    %p82 = scmp.ne.s32.totalorder %s77, %s79
    %p83 = scmp.eq.s32.totalorder %s10, 0
    %p84 = por %p82, %p83
    %p85 = scmp.ne.s32.totalorder %s77, %s79
    %p86 = scmp.eq.s32.totalorder %s15, 1
    %p87 = por %p85, %p86
    %p88 = scmp.ne.s32.totalorder %s79, %s80
    %p89 = scmp.eq.s32.totalorder %s15, 0
    %p90 = por %p88, %p89
    %p91 = scmp.ne.s32.totalorder %s79, %s80
    %p92 = scmp.eq.s32.totalorder %s16, 1
    %p93 = por %p91, %p92
    %p95 = scmp.ne.s32.totalorder %s80, %s94
    %p96 = scmp.eq.s32.totalorder %s16, 0
    %p97 = por %p95, %p96
    %s99 = sadd.s32 %s98, 1
    %p102 = scmp.eq.s32.totalorder %s10, 1
    %p103 = scmp.ne.s32.totalorder %s98, %s100
    %p104 = scmp.eq.s32.totalorder %s10, 0
    %p105 = por %p103, %p104
    %p106 = scmp.ne.s32.totalorder %s98, %s100
    %p107 = scmp.eq.s32.totalorder %s15, 1
    %p108 = por %p106, %p107
    %p109 = scmp.ne.s32.totalorder %s100, %s101
    %p110 = scmp.eq.s32.totalorder %s15, 0
    %p111 = por %p109, %p110
    %p112 = scmp.ne.s32.totalorder %s100, %s101
    %p113 = scmp.eq.s32.totalorder %s16, 1
    %p114 = por %p112, %p113
    %p116 = scmp.ne.s32.totalorder %s101, %s115
    %p117 = scmp.eq.s32.totalorder %s16, 0
    %p118 = por %p116, %p117
    %s119 = smul.u32 %s17, %s18
    %s120 = smul.u32 %s29, %s25
    %s121 = ssub.s32 %s119, %s120
    %p122 = scmp.eq.s32.totalorder %s121, 0
    %s124 = sadd.s32 %s123, 1
    %s125 = scalar_select %p122, %s123, %s124
    %p128 = pneg %p122
    %p129 = scmp.eq.s32.totalorder %s10, 1
    %p130 = por %p128, %p129
    %p131 = scmp.ne.s32.totalorder %s123, %s126
    %p132 = scmp.eq.s32.totalorder %s10, 0
    %p133 = por %p131, %p132
    %p134 = scmp.ne.s32.totalorder %s123, %s126
    %p135 = scmp.eq.s32.totalorder %s15, 1
    %p136 = por %p134, %p135
    %p137 = scmp.ne.s32.totalorder %s126, %s127
    %p138 = scmp.eq.s32.totalorder %s15, 0
    %p139 = por %p137, %p138
    %p140 = scmp.ne.s32.totalorder %s126, %s127
    %p141 = scmp.eq.s32.totalorder %s16, 1
    %p142 = por %p140, %p141
    %p144 = scmp.ne.s32.totalorder %s127, %s143
    %p145 = scmp.eq.s32.totalorder %s16, 0
    %p146 = por %p144, %p145
    %p147 = scmp.le.s32.totalorder 1, %s10
    %p148 = scmp.lt.s32.totalorder %s10, 3
    %p149 = pnand %p147, %p148
    %p150 = pneg %p149
    // Predicated region
    $region9: #{discriminator_forward.6} parent=5 // pred_check
      _
    $region10: #{discriminator_forward.6} parent=5 // pred_check_branch
      %152 = sbr.rel (%p149) target = $region12
    $region11: #{discriminator_forward.6} parent=5 // pred_region
      %s153 = ssub.s32 %s10, 1
      // Predicated region
      $region13: #{discriminator_forward.6} parent=11 // pred_check
        %p154 = pneg %p48
      $region14: #{discriminator_forward.6} parent=11 // pred_check_branch
        %156 = sbr.rel (%p154) target = $region16
      $region15: #{discriminator_forward.6} parent=11 // pred_region
        %s157 = smul.u32 64, %s20
        %p158 = scmp.lt.s32.totalorder %s157, 63
        %s159 = scalar_select %p158, %s157, 63
        %s160 = smul.addr %s159, 4
        %s161 = scalar_lea.vmem %s0, %s160
        %s162 = smul.u32 64, %s20
      $region16: #{discriminator_forward.6} parent=11 // pred_fallthru
        _
      // Predicated region
      $region17: #{discriminator_forward.6} parent=11 // pred_check
        %p163 = pneg %p69
      $region18: #{discriminator_forward.6} parent=11 // pred_check_branch
        %165 = sbr.rel (%p163) target = $region20
      $region19: #{discriminator_forward.6} parent=11 // pred_region
        _
      $region20: #{discriminator_forward.6} parent=11 // pred_fallthru
        _
      // Predicated region
      $region21: #{discriminator_forward.6} parent=11 // pred_check
        %p166 = pneg %p90
      $region22: #{discriminator_forward.6} parent=11 // pred_check_branch
        %168 = sbr.rel (%p166) target = $region24
      $region23: #{discriminator_forward.6} parent=11 // pred_region
        _
      $region24: #{discriminator_forward.6} parent=11 // pred_fallthru
        _
      // Predicated region
      $region25: #{discriminator_forward.6} parent=11 // pred_check
        %p169 = pneg %p111
      $region26: #{discriminator_forward.6} parent=11 // pred_check_branch
        %171 = sbr.rel (%p169) target = $region28
      $region27: #{discriminator_forward.6} parent=11 // pred_region
        _
      $region28: #{discriminator_forward.6} parent=11 // pred_fallthru
        _
    $region12: #{discriminator_forward.6} parent=5 // pred_fallthru
      _
    %p172 = scmp.lt.s32.totalorder %s10, 2
    // Predicated region
    $region29: #{discriminator_forward.6} parent=5 // pred_check
      %p173 = pneg %p172
    $region30: #{discriminator_forward.6} parent=5 // pred_check_branch
      %175 = sbr.rel (%p173) target = $region32
    $region31: #{discriminator_forward.6} parent=5 // pred_region
      _
    $region32: #{discriminator_forward.6} parent=5 // pred_fallthru
      _
    %p176 = scmp.le.s32.totalorder 1, %s10
    %p177 = scmp.lt.s32.totalorder %s10, 3
    %p178 = pnand %p176, %p177
    %p179 = pneg %p178
    // Predicated region
    $region33: #{discriminator_forward.6} parent=5 // pred_check
      _
    $region34: #{discriminator_forward.6} parent=5 // pred_check_branch
      %181 = sbr.rel (%p178) target = $region36
    $region35: #{discriminator_forward.6} parent=5 // pred_region
      %s182 = ssub.s32 %s10, 1
      %s183 = smul.u32 64, %s20
      %p184 = scmp.lt.s32.totalorder %s183, 63
      %s185 = scalar_select %p184, %s183, 63
      %s186 = smul.addr %s185, 4
      %s187 = scalar_lea.vmem %s0, %s186
      %p188 = pneg %p48
      %p189 = pneg %p45
      %p190 = pneg %p69
      %p191 = pneg %p66
      %p192 = pneg %p90
      %p193 = pneg %p87
      %p194 = pneg %p111
      %p195 = pneg %p108
      %p196 = pneg %p139
      %p197 = pneg %p136
      %s198 = smul.u32 %s19, %s20
      %s199 = smul.u32 64, %s198
      %p200 = scmp.lt.s32.totalorder %s199, 63
      %s201 = scalar_select %p200, %s199, 63
      %s202 = smul.addr %s201, 4
      %s203 = scalar_lea.vmem %s4, %s202
      %s204 = smul.u32 64, %s20
      %p205 = scmp.lt.s32.totalorder %s204, 63
      %s206 = scalar_select %p205, %s204, 63
      %s207 = smul.addr %s206, 4
      %s208 = scalar_lea.vmem %s0, %s207
      %s209 = smul.u32 64, %s20
      %s210 = smul.u32 %s19, %s20
      %s211 = smul.u32 64, %s210
      %p212 = scmp.lt.s32.totalorder %s211, 63
      %s213 = scalar_select %p212, %s211, 63
      %s214 = smul.addr %s213, 4
      %s215 = scalar_lea.vmem %s4, %s214
      %s216 = smul.u32 %s19, %s20
      %s217 = smul.u32 64, %s216
      %v219 = vld [vmem:[%s208] sm:$0xf]
      %v220 = vld [vmem:[%s208 + $0x4] sm:$0xf]
      %v221 = vld [vmem:[%s208 + $0x8] sm:$0xf]
      %v222 = vld [vmem:[%s208 + $0xc] sm:$0xf]
      %v223 = vld [vmem:[%s208 + $0x10] sm:$0xf]
      %v224 = vld [vmem:[%s208 + $0x14] sm:$0xf]
      %v225 = vld [vmem:[%s208 + $0x18] sm:$0xf]
      %v226 = vld [vmem:[%s208 + $0x1c] sm:$0xf]
      %v227 = vld [vmem:[%s208 + $0x20] sm:$0xf]
      %v228 = vld [vmem:[%s208 + $0x24] sm:$0xf]
      %v229 = vld [vmem:[%s208 + $0x28] sm:$0xf]
      %v230 = vld [vmem:[%s208 + $0x2c] sm:$0xf]
      %v231 = vld [vmem:[%s208 + $0x30] sm:$0xf]
      %v232 = vld [vmem:[%s208 + $0x34] sm:$0xf]
      %v233 = vld [vmem:[%s208 + $0x38] sm:$0xf]
      %v234 = vld [vmem:[%s208 + $0x3c] sm:$0xf]
      %v235 = vld [vmem:[%s208 + $0x40] sm:$0xf]
      %v236 = vld [vmem:[%s208 + $0x44] sm:$0xf]
      %v237 = vld [vmem:[%s208 + $0x48] sm:$0xf]
      %v238 = vld [vmem:[%s208 + $0x4c] sm:$0xf]
      %v239 = vld [vmem:[%s208 + $0x50] sm:$0xf]
      %v240 = vld [vmem:[%s208 + $0x54] sm:$0xf]
      %v241 = vld [vmem:[%s208 + $0x58] sm:$0xf]
      %v242 = vld [vmem:[%s208 + $0x5c] sm:$0xf]
      %v243 = vld [vmem:[%s208 + $0x60] sm:$0xf]
      %v244 = vld [vmem:[%s208 + $0x64] sm:$0xf]
      %v245 = vld [vmem:[%s208 + $0x68] sm:$0xf]
      %v246 = vld [vmem:[%s208 + $0x6c] sm:$0xf]
      %v247 = vld [vmem:[%s208 + $0x70] sm:$0xf]
      %v248 = vld [vmem:[%s208 + $0x74] sm:$0xf]
      %v249 = vld [vmem:[%s208 + $0x78] sm:$0xf]
      %v250 = vld [vmem:[%s208 + $0x7c] sm:$0xf]
      %v251 = vld [vmem:[%s208 + $0x80] sm:$0xf]
      %v252 = vld [vmem:[%s208 + $0x84] sm:$0xf]
      %v253 = vld [vmem:[%s208 + $0x88] sm:$0xf]
      %v254 = vld [vmem:[%s208 + $0x8c] sm:$0xf]
      %v255 = vld [vmem:[%s208 + $0x90] sm:$0xf]
      %v256 = vld [vmem:[%s208 + $0x94] sm:$0xf]
      %v257 = vld [vmem:[%s208 + $0x98] sm:$0xf]
      %v258 = vld [vmem:[%s208 + $0x9c] sm:$0xf]
      %v259 = vld [vmem:[%s208 + $0xa0] sm:$0xf]
      %v260 = vld [vmem:[%s208 + $0xa4] sm:$0xf]
      %v261 = vld [vmem:[%s208 + $0xa8] sm:$0xf]
      %v262 = vld [vmem:[%s208 + $0xac] sm:$0xf]
      %v263 = vld [vmem:[%s208 + $0xb0] sm:$0xf]
      %v264 = vld [vmem:[%s208 + $0xb4] sm:$0xf]
      %v265 = vld [vmem:[%s208 + $0xb8] sm:$0xf]
      %v266 = vld [vmem:[%s208 + $0xbc] sm:$0xf]
      %v267 = vld [vmem:[%s208 + $0xc0] sm:$0xf]
      %v268 = vld [vmem:[%s208 + $0xc4] sm:$0xf]
      %v269 = vld [vmem:[%s208 + $0xc8] sm:$0xf]
      %v270 = vld [vmem:[%s208 + $0xcc] sm:$0xf]
      %v271 = vld [vmem:[%s208 + $0xd0] sm:$0xf]
      %v272 = vld [vmem:[%s208 + $0xd4] sm:$0xf]
      %v273 = vld [vmem:[%s208 + $0xd8] sm:$0xf]
      %v274 = vld [vmem:[%s208 + $0xdc] sm:$0xf]
      %v275 = vld [vmem:[%s208 + $0xe0] sm:$0xf]
      %v276 = vld [vmem:[%s208 + $0xe4] sm:$0xf]
      %v277 = vld [vmem:[%s208 + $0xe8] sm:$0xf]
      %v278 = vld [vmem:[%s208 + $0xec] sm:$0xf]
      %v279 = vld [vmem:[%s208 + $0xf0] sm:$0xf]
      %v280 = vld [vmem:[%s208 + $0xf4] sm:$0xf]
      %v281 = vld [vmem:[%s208 + $0xf8] sm:$0xf]
      %v282 = vld [vmem:[%s208 + $0xfc] sm:$0xf]
      %v283 = vld [vmem:[%s1] sm:$0xf]
      %v284 = vld [vmem:[%s1 + $0x4] sm:$0xf]
      %v285 = vld [vmem:[%s1 + $0x8] sm:$0xf]
      %v286 = vld [vmem:[%s1 + $0xc] sm:$0xf]
      %v287 = vld [vmem:[%s1 + $0x10] sm:$0xf]
      %v288 = vld [vmem:[%s1 + $0x14] sm:$0xf]
      %v289 = vld [vmem:[%s1 + $0x18] sm:$0xf]
      %v290 = vld [vmem:[%s1 + $0x1c] sm:$0xf]
      %v291 = vld [vmem:[%s1 + $0x20] sm:$0xf]
      %v292 = vld [vmem:[%s1 + $0x24] sm:$0xf]
      %v293 = vld [vmem:[%s1 + $0x28] sm:$0xf]
      %v294 = vld [vmem:[%s1 + $0x2c] sm:$0xf]
      %v295 = vld [vmem:[%s1 + $0x30] sm:$0xf]
      %v296 = vld [vmem:[%s1 + $0x34] sm:$0xf]
      %v297 = vld [vmem:[%s1 + $0x38] sm:$0xf]
      %v298 = vld [vmem:[%s1 + $0x3c] sm:$0xf]
      %v363 = vunpack.c.l.b16 %v219
      %v364 = vunpack.c.l.b16 %v220
      %v365 = vunpack.c.l.b16 %v221
      %v366 = vunpack.c.l.b16 %v222
      %v367 = vunpack.c.l.b16 %v223
      %v368 = vunpack.c.l.b16 %v224
      %v369 = vunpack.c.l.b16 %v225
      %v370 = vunpack.c.l.b16 %v226
      %v371 = vunpack.c.l.b16 %v227
      %v372 = vunpack.c.l.b16 %v228
      %v373 = vunpack.c.l.b16 %v229
      %v374 = vunpack.c.l.b16 %v230
      %v375 = vunpack.c.l.b16 %v231
      %v376 = vunpack.c.l.b16 %v232
      %v377 = vunpack.c.l.b16 %v233
      %v378 = vunpack.c.l.b16 %v234
      %v379 = vunpack.c.l.b16 %v235
      %v380 = vunpack.c.l.b16 %v236
      %v381 = vunpack.c.l.b16 %v237
      %v382 = vunpack.c.l.b16 %v238
      %v383 = vunpack.c.l.b16 %v239
      %v384 = vunpack.c.l.b16 %v240
      %v385 = vunpack.c.l.b16 %v241
      %v386 = vunpack.c.l.b16 %v242
      %v387 = vunpack.c.l.b16 %v243
      %v388 = vunpack.c.l.b16 %v244
      %v389 = vunpack.c.l.b16 %v245
      %v390 = vunpack.c.l.b16 %v246
      %v391 = vunpack.c.l.b16 %v247
      %v392 = vunpack.c.l.b16 %v248
      %v393 = vunpack.c.l.b16 %v249
      %v394 = vunpack.c.l.b16 %v250
      %v395 = vunpack.c.l.b16 %v251
      %v396 = vunpack.c.l.b16 %v252
      %v397 = vunpack.c.l.b16 %v253
      %v398 = vunpack.c.l.b16 %v254
      %v399 = vunpack.c.l.b16 %v255
      %v400 = vunpack.c.l.b16 %v256
      %v401 = vunpack.c.l.b16 %v257
      %v402 = vunpack.c.l.b16 %v258
      %v403 = vunpack.c.l.b16 %v259
      %v404 = vunpack.c.l.b16 %v260
      %v405 = vunpack.c.l.b16 %v261
      %v406 = vunpack.c.l.b16 %v262
      %v407 = vunpack.c.l.b16 %v263
      %v408 = vunpack.c.l.b16 %v264
      %v409 = vunpack.c.l.b16 %v265
      %v410 = vunpack.c.l.b16 %v266
      %v411 = vunpack.c.l.b16 %v267
      %v412 = vunpack.c.l.b16 %v268
      %v413 = vunpack.c.l.b16 %v269
      %v414 = vunpack.c.l.b16 %v270
      %v415 = vunpack.c.l.b16 %v271
      %v416 = vunpack.c.l.b16 %v272
      %v417 = vunpack.c.l.b16 %v273
      %v418 = vunpack.c.l.b16 %v274
      %v419 = vunpack.c.l.b16 %v275
      %v420 = vunpack.c.l.b16 %v276
      %v421 = vunpack.c.l.b16 %v277
      %v422 = vunpack.c.l.b16 %v278
      %v423 = vunpack.c.l.b16 %v279
      %v424 = vunpack.c.l.b16 %v280
      %v425 = vunpack.c.l.b16 %v281
      %v426 = vunpack.c.l.b16 %v282
      %v427 = vpack.c.b16 %v364, %v363
      %v428 = vpack.c.b16 %v366, %v365
      %v429 = vpack.c.b16 %v368, %v367
      %v430 = vpack.c.b16 %v370, %v369
      %v431 = vpack.c.b16 %v372, %v371
      %v432 = vpack.c.b16 %v374, %v373
      %v433 = vpack.c.b16 %v376, %v375
      %v434 = vpack.c.b16 %v378, %v377
      %v435 = vpack.c.b16 %v380, %v379
      %v436 = vpack.c.b16 %v382, %v381
      %v437 = vpack.c.b16 %v384, %v383
      %v438 = vpack.c.b16 %v386, %v385
      %v439 = vpack.c.b16 %v388, %v387
      %v440 = vpack.c.b16 %v390, %v389
      %v441 = vpack.c.b16 %v392, %v391
      %v442 = vpack.c.b16 %v394, %v393
      %v443 = vpack.c.b16 %v396, %v395
      %v444 = vpack.c.b16 %v398, %v397
      %v445 = vpack.c.b16 %v400, %v399
      %v446 = vpack.c.b16 %v402, %v401
      %v447 = vpack.c.b16 %v404, %v403
      %v448 = vpack.c.b16 %v406, %v405
      %v449 = vpack.c.b16 %v408, %v407
      %v450 = vpack.c.b16 %v410, %v409
      %v451 = vpack.c.b16 %v412, %v411
      %v452 = vpack.c.b16 %v414, %v413
      %v453 = vpack.c.b16 %v416, %v415
      %v454 = vpack.c.b16 %v418, %v417
      %v455 = vpack.c.b16 %v420, %v419
      %v456 = vpack.c.b16 %v422, %v421
      %v457 = vpack.c.b16 %v424, %v423
      %v458 = vpack.c.b16 %v426, %v425
      %v507 = vunpack.c.l.b16 %v283
      %v508 = vunpack.c.l.b16 %v284
      %v509 = vunpack.c.l.b16 %v285
      %v510 = vunpack.c.l.b16 %v286
      %v511 = vunpack.c.l.b16 %v287
      %v512 = vunpack.c.l.b16 %v288
      %v513 = vunpack.c.l.b16 %v289
      %v514 = vunpack.c.l.b16 %v290
      %v515 = vunpack.c.l.b16 %v291
      %v516 = vunpack.c.l.b16 %v292
      %v517 = vunpack.c.l.b16 %v293
      %v518 = vunpack.c.l.b16 %v294
      %v519 = vunpack.c.l.b16 %v295
      %v520 = vunpack.c.l.b16 %v296
      %v521 = vunpack.c.l.b16 %v297
      %v522 = vunpack.c.l.b16 %v298
      %v523 = vpack.c.b16 %v508, %v507
      %v524 = vpack.c.b16 %v510, %v509
      %v525 = vpack.c.b16 %v512, %v511
      %v526 = vpack.c.b16 %v514, %v513
      %v527 = vpack.c.b16 %v516, %v515
      %v528 = vpack.c.b16 %v518, %v517
      %v529 = vpack.c.b16 %v520, %v519
      %v530 = vpack.c.b16 %v522, %v521
      %539 = vmatprep.subr.bf16.mxu0 0
      %540 = vmatpush1.bf16.msra.mxu0 %v523
      %541 = vmatprep.subr.bf16.mxu0 0
      %542 = vmatpush1.bf16.msra.mxu0 %v524
      %543 = vmatprep.subr.bf16.mxu0 0
      %544 = vmatpush1.bf16.msra.mxu0 %v525
      %545 = vmatprep.subr.bf16.mxu0 0
      %546 = vmatpush1.bf16.msra.mxu0 %v526
      %547 = vmatprep.subr.bf16.mxu0 0
      %548 = vmatpush1.bf16.msra.mxu0 %v527
      %549 = vmatprep.subr.bf16.mxu0 0
      %550 = vmatpush1.bf16.msra.mxu0 %v528
      %551 = vmatprep.subr.bf16.mxu0 0
      %552 = vmatpush1.bf16.msra.mxu0 %v529
      %553 = vmatprep.subr.bf16.mxu0 0
      %554 = vmatpush1.bf16.msra.mxu0 %v530
      %555 = vmatprep.subr.bf16.mxu0 0
      %556 = vmatpush1.bf16.msra.mxu0 0
      %557 = vmatprep.subr.bf16.mxu0 0
      %558 = vmatpush1.bf16.msra.mxu0 0
      %559 = vmatprep.subr.bf16.mxu0 0
      %560 = vmatpush1.bf16.msra.mxu0 0
      %561 = vmatprep.subr.bf16.mxu0 0
      %562 = vmatpush1.bf16.msra.mxu0 0
      %563 = vmatprep.subr.bf16.mxu0 0
      %564 = vmatpush1.bf16.msra.mxu0 0
      %565 = vmatprep.subr.bf16.mxu0 0
      %566 = vmatpush1.bf16.msra.mxu0 0
      %567 = vmatprep.subr.bf16.mxu0 0
      %568 = vmatpush1.bf16.msra.mxu0 0
      %569 = vmatprep.subr.bf16.mxu0 0
      %570 = vmatpush1.bf16.msra.mxu0 0
      %571 = vmatprep.mubr.bf16.mxu0 0
      %572 = vmatmul.mubr.bf16.gmra.mrb[0].mxu0 %v427
      %v573 = vpop.f32.mrb[0].mxu0
      %v574 = vadd.f32 0.0, %v573
      %v575 = vpop.f32.mrb[0].mxu0
      %v576 = vpop.f32.mrb[0].mxu0
      %v577 = vadd.f32 0.0, %v576
      %v578 = vpop.f32.mrb[0].mxu0
      %579 = vmatprep.mubr.bf16.mxu0 0
      %580 = vmatmul.mubr.bf16.gmra.mrb[0].mxu0 %v428
      %v581 = vpop.f32.mrb[0].mxu0
      %v582 = vadd.f32 0.0, %v581
      %v583 = vpop.f32.mrb[0].mxu0
      %v584 = vpop.f32.mrb[0].mxu0
      %v585 = vadd.f32 0.0, %v584
      %v586 = vpop.f32.mrb[0].mxu0
      %587 = vmatprep.mubr.bf16.mxu0 0
      %588 = vmatmul.mubr.bf16.gmra.mrb[0].mxu0 %v429
      %v589 = vpop.f32.mrb[0].mxu0
      %v590 = vadd.f32 0.0, %v589
      %v591 = vpop.f32.mrb[0].mxu0
      %v592 = vpop.f32.mrb[0].mxu0
      %v593 = vadd.f32 0.0, %v592
      %v594 = vpop.f32.mrb[0].mxu0
      %595 = vmatprep.mubr.bf16.mxu0 0
      %596 = vmatmul.mubr.bf16.gmra.mrb[0].mxu0 %v430
      %v597 = vpop.f32.mrb[0].mxu0
      %v598 = vadd.f32 0.0, %v597
      %v599 = vpop.f32.mrb[0].mxu0
      %v600 = vpop.f32.mrb[0].mxu0
      %v601 = vadd.f32 0.0, %v600
      %v602 = vpop.f32.mrb[0].mxu0
      %603 = vmatprep.mubr.bf16.mxu0 0
      %604 = vmatmul.mubr.bf16.gmra.mrb[0].mxu0 %v431
      %v605 = vpop.f32.mrb[0].mxu0
      %v606 = vadd.f32 0.0, %v605
      %v607 = vpop.f32.mrb[0].mxu0
      %v608 = vpop.f32.mrb[0].mxu0
      %v609 = vadd.f32 0.0, %v608
      %v610 = vpop.f32.mrb[0].mxu0
      %611 = vmatprep.mubr.bf16.mxu0 0
      %612 = vmatmul.mubr.bf16.gmra.mrb[0].mxu0 %v432
      %v613 = vpop.f32.mrb[0].mxu0
      %v614 = vadd.f32 0.0, %v613
      %v615 = vpop.f32.mrb[0].mxu0
      %v616 = vpop.f32.mrb[0].mxu0
      %v617 = vadd.f32 0.0, %v616
      %v618 = vpop.f32.mrb[0].mxu0
      %619 = vmatprep.mubr.bf16.mxu0 0
      %620 = vmatmul.mubr.bf16.gmra.mrb[0].mxu0 %v433
      %v621 = vpop.f32.mrb[0].mxu0
      %v622 = vadd.f32 0.0, %v621
      %v623 = vpop.f32.mrb[0].mxu0
      %v624 = vpop.f32.mrb[0].mxu0
      %v625 = vadd.f32 0.0, %v624
      %v626 = vpop.f32.mrb[0].mxu0
      %627 = vmatprep.mubr.bf16.mxu0 0
      %628 = vmatmul.mubr.bf16.gmra.mrb[0].mxu0 %v434
      %v629 = vpop.f32.mrb[0].mxu0
      %v630 = vadd.f32 0.0, %v629
      %v631 = vpop.f32.mrb[0].mxu0
      %v632 = vpop.f32.mrb[0].mxu0
      %v633 = vadd.f32 0.0, %v632
      %v634 = vpop.f32.mrb[0].mxu0
      %635 = vmatprep.mubr.bf16.mxu0 0
      %636 = vmatmul.mubr.bf16.gmra.mrb[0].mxu0 %v435
      %v637 = vpop.f32.mrb[0].mxu0
      %v638 = vadd.f32 0.0, %v637
      %v639 = vpop.f32.mrb[0].mxu0
      %v640 = vpop.f32.mrb[0].mxu0
      %v641 = vadd.f32 0.0, %v640
      %v642 = vpop.f32.mrb[0].mxu0
      %643 = vmatprep.mubr.bf16.mxu0 0
      %644 = vmatmul.mubr.bf16.gmra.mrb[0].mxu0 %v436
      %v645 = vpop.f32.mrb[0].mxu0
      %v646 = vadd.f32 0.0, %v645
      %v647 = vpop.f32.mrb[0].mxu0
      %v648 = vpop.f32.mrb[0].mxu0
      %v649 = vadd.f32 0.0, %v648
      %v650 = vpop.f32.mrb[0].mxu0
      %651 = vmatprep.mubr.bf16.mxu0 0
      %652 = vmatmul.mubr.bf16.gmra.mrb[0].mxu0 %v437
      %v653 = vpop.f32.mrb[0].mxu0
      %v654 = vadd.f32 0.0, %v653
      %v655 = vpop.f32.mrb[0].mxu0
      %v656 = vpop.f32.mrb[0].mxu0
      %v657 = vadd.f32 0.0, %v656
      %v658 = vpop.f32.mrb[0].mxu0
      %659 = vmatprep.mubr.bf16.mxu0 0
      %660 = vmatmul.mubr.bf16.gmra.mrb[0].mxu0 %v438
      %v661 = vpop.f32.mrb[0].mxu0
      %v662 = vadd.f32 0.0, %v661
      %v663 = vpop.f32.mrb[0].mxu0
      %v664 = vpop.f32.mrb[0].mxu0
      %v665 = vadd.f32 0.0, %v664
      %v666 = vpop.f32.mrb[0].mxu0
      %667 = vmatprep.mubr.bf16.mxu0 0
      %668 = vmatmul.mubr.bf16.gmra.mrb[0].mxu0 %v439
      %v669 = vpop.f32.mrb[0].mxu0
      %v670 = vadd.f32 0.0, %v669
      %v671 = vpop.f32.mrb[0].mxu0
      %v672 = vpop.f32.mrb[0].mxu0
      %v673 = vadd.f32 0.0, %v672
      %v674 = vpop.f32.mrb[0].mxu0
      %675 = vmatprep.mubr.bf16.mxu0 0
      %676 = vmatmul.mubr.bf16.gmra.mrb[0].mxu0 %v440
      %v677 = vpop.f32.mrb[0].mxu0
      %v678 = vadd.f32 0.0, %v677
      %v679 = vpop.f32.mrb[0].mxu0
      %v680 = vpop.f32.mrb[0].mxu0
      %v681 = vadd.f32 0.0, %v680
      %v682 = vpop.f32.mrb[0].mxu0
      %683 = vmatprep.mubr.bf16.mxu0 0
      %684 = vmatmul.mubr.bf16.gmra.mrb[0].mxu0 %v441
      %v685 = vpop.f32.mrb[0].mxu0
      %v686 = vadd.f32 0.0, %v685
      %v687 = vpop.f32.mrb[0].mxu0
      %v688 = vpop.f32.mrb[0].mxu0
      %v689 = vadd.f32 0.0, %v688
      %v690 = vpop.f32.mrb[0].mxu0
      %691 = vmatprep.mubr.bf16.mxu0 0
      %692 = vmatmul.mubr.bf16.gmra.mrb[0].mxu0 %v442
      %v693 = vpop.f32.mrb[0].mxu0
      %v694 = vadd.f32 0.0, %v693
      %v695 = vpop.f32.mrb[0].mxu0
      %v696 = vpop.f32.mrb[0].mxu0
      %v697 = vadd.f32 0.0, %v696
      %v698 = vpop.f32.mrb[0].mxu0
      %699 = vmatprep.mubr.bf16.mxu0 0
      %700 = vmatmul.mubr.bf16.gmra.mrb[0].mxu0 %v443
      %v701 = vpop.f32.mrb[0].mxu0
      %v702 = vadd.f32 0.0, %v701
      %v703 = vpop.f32.mrb[0].mxu0
      %v704 = vpop.f32.mrb[0].mxu0
      %v705 = vadd.f32 0.0, %v704
      %v706 = vpop.f32.mrb[0].mxu0
      %707 = vmatprep.mubr.bf16.mxu0 0
      %708 = vmatmul.mubr.bf16.gmra.mrb[0].mxu0 %v444
      %v709 = vpop.f32.mrb[0].mxu0
      %v710 = vadd.f32 0.0, %v709
      %v711 = vpop.f32.mrb[0].mxu0
      %v712 = vpop.f32.mrb[0].mxu0
      %v713 = vadd.f32 0.0, %v712
      %v714 = vpop.f32.mrb[0].mxu0
      %715 = vmatprep.mubr.bf16.mxu0 0
      %716 = vmatmul.mubr.bf16.gmra.mrb[0].mxu0 %v445
      %v717 = vpop.f32.mrb[0].mxu0
      %v718 = vadd.f32 0.0, %v717
      %v719 = vpop.f32.mrb[0].mxu0
      %v720 = vpop.f32.mrb[0].mxu0
      %v721 = vadd.f32 0.0, %v720
      %v722 = vpop.f32.mrb[0].mxu0
      %723 = vmatprep.mubr.bf16.mxu0 0
      %724 = vmatmul.mubr.bf16.gmra.mrb[0].mxu0 %v446
      %v725 = vpop.f32.mrb[0].mxu0
      %v726 = vadd.f32 0.0, %v725
      %v727 = vpop.f32.mrb[0].mxu0
      %v728 = vpop.f32.mrb[0].mxu0
      %v729 = vadd.f32 0.0, %v728
      %v730 = vpop.f32.mrb[0].mxu0
      %731 = vmatprep.mubr.bf16.mxu0 0
      %732 = vmatmul.mubr.bf16.gmra.mrb[0].mxu0 %v447
      %v733 = vpop.f32.mrb[0].mxu0
      %v734 = vadd.f32 0.0, %v733
      %v735 = vpop.f32.mrb[0].mxu0
      %v736 = vpop.f32.mrb[0].mxu0
      %v737 = vadd.f32 0.0, %v736
      %v738 = vpop.f32.mrb[0].mxu0
      %739 = vmatprep.mubr.bf16.mxu0 0
      %740 = vmatmul.mubr.bf16.gmra.mrb[0].mxu0 %v448
      %v741 = vpop.f32.mrb[0].mxu0
      %v742 = vadd.f32 0.0, %v741
      %v743 = vpop.f32.mrb[0].mxu0
      %v744 = vpop.f32.mrb[0].mxu0
      %v745 = vadd.f32 0.0, %v744
      %v746 = vpop.f32.mrb[0].mxu0
      %747 = vmatprep.mubr.bf16.mxu0 0
      %748 = vmatmul.mubr.bf16.gmra.mrb[0].mxu0 %v449
      %v749 = vpop.f32.mrb[0].mxu0
      %v750 = vadd.f32 0.0, %v749
      %v751 = vpop.f32.mrb[0].mxu0
      %v752 = vpop.f32.mrb[0].mxu0
      %v753 = vadd.f32 0.0, %v752
      %v754 = vpop.f32.mrb[0].mxu0
      %755 = vmatprep.mubr.bf16.mxu0 0
      %756 = vmatmul.mubr.bf16.gmra.mrb[0].mxu0 %v450
      %v757 = vpop.f32.mrb[0].mxu0
      %v758 = vadd.f32 0.0, %v757
      %v759 = vpop.f32.mrb[0].mxu0
      %v760 = vpop.f32.mrb[0].mxu0
      %v761 = vadd.f32 0.0, %v760
      %v762 = vpop.f32.mrb[0].mxu0
      %763 = vmatprep.mubr.bf16.mxu0 0
      %764 = vmatmul.mubr.bf16.gmra.mrb[0].mxu0 %v451
      %v765 = vpop.f32.mrb[0].mxu0
      %v766 = vadd.f32 0.0, %v765
      %v767 = vpop.f32.mrb[0].mxu0
      %v768 = vpop.f32.mrb[0].mxu0
      %v769 = vadd.f32 0.0, %v768
      %v770 = vpop.f32.mrb[0].mxu0
      %771 = vmatprep.mubr.bf16.mxu0 0
      %772 = vmatmul.mubr.bf16.gmra.mrb[0].mxu0 %v452
      %v773 = vpop.f32.mrb[0].mxu0
      %v774 = vadd.f32 0.0, %v773
      %v775 = vpop.f32.mrb[0].mxu0
      %v776 = vpop.f32.mrb[0].mxu0
      %v777 = vadd.f32 0.0, %v776
      %v778 = vpop.f32.mrb[0].mxu0
      %779 = vmatprep.mubr.bf16.mxu0 0
      %780 = vmatmul.mubr.bf16.gmra.mrb[0].mxu0 %v453
      %v781 = vpop.f32.mrb[0].mxu0
      %v782 = vadd.f32 0.0, %v781
      %v783 = vpop.f32.mrb[0].mxu0
      %v784 = vpop.f32.mrb[0].mxu0
      %v785 = vadd.f32 0.0, %v784
      %v786 = vpop.f32.mrb[0].mxu0
      %787 = vmatprep.mubr.bf16.mxu0 0
      %788 = vmatmul.mubr.bf16.gmra.mrb[0].mxu0 %v454
      %v789 = vpop.f32.mrb[0].mxu0
      %v790 = vadd.f32 0.0, %v789
      %v791 = vpop.f32.mrb[0].mxu0
      %v792 = vpop.f32.mrb[0].mxu0
      %v793 = vadd.f32 0.0, %v792
      %v794 = vpop.f32.mrb[0].mxu0
      %795 = vmatprep.mubr.bf16.mxu0 0
      %796 = vmatmul.mubr.bf16.gmra.mrb[0].mxu0 %v455
      %v797 = vpop.f32.mrb[0].mxu0
      %v798 = vadd.f32 0.0, %v797
      %v799 = vpop.f32.mrb[0].mxu0
      %v800 = vpop.f32.mrb[0].mxu0
      %v801 = vadd.f32 0.0, %v800
      %v802 = vpop.f32.mrb[0].mxu0
      %803 = vmatprep.mubr.bf16.mxu0 0
      %804 = vmatmul.mubr.bf16.gmra.mrb[0].mxu0 %v456
      %v805 = vpop.f32.mrb[0].mxu0
      %v806 = vadd.f32 0.0, %v805
      %v807 = vpop.f32.mrb[0].mxu0
      %v808 = vpop.f32.mrb[0].mxu0
      %v809 = vadd.f32 0.0, %v808
      %v810 = vpop.f32.mrb[0].mxu0
      %811 = vmatprep.mubr.bf16.mxu0 0
      %812 = vmatmul.mubr.bf16.gmra.mrb[0].mxu0 %v457
      %v813 = vpop.f32.mrb[0].mxu0
      %v814 = vadd.f32 0.0, %v813
      %v815 = vpop.f32.mrb[0].mxu0
      %v816 = vpop.f32.mrb[0].mxu0
      %v817 = vadd.f32 0.0, %v816
      %v818 = vpop.f32.mrb[0].mxu0
      %819 = vmatprep.mubr.bf16.mxu0 0
      %820 = vmatmul.mubr.bf16.gmra.mrb[0].mxu0 %v458
      %v821 = vpop.f32.mrb[0].mxu0
      %v822 = vadd.f32 0.0, %v821
      %v823 = vpop.f32.mrb[0].mxu0
      %v824 = vpop.f32.mrb[0].mxu0
      %v825 = vadd.f32 0.0, %v824
      %v826 = vpop.f32.mrb[0].mxu0
      %827 = vdwg.mxu0
      %p828 = scmp.eq.s32.totalorder %s19, 0
      %p829 = scmp.eq.s32.totalorder %s20, 0
      %p830 = pnand %p828, %p829
      %p831 = pneg %p830
      // Predicated region
      $region37: #{discriminator_forward.6} parent=35 // pred_check
        _
      $region38: #{discriminator_forward.6} parent=35 // pred_check_branch
        %833 = sbr.rel (%p830) target = $region40
      $region39: #{discriminator_forward.6} parent=35 // pred_region
        %vm834 = vcmask 122880
        %835 = vst.msk [vmem:[#allocation2] sm:$0x1] %vm834, 0.0
        %836 = vst.msk [vmem:[#allocation3] sm:$0x1] %vm834, 0.0
      $region40: #{discriminator_forward.6} parent=35 // pred_fallthru
        _
      // Predicated region
      $region41: #{discriminator_forward.6} parent=35 // pred_check
        %p837 = pneg %p828
      $region42: #{discriminator_forward.6} parent=35 // pred_check_branch
        %839 = sbr.rel (%p837) target = $region44
      $region43: #{discriminator_forward.6} parent=35 // pred_region
        %v840 = vld [vmem:[#allocation2] sm:$0x1]
        %vm841 = vcmask 130048
        %v842 = vsel %vm841, %v574, 0.0
        %v843 = vsel %vm841, %v577, 0.0
        %v844 = vadd.f32 %v842, %v843
        %v845 = vsel %vm841, %v582, 0.0
        %v846 = vadd.f32 %v844, %v845
        %v847 = vsel %vm841, %v585, 0.0
        %v848 = vadd.f32 %v846, %v847
        %v849 = vsel %vm841, %v590, 0.0
        %v850 = vadd.f32 %v848, %v849
        %v851 = vsel %vm841, %v593, 0.0
        %v852 = vadd.f32 %v850, %v851
        %v853 = vsel %vm841, %v598, 0.0
        %v854 = vadd.f32 %v852, %v853
        %v855 = vsel %vm841, %v601, 0.0
        %v856 = vadd.f32 %v854, %v855
        %v857 = vsel %vm841, %v606, 0.0
        %v858 = vadd.f32 %v856, %v857
        %v859 = vsel %vm841, %v609, 0.0
        %v860 = vadd.f32 %v858, %v859
        %v861 = vsel %vm841, %v614, 0.0
        %v862 = vadd.f32 %v860, %v861
        %v863 = vsel %vm841, %v617, 0.0
        %v864 = vadd.f32 %v862, %v863
        %v865 = vsel %vm841, %v622, 0.0
        %v866 = vadd.f32 %v864, %v865
        %v867 = vsel %vm841, %v625, 0.0
        %v868 = vadd.f32 %v866, %v867
        %v869 = vsel %vm841, %v630, 0.0
        %v870 = vadd.f32 %v868, %v869
        %v871 = vsel %vm841, %v633, 0.0
        %v872 = vadd.f32 %v870, %v871
        %v873 = vsel %vm841, %v638, 0.0
        %v874 = vadd.f32 %v872, %v873
        %v875 = vsel %vm841, %v641, 0.0
        %v876 = vadd.f32 %v874, %v875
        %v877 = vsel %vm841, %v646, 0.0
        %v878 = vadd.f32 %v876, %v877
        %v879 = vsel %vm841, %v649, 0.0
        %v880 = vadd.f32 %v878, %v879
        %v881 = vsel %vm841, %v654, 0.0
        %v882 = vadd.f32 %v880, %v881
        %v883 = vsel %vm841, %v657, 0.0
        %v884 = vadd.f32 %v882, %v883
        %v885 = vsel %vm841, %v662, 0.0
        %v886 = vadd.f32 %v884, %v885
        %v887 = vsel %vm841, %v665, 0.0
        %v888 = vadd.f32 %v886, %v887
        %v889 = vsel %vm841, %v670, 0.0
        %v890 = vadd.f32 %v888, %v889
        %v891 = vsel %vm841, %v673, 0.0
        %v892 = vadd.f32 %v890, %v891
        %v893 = vsel %vm841, %v678, 0.0
        %v894 = vadd.f32 %v892, %v893
        %v895 = vsel %vm841, %v681, 0.0
        %v896 = vadd.f32 %v894, %v895
        %v897 = vsel %vm841, %v686, 0.0
        %v898 = vadd.f32 %v896, %v897
        %v899 = vsel %vm841, %v689, 0.0
        %v900 = vadd.f32 %v898, %v899
        %v901 = vsel %vm841, %v694, 0.0
        %v902 = vadd.f32 %v900, %v901
        %v903 = vsel %vm841, %v697, 0.0
        %v904 = vadd.f32 %v902, %v903
        %v905 = vsel %vm841, %v702, 0.0
        %v906 = vadd.f32 %v904, %v905
        %v907 = vsel %vm841, %v705, 0.0
        %v908 = vadd.f32 %v906, %v907
        %v909 = vsel %vm841, %v710, 0.0
        %v910 = vadd.f32 %v908, %v909
        %v911 = vsel %vm841, %v713, 0.0
        %v912 = vadd.f32 %v910, %v911
        %v913 = vsel %vm841, %v718, 0.0
        %v914 = vadd.f32 %v912, %v913
        %v915 = vsel %vm841, %v721, 0.0
        %v916 = vadd.f32 %v914, %v915
        %v917 = vsel %vm841, %v726, 0.0
        %v918 = vadd.f32 %v916, %v917
        %v919 = vsel %vm841, %v729, 0.0
        %v920 = vadd.f32 %v918, %v919
        %v921 = vsel %vm841, %v734, 0.0
        %v922 = vadd.f32 %v920, %v921
        %v923 = vsel %vm841, %v737, 0.0
        %v924 = vadd.f32 %v922, %v923
        %v925 = vsel %vm841, %v742, 0.0
        %v926 = vadd.f32 %v924, %v925
        %v927 = vsel %vm841, %v745, 0.0
        %v928 = vadd.f32 %v926, %v927
        %v929 = vsel %vm841, %v750, 0.0
        %v930 = vadd.f32 %v928, %v929
        %v931 = vsel %vm841, %v753, 0.0
        %v932 = vadd.f32 %v930, %v931
        %v933 = vsel %vm841, %v758, 0.0
        %v934 = vadd.f32 %v932, %v933
        %v935 = vsel %vm841, %v761, 0.0
        %v936 = vadd.f32 %v934, %v935
        %v937 = vsel %vm841, %v766, 0.0
        %v938 = vadd.f32 %v936, %v937
        %v939 = vsel %vm841, %v769, 0.0
        %v940 = vadd.f32 %v938, %v939
        %v941 = vsel %vm841, %v774, 0.0
        %v942 = vadd.f32 %v940, %v941
        %v943 = vsel %vm841, %v777, 0.0
        %v944 = vadd.f32 %v942, %v943
        %v945 = vsel %vm841, %v782, 0.0
        %v946 = vadd.f32 %v944, %v945
        %v947 = vsel %vm841, %v785, 0.0
        %v948 = vadd.f32 %v946, %v947
        %v949 = vsel %vm841, %v790, 0.0
        %v950 = vadd.f32 %v948, %v949
        %v951 = vsel %vm841, %v793, 0.0
        %v952 = vadd.f32 %v950, %v951
        %v953 = vsel %vm841, %v798, 0.0
        %v954 = vadd.f32 %v952, %v953
        %v955 = vsel %vm841, %v801, 0.0
        %v956 = vadd.f32 %v954, %v955
        %v957 = vsel %vm841, %v806, 0.0
        %v958 = vadd.f32 %v956, %v957
        %v959 = vsel %vm841, %v809, 0.0
        %v960 = vadd.f32 %v958, %v959
        %v961 = vsel %vm841, %v814, 0.0
        %v962 = vadd.f32 %v960, %v961
        %v963 = vsel %vm841, %v817, 0.0
        %v964 = vadd.f32 %v962, %v963
        %v965 = vsel %vm841, %v822, 0.0
        %v966 = vadd.f32 %v964, %v965
        %v967 = vsel %vm841, %v825, 0.0
        %v968 = vadd.f32 %v966, %v967
        %v969 = vrot.slane %v968, 4
        %v970 = vadd.f32 %v968, %v969
        %v971 = vrot.slane %v970, 2
        %v972 = vadd.f32 %v970, %v971
        %v973 = vrot.slane %v972, 1
        %v974 = vadd.f32 %v972, %v973
        %v975 = vadd.f32 %v840, %v974
        %vm976 = vcmask 122880
        %977 = vst.msk [vmem:[#allocation2] sm:$0x1] %vm976, %v975
        %v978 = vld [vmem:[#allocation3] sm:$0x1]
        %v979 = vmul.f32 %v574, %v574
        %v980 = vmul.f32 %v577, %v577
        %v981 = vmul.f32 %v582, %v582
        %v982 = vmul.f32 %v585, %v585
        %v983 = vmul.f32 %v590, %v590
        %v984 = vmul.f32 %v593, %v593
        %v985 = vmul.f32 %v598, %v598
        %v986 = vmul.f32 %v601, %v601
        %v987 = vmul.f32 %v606, %v606
        %v988 = vmul.f32 %v609, %v609
        %v989 = vmul.f32 %v614, %v614
        %v990 = vmul.f32 %v617, %v617
        %v991 = vmul.f32 %v622, %v622
        %v992 = vmul.f32 %v625, %v625
        %v993 = vmul.f32 %v630, %v630
        %v994 = vmul.f32 %v633, %v633
        %v995 = vmul.f32 %v638, %v638
        %v996 = vmul.f32 %v641, %v641
        %v997 = vmul.f32 %v646, %v646
        %v998 = vmul.f32 %v649, %v649
        %v999 = vmul.f32 %v654, %v654
        %v1000 = vmul.f32 %v657, %v657
        %v1001 = vmul.f32 %v662, %v662
        %v1002 = vmul.f32 %v665, %v665
        %v1003 = vmul.f32 %v670, %v670
        %v1004 = vmul.f32 %v673, %v673
        %v1005 = vmul.f32 %v678, %v678
        %v1006 = vmul.f32 %v681, %v681
        %v1007 = vmul.f32 %v686, %v686
        %v1008 = vmul.f32 %v689, %v689
        %v1009 = vmul.f32 %v694, %v694
        %v1010 = vmul.f32 %v697, %v697
        %v1011 = vmul.f32 %v702, %v702
        %v1012 = vmul.f32 %v705, %v705
        %v1013 = vmul.f32 %v710, %v710
        %v1014 = vmul.f32 %v713, %v713
        %v1015 = vmul.f32 %v718, %v718
        %v1016 = vmul.f32 %v721, %v721
        %v1017 = vmul.f32 %v726, %v726
        %v1018 = vmul.f32 %v729, %v729
        %v1019 = vmul.f32 %v734, %v734
        %v1020 = vmul.f32 %v737, %v737
        %v1021 = vmul.f32 %v742, %v742
        %v1022 = vmul.f32 %v745, %v745
        %v1023 = vmul.f32 %v750, %v750
        %v1024 = vmul.f32 %v753, %v753
        %v1025 = vmul.f32 %v758, %v758
        %v1026 = vmul.f32 %v761, %v761
        %v1027 = vmul.f32 %v766, %v766
        %v1028 = vmul.f32 %v769, %v769
        %v1029 = vmul.f32 %v774, %v774
        %v1030 = vmul.f32 %v777, %v777
        %v1031 = vmul.f32 %v782, %v782
        %v1032 = vmul.f32 %v785, %v785
        %v1033 = vmul.f32 %v790, %v790
        %v1034 = vmul.f32 %v793, %v793
        %v1035 = vmul.f32 %v798, %v798
        %v1036 = vmul.f32 %v801, %v801
        %v1037 = vmul.f32 %v806, %v806
        %v1038 = vmul.f32 %v809, %v809
        %v1039 = vmul.f32 %v814, %v814
        %v1040 = vmul.f32 %v817, %v817
        %v1041 = vmul.f32 %v822, %v822
        %v1042 = vmul.f32 %v825, %v825
        %v1043 = vsel %vm841, %v979, 0.0
        %v1044 = vsel %vm841, %v980, 0.0
        %v1045 = vadd.f32 %v1043, %v1044
        %v1046 = vsel %vm841, %v981, 0.0
        %v1047 = vadd.f32 %v1045, %v1046
        %v1048 = vsel %vm841, %v982, 0.0
        %v1049 = vadd.f32 %v1047, %v1048
        %v1050 = vsel %vm841, %v983, 0.0
        %v1051 = vadd.f32 %v1049, %v1050
        %v1052 = vsel %vm841, %v984, 0.0
        %v1053 = vadd.f32 %v1051, %v1052
        %v1054 = vsel %vm841, %v985, 0.0
        %v1055 = vadd.f32 %v1053, %v1054
        %v1056 = vsel %vm841, %v986, 0.0
        %v1057 = vadd.f32 %v1055, %v1056
        %v1058 = vsel %vm841, %v987, 0.0
        %v1059 = vadd.f32 %v1057, %v1058
        %v1060 = vsel %vm841, %v988, 0.0
        %v1061 = vadd.f32 %v1059, %v1060
        %v1062 = vsel %vm841, %v989, 0.0
        %v1063 = vadd.f32 %v1061, %v1062
        %v1064 = vsel %vm841, %v990, 0.0
        %v1065 = vadd.f32 %v1063, %v1064
        %v1066 = vsel %vm841, %v991, 0.0
        %v1067 = vadd.f32 %v1065, %v1066
        %v1068 = vsel %vm841, %v992, 0.0
        %v1069 = vadd.f32 %v1067, %v1068
        %v1070 = vsel %vm841, %v993, 0.0
        %v1071 = vadd.f32 %v1069, %v1070
        %v1072 = vsel %vm841, %v994, 0.0
        %v1073 = vadd.f32 %v1071, %v1072
        %v1074 = vsel %vm841, %v995, 0.0
        %v1075 = vadd.f32 %v1073, %v1074
        %v1076 = vsel %vm841, %v996, 0.0
        %v1077 = vadd.f32 %v1075, %v1076
        %v1078 = vsel %vm841, %v997, 0.0
        %v1079 = vadd.f32 %v1077, %v1078
        %v1080 = vsel %vm841, %v998, 0.0
        %v1081 = vadd.f32 %v1079, %v1080
        %v1082 = vsel %vm841, %v999, 0.0
        %v1083 = vadd.f32 %v1081, %v1082
        %v1084 = vsel %vm841, %v1000, 0.0
        %v1085 = vadd.f32 %v1083, %v1084
        %v1086 = vsel %vm841, %v1001, 0.0
        %v1087 = vadd.f32 %v1085, %v1086
        %v1088 = vsel %vm841, %v1002, 0.0
        %v1089 = vadd.f32 %v1087, %v1088
        %v1090 = vsel %vm841, %v1003, 0.0
        %v1091 = vadd.f32 %v1089, %v1090
        %v1092 = vsel %vm841, %v1004, 0.0
        %v1093 = vadd.f32 %v1091, %v1092
        %v1094 = vsel %vm841, %v1005, 0.0
        %v1095 = vadd.f32 %v1093, %v1094
        %v1096 = vsel %vm841, %v1006, 0.0
        %v1097 = vadd.f32 %v1095, %v1096
        %v1098 = vsel %vm841, %v1007, 0.0
        %v1099 = vadd.f32 %v1097, %v1098
        %v1100 = vsel %vm841, %v1008, 0.0
        %v1101 = vadd.f32 %v1099, %v1100
        %v1102 = vsel %vm841, %v1009, 0.0
        %v1103 = vadd.f32 %v1101, %v1102
        %v1104 = vsel %vm841, %v1010, 0.0
        %v1105 = vadd.f32 %v1103, %v1104
        %v1106 = vsel %vm841, %v1011, 0.0
        %v1107 = vadd.f32 %v1105, %v1106
        %v1108 = vsel %vm841, %v1012, 0.0
        %v1109 = vadd.f32 %v1107, %v1108
        %v1110 = vsel %vm841, %v1013, 0.0
        %v1111 = vadd.f32 %v1109, %v1110
        %v1112 = vsel %vm841, %v1014, 0.0
        %v1113 = vadd.f32 %v1111, %v1112
        %v1114 = vsel %vm841, %v1015, 0.0
        %v1115 = vadd.f32 %v1113, %v1114
        %v1116 = vsel %vm841, %v1016, 0.0
        %v1117 = vadd.f32 %v1115, %v1116
        %v1118 = vsel %vm841, %v1017, 0.0
        %v1119 = vadd.f32 %v1117, %v1118
        %v1120 = vsel %vm841, %v1018, 0.0
        %v1121 = vadd.f32 %v1119, %v1120
        %v1122 = vsel %vm841, %v1019, 0.0
        %v1123 = vadd.f32 %v1121, %v1122
        %v1124 = vsel %vm841, %v1020, 0.0
        %v1125 = vadd.f32 %v1123, %v1124
        %v1126 = vsel %vm841, %v1021, 0.0
        %v1127 = vadd.f32 %v1125, %v1126
        %v1128 = vsel %vm841, %v1022, 0.0
        %v1129 = vadd.f32 %v1127, %v1128
        %v1130 = vsel %vm841, %v1023, 0.0
        %v1131 = vadd.f32 %v1129, %v1130
        %v1132 = vsel %vm841, %v1024, 0.0
        %v1133 = vadd.f32 %v1131, %v1132
        %v1134 = vsel %vm841, %v1025, 0.0
        %v1135 = vadd.f32 %v1133, %v1134
        %v1136 = vsel %vm841, %v1026, 0.0
        %v1137 = vadd.f32 %v1135, %v1136
        %v1138 = vsel %vm841, %v1027, 0.0
        %v1139 = vadd.f32 %v1137, %v1138
        %v1140 = vsel %vm841, %v1028, 0.0
        %v1141 = vadd.f32 %v1139, %v1140
        %v1142 = vsel %vm841, %v1029, 0.0
        %v1143 = vadd.f32 %v1141, %v1142
        %v1144 = vsel %vm841, %v1030, 0.0
        %v1145 = vadd.f32 %v1143, %v1144
        %v1146 = vsel %vm841, %v1031, 0.0
        %v1147 = vadd.f32 %v1145, %v1146
        %v1148 = vsel %vm841, %v1032, 0.0
        %v1149 = vadd.f32 %v1147, %v1148
        %v1150 = vsel %vm841, %v1033, 0.0
        %v1151 = vadd.f32 %v1149, %v1150
        %v1152 = vsel %vm841, %v1034, 0.0
        %v1153 = vadd.f32 %v1151, %v1152
        %v1154 = vsel %vm841, %v1035, 0.0
        %v1155 = vadd.f32 %v1153, %v1154
        %v1156 = vsel %vm841, %v1036, 0.0
        %v1157 = vadd.f32 %v1155, %v1156
        %v1158 = vsel %vm841, %v1037, 0.0
        %v1159 = vadd.f32 %v1157, %v1158
        %v1160 = vsel %vm841, %v1038, 0.0
        %v1161 = vadd.f32 %v1159, %v1160
        %v1162 = vsel %vm841, %v1039, 0.0
        %v1163 = vadd.f32 %v1161, %v1162
        %v1164 = vsel %vm841, %v1040, 0.0
        %v1165 = vadd.f32 %v1163, %v1164
        %v1166 = vsel %vm841, %v1041, 0.0
        %v1167 = vadd.f32 %v1165, %v1166
        %v1168 = vsel %vm841, %v1042, 0.0
        %v1169 = vadd.f32 %v1167, %v1168
        %v1170 = vrot.slane %v1169, 4
        %v1171 = vadd.f32 %v1169, %v1170
        %v1172 = vrot.slane %v1171, 2
        %v1173 = vadd.f32 %v1171, %v1172
        %v1174 = vrot.slane %v1173, 1
        %v1175 = vadd.f32 %v1173, %v1174
        %v1176 = vadd.f32 %v978, %v1175
        %1177 = vst.msk [vmem:[#allocation3] sm:$0x1] %vm976, %v1176
      $region44: #{discriminator_forward.6} parent=35 // pred_fallthru
        _
      %p1178 = scmp.eq.s32.totalorder %s19, 1
      // Predicated region
      $region45: #{discriminator_forward.6} parent=35 // pred_check
        %p1179 = pneg %p1178
      $region46: #{discriminator_forward.6} parent=35 // pred_check_branch
        %1181 = sbr.rel (%p1179) target = $region48
      $region47: #{discriminator_forward.6} parent=35 // pred_region
        %v1182 = vld [vmem:[#allocation2] sm:$0x1]
        %v1183 = vmul.f32 %v1182, 0.001953125
        %v1184 = vld [vmem:[#allocation3] sm:$0x1]
        %v1185 = vmul.f32 %v1184, 0.001953125
        %v1186 = vmul.f32 %v1183, %v1183
        %v1187 = vsub.f32 %v1185, %v1186
        %v1189 = vlaneseq
        %v1190 = vshrl.u32 %v1189, 7
        %v1191 = vsub.s32 0, %v1190
        %v1192 = vrot.slane %v1183, %v1191
        %v1194 = vsub.f32 %v574, %v1192
        %v1195 = vsub.f32 %v577, %v1192
        %v1196 = vsub.f32 %v582, %v1192
        %v1197 = vsub.f32 %v585, %v1192
        %v1198 = vsub.f32 %v590, %v1192
        %v1199 = vsub.f32 %v593, %v1192
        %v1200 = vsub.f32 %v598, %v1192
        %v1201 = vsub.f32 %v601, %v1192
        %v1202 = vsub.f32 %v606, %v1192
        %v1203 = vsub.f32 %v609, %v1192
        %v1204 = vsub.f32 %v614, %v1192
        %v1205 = vsub.f32 %v617, %v1192
        %v1206 = vsub.f32 %v622, %v1192
        %v1207 = vsub.f32 %v625, %v1192
        %v1208 = vsub.f32 %v630, %v1192
        %v1209 = vsub.f32 %v633, %v1192
        %v1210 = vsub.f32 %v638, %v1192
        %v1211 = vsub.f32 %v641, %v1192
        %v1212 = vsub.f32 %v646, %v1192
        %v1213 = vsub.f32 %v649, %v1192
        %v1214 = vsub.f32 %v654, %v1192
        %v1215 = vsub.f32 %v657, %v1192
        %v1216 = vsub.f32 %v662, %v1192
        %v1217 = vsub.f32 %v665, %v1192
        %v1218 = vsub.f32 %v670, %v1192
        %v1219 = vsub.f32 %v673, %v1192
        %v1220 = vsub.f32 %v678, %v1192
        %v1221 = vsub.f32 %v681, %v1192
        %v1222 = vsub.f32 %v686, %v1192
        %v1223 = vsub.f32 %v689, %v1192
        %v1224 = vsub.f32 %v694, %v1192
        %v1225 = vsub.f32 %v697, %v1192
        %v1226 = vsub.f32 %v702, %v1192
        %v1227 = vsub.f32 %v705, %v1192
        %v1228 = vsub.f32 %v710, %v1192
        %v1229 = vsub.f32 %v713, %v1192
        %v1230 = vsub.f32 %v718, %v1192
        %v1231 = vsub.f32 %v721, %v1192
        %v1232 = vsub.f32 %v726, %v1192
        %v1233 = vsub.f32 %v729, %v1192
        %v1234 = vsub.f32 %v734, %v1192
        %v1235 = vsub.f32 %v737, %v1192
        %v1236 = vsub.f32 %v742, %v1192
        %v1237 = vsub.f32 %v745, %v1192
        %v1238 = vsub.f32 %v750, %v1192
        %v1239 = vsub.f32 %v753, %v1192
        %v1240 = vsub.f32 %v758, %v1192
        %v1241 = vsub.f32 %v761, %v1192
        %v1242 = vsub.f32 %v766, %v1192
        %v1243 = vsub.f32 %v769, %v1192
        %v1244 = vsub.f32 %v774, %v1192
        %v1245 = vsub.f32 %v777, %v1192
        %v1246 = vsub.f32 %v782, %v1192
        %v1247 = vsub.f32 %v785, %v1192
        %v1248 = vsub.f32 %v790, %v1192
        %v1249 = vsub.f32 %v793, %v1192
        %v1250 = vsub.f32 %v798, %v1192
        %v1251 = vsub.f32 %v801, %v1192
        %v1252 = vsub.f32 %v806, %v1192
        %v1253 = vsub.f32 %v809, %v1192
        %v1254 = vsub.f32 %v814, %v1192
        %v1255 = vsub.f32 %v817, %v1192
        %v1256 = vsub.f32 %v822, %v1192
        %v1257 = vsub.f32 %v825, %v1192
        %v1258 = vadd.f32 %v1187, 1e-05
        %v1259 = vrsqrt.pop %v1258
        %v1261 = vlaneseq
        %v1262 = vshrl.u32 %v1261, 7
        %v1263 = vsub.s32 0, %v1262
        %v1264 = vrot.slane %v1259, %v1263
        %v1266 = vmul.f32 %v1194, %v1264
        %v1267 = vmul.f32 %v1195, %v1264
        %v1268 = vmul.f32 %v1196, %v1264
        %v1269 = vmul.f32 %v1197, %v1264
        %v1270 = vmul.f32 %v1198, %v1264
        %v1271 = vmul.f32 %v1199, %v1264
        %v1272 = vmul.f32 %v1200, %v1264
        %v1273 = vmul.f32 %v1201, %v1264
        %v1274 = vmul.f32 %v1202, %v1264
        %v1275 = vmul.f32 %v1203, %v1264
        %v1276 = vmul.f32 %v1204, %v1264
        %v1277 = vmul.f32 %v1205, %v1264
        %v1278 = vmul.f32 %v1206, %v1264
        %v1279 = vmul.f32 %v1207, %v1264
        %v1280 = vmul.f32 %v1208, %v1264
        %v1281 = vmul.f32 %v1209, %v1264
        %v1282 = vmul.f32 %v1210, %v1264
        %v1283 = vmul.f32 %v1211, %v1264
        %v1284 = vmul.f32 %v1212, %v1264
        %v1285 = vmul.f32 %v1213, %v1264
        %v1286 = vmul.f32 %v1214, %v1264
        %v1287 = vmul.f32 %v1215, %v1264
        %v1288 = vmul.f32 %v1216, %v1264
        %v1289 = vmul.f32 %v1217, %v1264
        %v1290 = vmul.f32 %v1218, %v1264
        %v1291 = vmul.f32 %v1219, %v1264
        %v1292 = vmul.f32 %v1220, %v1264
        %v1293 = vmul.f32 %v1221, %v1264
        %v1294 = vmul.f32 %v1222, %v1264
        %v1295 = vmul.f32 %v1223, %v1264
        %v1296 = vmul.f32 %v1224, %v1264
        %v1297 = vmul.f32 %v1225, %v1264
        %v1298 = vmul.f32 %v1226, %v1264
        %v1299 = vmul.f32 %v1227, %v1264
        %v1300 = vmul.f32 %v1228, %v1264
        %v1301 = vmul.f32 %v1229, %v1264
        %v1302 = vmul.f32 %v1230, %v1264
        %v1303 = vmul.f32 %v1231, %v1264
        %v1304 = vmul.f32 %v1232, %v1264
        %v1305 = vmul.f32 %v1233, %v1264
        %v1306 = vmul.f32 %v1234, %v1264
        %v1307 = vmul.f32 %v1235, %v1264
        %v1308 = vmul.f32 %v1236, %v1264
        %v1309 = vmul.f32 %v1237, %v1264
        %v1310 = vmul.f32 %v1238, %v1264
        %v1311 = vmul.f32 %v1239, %v1264
        %v1312 = vmul.f32 %v1240, %v1264
        %v1313 = vmul.f32 %v1241, %v1264
        %v1314 = vmul.f32 %v1242, %v1264
        %v1315 = vmul.f32 %v1243, %v1264
        %v1316 = vmul.f32 %v1244, %v1264
        %v1317 = vmul.f32 %v1245, %v1264
        %v1318 = vmul.f32 %v1246, %v1264
        %v1319 = vmul.f32 %v1247, %v1264
        %v1320 = vmul.f32 %v1248, %v1264
        %v1321 = vmul.f32 %v1249, %v1264
        %v1322 = vmul.f32 %v1250, %v1264
        %v1323 = vmul.f32 %v1251, %v1264
        %v1324 = vmul.f32 %v1252, %v1264
        %v1325 = vmul.f32 %v1253, %v1264
        %v1326 = vmul.f32 %v1254, %v1264
        %v1327 = vmul.f32 %v1255, %v1264
        %v1328 = vmul.f32 %v1256, %v1264
        %v1329 = vmul.f32 %v1257, %v1264
        %v1330 = vld [vmem:[%s2] sm:$0x1]
        %v1332 = vlaneseq
        %v1333 = vshrl.u32 %v1332, 7
        %v1334 = vsub.s32 0, %v1333
        %v1335 = vrot.slane %v1330, %v1334
        %v1337 = vmul.f32 %v1266, %v1335
        %v1338 = vmul.f32 %v1267, %v1335
        %v1339 = vmul.f32 %v1268, %v1335
        %v1340 = vmul.f32 %v1269, %v1335
        %v1341 = vmul.f32 %v1270, %v1335
        %v1342 = vmul.f32 %v1271, %v1335
        %v1343 = vmul.f32 %v1272, %v1335
        %v1344 = vmul.f32 %v1273, %v1335
        %v1345 = vmul.f32 %v1274, %v1335
        %v1346 = vmul.f32 %v1275, %v1335
        %v1347 = vmul.f32 %v1276, %v1335
        %v1348 = vmul.f32 %v1277, %v1335
        %v1349 = vmul.f32 %v1278, %v1335
        %v1350 = vmul.f32 %v1279, %v1335
        %v1351 = vmul.f32 %v1280, %v1335
        %v1352 = vmul.f32 %v1281, %v1335
        %v1353 = vmul.f32 %v1282, %v1335
        %v1354 = vmul.f32 %v1283, %v1335
        %v1355 = vmul.f32 %v1284, %v1335
        %v1356 = vmul.f32 %v1285, %v1335
        %v1357 = vmul.f32 %v1286, %v1335
        %v1358 = vmul.f32 %v1287, %v1335
        %v1359 = vmul.f32 %v1288, %v1335
        %v1360 = vmul.f32 %v1289, %v1335
        %v1361 = vmul.f32 %v1290, %v1335
        %v1362 = vmul.f32 %v1291, %v1335
        %v1363 = vmul.f32 %v1292, %v1335
        %v1364 = vmul.f32 %v1293, %v1335
        %v1365 = vmul.f32 %v1294, %v1335
        %v1366 = vmul.f32 %v1295, %v1335
        %v1367 = vmul.f32 %v1296, %v1335
        %v1368 = vmul.f32 %v1297, %v1335
        %v1369 = vmul.f32 %v1298, %v1335
        %v1370 = vmul.f32 %v1299, %v1335
        %v1371 = vmul.f32 %v1300, %v1335
        %v1372 = vmul.f32 %v1301, %v1335
        %v1373 = vmul.f32 %v1302, %v1335
        %v1374 = vmul.f32 %v1303, %v1335
        %v1375 = vmul.f32 %v1304, %v1335
        %v1376 = vmul.f32 %v1305, %v1335
        %v1377 = vmul.f32 %v1306, %v1335
        %v1378 = vmul.f32 %v1307, %v1335
        %v1379 = vmul.f32 %v1308, %v1335
        %v1380 = vmul.f32 %v1309, %v1335
        %v1381 = vmul.f32 %v1310, %v1335
        %v1382 = vmul.f32 %v1311, %v1335
        %v1383 = vmul.f32 %v1312, %v1335
        %v1384 = vmul.f32 %v1313, %v1335
        %v1385 = vmul.f32 %v1314, %v1335
        %v1386 = vmul.f32 %v1315, %v1335
        %v1387 = vmul.f32 %v1316, %v1335
        %v1388 = vmul.f32 %v1317, %v1335
        %v1389 = vmul.f32 %v1318, %v1335
        %v1390 = vmul.f32 %v1319, %v1335
        %v1391 = vmul.f32 %v1320, %v1335
        %v1392 = vmul.f32 %v1321, %v1335
        %v1393 = vmul.f32 %v1322, %v1335
        %v1394 = vmul.f32 %v1323, %v1335
        %v1395 = vmul.f32 %v1324, %v1335
        %v1396 = vmul.f32 %v1325, %v1335
        %v1397 = vmul.f32 %v1326, %v1335
        %v1398 = vmul.f32 %v1327, %v1335
        %v1399 = vmul.f32 %v1328, %v1335
        %v1400 = vmul.f32 %v1329, %v1335
        %v1401 = vld [vmem:[%s3] sm:$0x1]
        %v1403 = vlaneseq
        %v1404 = vshrl.u32 %v1403, 7
        %v1405 = vsub.s32 0, %v1404
        %v1406 = vrot.slane %v1401, %v1405
        %v1408 = vadd.f32 %v1337, %v1406
        %v1409 = vadd.f32 %v1338, %v1406
        %v1410 = vadd.f32 %v1339, %v1406
        %v1411 = vadd.f32 %v1340, %v1406
        %v1412 = vadd.f32 %v1341, %v1406
        %v1413 = vadd.f32 %v1342, %v1406
        %v1414 = vadd.f32 %v1343, %v1406
        %v1415 = vadd.f32 %v1344, %v1406
        %v1416 = vadd.f32 %v1345, %v1406
        %v1417 = vadd.f32 %v1346, %v1406
        %v1418 = vadd.f32 %v1347, %v1406
        %v1419 = vadd.f32 %v1348, %v1406
        %v1420 = vadd.f32 %v1349, %v1406
        %v1421 = vadd.f32 %v1350, %v1406
        %v1422 = vadd.f32 %v1351, %v1406
        %v1423 = vadd.f32 %v1352, %v1406
        %v1424 = vadd.f32 %v1353, %v1406
        %v1425 = vadd.f32 %v1354, %v1406
        %v1426 = vadd.f32 %v1355, %v1406
        %v1427 = vadd.f32 %v1356, %v1406
        %v1428 = vadd.f32 %v1357, %v1406
        %v1429 = vadd.f32 %v1358, %v1406
        %v1430 = vadd.f32 %v1359, %v1406
        %v1431 = vadd.f32 %v1360, %v1406
        %v1432 = vadd.f32 %v1361, %v1406
        %v1433 = vadd.f32 %v1362, %v1406
        %v1434 = vadd.f32 %v1363, %v1406
        %v1435 = vadd.f32 %v1364, %v1406
        %v1436 = vadd.f32 %v1365, %v1406
        %v1437 = vadd.f32 %v1366, %v1406
        %v1438 = vadd.f32 %v1367, %v1406
        %v1439 = vadd.f32 %v1368, %v1406
        %v1440 = vadd.f32 %v1369, %v1406
        %v1441 = vadd.f32 %v1370, %v1406
        %v1442 = vadd.f32 %v1371, %v1406
        %v1443 = vadd.f32 %v1372, %v1406
        %v1444 = vadd.f32 %v1373, %v1406
        %v1445 = vadd.f32 %v1374, %v1406
        %v1446 = vadd.f32 %v1375, %v1406
        %v1447 = vadd.f32 %v1376, %v1406
        %v1448 = vadd.f32 %v1377, %v1406
        %v1449 = vadd.f32 %v1378, %v1406
        %v1450 = vadd.f32 %v1379, %v1406
        %v1451 = vadd.f32 %v1380, %v1406
        %v1452 = vadd.f32 %v1381, %v1406
        %v1453 = vadd.f32 %v1382, %v1406
        %v1454 = vadd.f32 %v1383, %v1406
        %v1455 = vadd.f32 %v1384, %v1406
        %v1456 = vadd.f32 %v1385, %v1406
        %v1457 = vadd.f32 %v1386, %v1406
        %v1458 = vadd.f32 %v1387, %v1406
        %v1459 = vadd.f32 %v1388, %v1406
        %v1460 = vadd.f32 %v1389, %v1406
        %v1461 = vadd.f32 %v1390, %v1406
        %v1462 = vadd.f32 %v1391, %v1406
        %v1463 = vadd.f32 %v1392, %v1406
        %v1464 = vadd.f32 %v1393, %v1406
        %v1465 = vadd.f32 %v1394, %v1406
        %v1466 = vadd.f32 %v1395, %v1406
        %v1467 = vadd.f32 %v1396, %v1406
        %v1468 = vadd.f32 %v1397, %v1406
        %v1469 = vadd.f32 %v1398, %v1406
        %v1470 = vadd.f32 %v1399, %v1406
        %v1471 = vadd.f32 %v1400, %v1406
        %vm1472 = vcmp.gt.f32.partialorder %v1408, 0.0
        %vm1473 = vcmp.gt.f32.partialorder %v1409, 0.0
        %vm1474 = vcmp.gt.f32.partialorder %v1410, 0.0
        %vm1475 = vcmp.gt.f32.partialorder %v1411, 0.0
        %vm1476 = vcmp.gt.f32.partialorder %v1412, 0.0
        %vm1477 = vcmp.gt.f32.partialorder %v1413, 0.0
        %vm1478 = vcmp.gt.f32.partialorder %v1414, 0.0
        %vm1479 = vcmp.gt.f32.partialorder %v1415, 0.0
        %vm1480 = vcmp.gt.f32.partialorder %v1416, 0.0
        %vm1481 = vcmp.gt.f32.partialorder %v1417, 0.0
        %vm1482 = vcmp.gt.f32.partialorder %v1418, 0.0
        %vm1483 = vcmp.gt.f32.partialorder %v1419, 0.0
        %vm1484 = vcmp.gt.f32.partialorder %v1420, 0.0
        %vm1485 = vcmp.gt.f32.partialorder %v1421, 0.0
        %vm1486 = vcmp.gt.f32.partialorder %v1422, 0.0
        %vm1487 = vcmp.gt.f32.partialorder %v1423, 0.0
        %vm1488 = vcmp.gt.f32.partialorder %v1424, 0.0
        %vm1489 = vcmp.gt.f32.partialorder %v1425, 0.0
        %vm1490 = vcmp.gt.f32.partialorder %v1426, 0.0
        %vm1491 = vcmp.gt.f32.partialorder %v1427, 0.0
        %vm1492 = vcmp.gt.f32.partialorder %v1428, 0.0
        %vm1493 = vcmp.gt.f32.partialorder %v1429, 0.0
        %vm1494 = vcmp.gt.f32.partialorder %v1430, 0.0
        %vm1495 = vcmp.gt.f32.partialorder %v1431, 0.0
        %vm1496 = vcmp.gt.f32.partialorder %v1432, 0.0
        %vm1497 = vcmp.gt.f32.partialorder %v1433, 0.0
        %vm1498 = vcmp.gt.f32.partialorder %v1434, 0.0
        %vm1499 = vcmp.gt.f32.partialorder %v1435, 0.0
        %vm1500 = vcmp.gt.f32.partialorder %v1436, 0.0
        %vm1501 = vcmp.gt.f32.partialorder %v1437, 0.0
        %vm1502 = vcmp.gt.f32.partialorder %v1438, 0.0
        %vm1503 = vcmp.gt.f32.partialorder %v1439, 0.0
        %vm1504 = vcmp.gt.f32.partialorder %v1440, 0.0
        %vm1505 = vcmp.gt.f32.partialorder %v1441, 0.0
        %vm1506 = vcmp.gt.f32.partialorder %v1442, 0.0
        %vm1507 = vcmp.gt.f32.partialorder %v1443, 0.0
        %vm1508 = vcmp.gt.f32.partialorder %v1444, 0.0
        %vm1509 = vcmp.gt.f32.partialorder %v1445, 0.0
        %vm1510 = vcmp.gt.f32.partialorder %v1446, 0.0
        %vm1511 = vcmp.gt.f32.partialorder %v1447, 0.0
        %vm1512 = vcmp.gt.f32.partialorder %v1448, 0.0
        %vm1513 = vcmp.gt.f32.partialorder %v1449, 0.0
        %vm1514 = vcmp.gt.f32.partialorder %v1450, 0.0
        %vm1515 = vcmp.gt.f32.partialorder %v1451, 0.0
        %vm1516 = vcmp.gt.f32.partialorder %v1452, 0.0
        %vm1517 = vcmp.gt.f32.partialorder %v1453, 0.0
        %vm1518 = vcmp.gt.f32.partialorder %v1454, 0.0
        %vm1519 = vcmp.gt.f32.partialorder %v1455, 0.0
        %vm1520 = vcmp.gt.f32.partialorder %v1456, 0.0
        %vm1521 = vcmp.gt.f32.partialorder %v1457, 0.0
        %vm1522 = vcmp.gt.f32.partialorder %v1458, 0.0
        %vm1523 = vcmp.gt.f32.partialorder %v1459, 0.0
        %vm1524 = vcmp.gt.f32.partialorder %v1460, 0.0
        %vm1525 = vcmp.gt.f32.partialorder %v1461, 0.0
        %vm1526 = vcmp.gt.f32.partialorder %v1462, 0.0
        %vm1527 = vcmp.gt.f32.partialorder %v1463, 0.0
        %vm1528 = vcmp.gt.f32.partialorder %v1464, 0.0
        %vm1529 = vcmp.gt.f32.partialorder %v1465, 0.0
        %vm1530 = vcmp.gt.f32.partialorder %v1466, 0.0
        %vm1531 = vcmp.gt.f32.partialorder %v1467, 0.0
        %vm1532 = vcmp.gt.f32.partialorder %v1468, 0.0
        %vm1533 = vcmp.gt.f32.partialorder %v1469, 0.0
        %vm1534 = vcmp.gt.f32.partialorder %v1470, 0.0
        %vm1535 = vcmp.gt.f32.partialorder %v1471, 0.0
        %v1536 = vmul.f32 %v1408, 0.2
        %v1537 = vmul.f32 %v1409, 0.2
        %v1538 = vmul.f32 %v1410, 0.2
        %v1539 = vmul.f32 %v1411, 0.2
        %v1540 = vmul.f32 %v1412, 0.2
        %v1541 = vmul.f32 %v1413, 0.2
        %v1542 = vmul.f32 %v1414, 0.2
        %v1543 = vmul.f32 %v1415, 0.2
        %v1544 = vmul.f32 %v1416, 0.2
        %v1545 = vmul.f32 %v1417, 0.2
        %v1546 = vmul.f32 %v1418, 0.2
        %v1547 = vmul.f32 %v1419, 0.2
        %v1548 = vmul.f32 %v1420, 0.2
        %v1549 = vmul.f32 %v1421, 0.2
        %v1550 = vmul.f32 %v1422, 0.2
        %v1551 = vmul.f32 %v1423, 0.2
        %v1552 = vmul.f32 %v1424, 0.2
        %v1553 = vmul.f32 %v1425, 0.2
        %v1554 = vmul.f32 %v1426, 0.2
        %v1555 = vmul.f32 %v1427, 0.2
        %v1556 = vmul.f32 %v1428, 0.2
        %v1557 = vmul.f32 %v1429, 0.2
        %v1558 = vmul.f32 %v1430, 0.2
        %v1559 = vmul.f32 %v1431, 0.2
        %v1560 = vmul.f32 %v1432, 0.2
        %v1561 = vmul.f32 %v1433, 0.2
        %v1562 = vmul.f32 %v1434, 0.2
        %v1563 = vmul.f32 %v1435, 0.2
        %v1564 = vmul.f32 %v1436, 0.2
        %v1565 = vmul.f32 %v1437, 0.2
        %v1566 = vmul.f32 %v1438, 0.2
        %v1567 = vmul.f32 %v1439, 0.2
        %v1568 = vmul.f32 %v1440, 0.2
        %v1569 = vmul.f32 %v1441, 0.2
        %v1570 = vmul.f32 %v1442, 0.2
        %v1571 = vmul.f32 %v1443, 0.2
        %v1572 = vmul.f32 %v1444, 0.2
        %v1573 = vmul.f32 %v1445, 0.2
        %v1574 = vmul.f32 %v1446, 0.2
        %v1575 = vmul.f32 %v1447, 0.2
        %v1576 = vmul.f32 %v1448, 0.2
        %v1577 = vmul.f32 %v1449, 0.2
        %v1578 = vmul.f32 %v1450, 0.2
        %v1579 = vmul.f32 %v1451, 0.2
        %v1580 = vmul.f32 %v1452, 0.2
        %v1581 = vmul.f32 %v1453, 0.2
        %v1582 = vmul.f32 %v1454, 0.2
        %v1583 = vmul.f32 %v1455, 0.2
        %v1584 = vmul.f32 %v1456, 0.2
        %v1585 = vmul.f32 %v1457, 0.2
        %v1586 = vmul.f32 %v1458, 0.2
        %v1587 = vmul.f32 %v1459, 0.2
        %v1588 = vmul.f32 %v1460, 0.2
        %v1589 = vmul.f32 %v1461, 0.2
        %v1590 = vmul.f32 %v1462, 0.2
        %v1591 = vmul.f32 %v1463, 0.2
        %v1592 = vmul.f32 %v1464, 0.2
        %v1593 = vmul.f32 %v1465, 0.2
        %v1594 = vmul.f32 %v1466, 0.2
        %v1595 = vmul.f32 %v1467, 0.2
        %v1596 = vmul.f32 %v1468, 0.2
        %v1597 = vmul.f32 %v1469, 0.2
        %v1598 = vmul.f32 %v1470, 0.2
        %v1599 = vmul.f32 %v1471, 0.2
        %v1600 = vsel %vm1472, %v1408, %v1536
        %v1601 = vsel %vm1473, %v1409, %v1537
        %v1602 = vsel %vm1474, %v1410, %v1538
        %v1603 = vsel %vm1475, %v1411, %v1539
        %v1604 = vsel %vm1476, %v1412, %v1540
        %v1605 = vsel %vm1477, %v1413, %v1541
        %v1606 = vsel %vm1478, %v1414, %v1542
        %v1607 = vsel %vm1479, %v1415, %v1543
        %v1608 = vsel %vm1480, %v1416, %v1544
        %v1609 = vsel %vm1481, %v1417, %v1545
        %v1610 = vsel %vm1482, %v1418, %v1546
        %v1611 = vsel %vm1483, %v1419, %v1547
        %v1612 = vsel %vm1484, %v1420, %v1548
        %v1613 = vsel %vm1485, %v1421, %v1549
        %v1614 = vsel %vm1486, %v1422, %v1550
        %v1615 = vsel %vm1487, %v1423, %v1551
        %v1616 = vsel %vm1488, %v1424, %v1552
        %v1617 = vsel %vm1489, %v1425, %v1553
        %v1618 = vsel %vm1490, %v1426, %v1554
        %v1619 = vsel %vm1491, %v1427, %v1555
        %v1620 = vsel %vm1492, %v1428, %v1556
        %v1621 = vsel %vm1493, %v1429, %v1557
        %v1622 = vsel %vm1494, %v1430, %v1558
        %v1623 = vsel %vm1495, %v1431, %v1559
        %v1624 = vsel %vm1496, %v1432, %v1560
        %v1625 = vsel %vm1497, %v1433, %v1561
        %v1626 = vsel %vm1498, %v1434, %v1562
        %v1627 = vsel %vm1499, %v1435, %v1563
        %v1628 = vsel %vm1500, %v1436, %v1564
        %v1629 = vsel %vm1501, %v1437, %v1565
        %v1630 = vsel %vm1502, %v1438, %v1566
        %v1631 = vsel %vm1503, %v1439, %v1567
        %v1632 = vsel %vm1504, %v1440, %v1568
        %v1633 = vsel %vm1505, %v1441, %v1569
        %v1634 = vsel %vm1506, %v1442, %v1570
        %v1635 = vsel %vm1507, %v1443, %v1571
        %v1636 = vsel %vm1508, %v1444, %v1572
        %v1637 = vsel %vm1509, %v1445, %v1573
        %v1638 = vsel %vm1510, %v1446, %v1574
        %v1639 = vsel %vm1511, %v1447, %v1575
        %v1640 = vsel %vm1512, %v1448, %v1576
        %v1641 = vsel %vm1513, %v1449, %v1577
        %v1642 = vsel %vm1514, %v1450, %v1578
        %v1643 = vsel %vm1515, %v1451, %v1579
        %v1644 = vsel %vm1516, %v1452, %v1580
        %v1645 = vsel %vm1517, %v1453, %v1581
        %v1646 = vsel %vm1518, %v1454, %v1582
        %v1647 = vsel %vm1519, %v1455, %v1583
        %v1648 = vsel %vm1520, %v1456, %v1584
        %v1649 = vsel %vm1521, %v1457, %v1585
        %v1650 = vsel %vm1522, %v1458, %v1586
        %v1651 = vsel %vm1523, %v1459, %v1587
        %v1652 = vsel %vm1524, %v1460, %v1588
        %v1653 = vsel %vm1525, %v1461, %v1589
        %v1654 = vsel %vm1526, %v1462, %v1590
        %v1655 = vsel %vm1527, %v1463, %v1591
        %v1656 = vsel %vm1528, %v1464, %v1592
        %v1657 = vsel %vm1529, %v1465, %v1593
        %v1658 = vsel %vm1530, %v1466, %v1594
        %v1659 = vsel %vm1531, %v1467, %v1595
        %v1660 = vsel %vm1532, %v1468, %v1596
        %v1661 = vsel %vm1533, %v1469, %v1597
        %v1662 = vsel %vm1534, %v1470, %v1598
        %v1663 = vsel %vm1535, %v1471, %v1599
        %v1664 = vpack.c.bf16 %v1601, %v1600
        %v1665 = vpack.c.bf16 %v1603, %v1602
        %v1666 = vpack.c.bf16 %v1605, %v1604
        %v1667 = vpack.c.bf16 %v1607, %v1606
        %v1668 = vpack.c.bf16 %v1609, %v1608
        %v1669 = vpack.c.bf16 %v1611, %v1610
        %v1670 = vpack.c.bf16 %v1613, %v1612
        %v1671 = vpack.c.bf16 %v1615, %v1614
        %v1672 = vpack.c.bf16 %v1617, %v1616
        %v1673 = vpack.c.bf16 %v1619, %v1618
        %v1674 = vpack.c.bf16 %v1621, %v1620
        %v1675 = vpack.c.bf16 %v1623, %v1622
        %v1676 = vpack.c.bf16 %v1625, %v1624
        %v1677 = vpack.c.bf16 %v1627, %v1626
        %v1678 = vpack.c.bf16 %v1629, %v1628
        %v1679 = vpack.c.bf16 %v1631, %v1630
        %v1680 = vpack.c.bf16 %v1633, %v1632
        %v1681 = vpack.c.bf16 %v1635, %v1634
        %v1682 = vpack.c.bf16 %v1637, %v1636
        %v1683 = vpack.c.bf16 %v1639, %v1638
        %v1684 = vpack.c.bf16 %v1641, %v1640
        %v1685 = vpack.c.bf16 %v1643, %v1642
        %v1686 = vpack.c.bf16 %v1645, %v1644
        %v1687 = vpack.c.bf16 %v1647, %v1646
        %v1688 = vpack.c.bf16 %v1649, %v1648
        %v1689 = vpack.c.bf16 %v1651, %v1650
        %v1690 = vpack.c.bf16 %v1653, %v1652
        %v1691 = vpack.c.bf16 %v1655, %v1654
        %v1692 = vpack.c.bf16 %v1657, %v1656
        %v1693 = vpack.c.bf16 %v1659, %v1658
        %v1694 = vpack.c.bf16 %v1661, %v1660
        %v1695 = vpack.c.bf16 %v1663, %v1662
        %v1728 = vunpack.c.l.b16 %v1664
        %v1729 = vunpack.c.h.b16 %v1664
        %v1730 = vunpack.c.l.b16 %v1665
        %v1731 = vunpack.c.h.b16 %v1665
        %v1732 = vunpack.c.l.b16 %v1666
        %v1733 = vunpack.c.h.b16 %v1666
        %v1734 = vunpack.c.l.b16 %v1667
        %v1735 = vunpack.c.h.b16 %v1667
        %v1736 = vunpack.c.l.b16 %v1668
        %v1737 = vunpack.c.h.b16 %v1668
        %v1738 = vunpack.c.l.b16 %v1669
        %v1739 = vunpack.c.h.b16 %v1669
        %v1740 = vunpack.c.l.b16 %v1670
        %v1741 = vunpack.c.h.b16 %v1670
        %v1742 = vunpack.c.l.b16 %v1671
        %v1743 = vunpack.c.h.b16 %v1671
        %v1744 = vunpack.c.l.b16 %v1672
        %v1745 = vunpack.c.h.b16 %v1672
        %v1746 = vunpack.c.l.b16 %v1673
        %v1747 = vunpack.c.h.b16 %v1673
        %v1748 = vunpack.c.l.b16 %v1674
        %v1749 = vunpack.c.h.b16 %v1674
        %v1750 = vunpack.c.l.b16 %v1675
        %v1751 = vunpack.c.h.b16 %v1675
        %v1752 = vunpack.c.l.b16 %v1676
        %v1753 = vunpack.c.h.b16 %v1676
        %v1754 = vunpack.c.l.b16 %v1677
        %v1755 = vunpack.c.h.b16 %v1677
        %v1756 = vunpack.c.l.b16 %v1678
        %v1757 = vunpack.c.h.b16 %v1678
        %v1758 = vunpack.c.l.b16 %v1679
        %v1759 = vunpack.c.h.b16 %v1679
        %v1760 = vunpack.c.l.b16 %v1680
        %v1761 = vunpack.c.h.b16 %v1680
        %v1762 = vunpack.c.l.b16 %v1681
        %v1763 = vunpack.c.h.b16 %v1681
        %v1764 = vunpack.c.l.b16 %v1682
        %v1765 = vunpack.c.h.b16 %v1682
        %v1766 = vunpack.c.l.b16 %v1683
        %v1767 = vunpack.c.h.b16 %v1683
        %v1768 = vunpack.c.l.b16 %v1684
        %v1769 = vunpack.c.h.b16 %v1684
        %v1770 = vunpack.c.l.b16 %v1685
        %v1771 = vunpack.c.h.b16 %v1685
        %v1772 = vunpack.c.l.b16 %v1686
        %v1773 = vunpack.c.h.b16 %v1686
        %v1774 = vunpack.c.l.b16 %v1687
        %v1775 = vunpack.c.h.b16 %v1687
        %v1776 = vunpack.c.l.b16 %v1688
        %v1777 = vunpack.c.h.b16 %v1688
        %v1778 = vunpack.c.l.b16 %v1689
        %v1779 = vunpack.c.h.b16 %v1689
        %v1780 = vunpack.c.l.b16 %v1690
        %v1781 = vunpack.c.h.b16 %v1690
        %v1782 = vunpack.c.l.b16 %v1691
        %v1783 = vunpack.c.h.b16 %v1691
        %v1784 = vunpack.c.l.b16 %v1692
        %v1785 = vunpack.c.h.b16 %v1692
        %v1786 = vunpack.c.l.b16 %v1693
        %v1787 = vunpack.c.h.b16 %v1693
        %v1788 = vunpack.c.l.b16 %v1694
        %v1789 = vunpack.c.h.b16 %v1694
        %v1790 = vunpack.c.l.b16 %v1695
        %v1791 = vunpack.c.h.b16 %v1695
        %v1792 = vpack.c.b16 %v1728, %v1728
        %v1793 = vpack.c.b16 %v1729, %v1729
        %v1794 = vpack.c.b16 %v1730, %v1730
        %v1795 = vpack.c.b16 %v1731, %v1731
        %v1796 = vpack.c.b16 %v1732, %v1732
        %v1797 = vpack.c.b16 %v1733, %v1733
        %v1798 = vpack.c.b16 %v1734, %v1734
        %v1799 = vpack.c.b16 %v1735, %v1735
        %v1800 = vpack.c.b16 %v1736, %v1736
        %v1801 = vpack.c.b16 %v1737, %v1737
        %v1802 = vpack.c.b16 %v1738, %v1738
        %v1803 = vpack.c.b16 %v1739, %v1739
        %v1804 = vpack.c.b16 %v1740, %v1740
        %v1805 = vpack.c.b16 %v1741, %v1741
        %v1806 = vpack.c.b16 %v1742, %v1742
        %v1807 = vpack.c.b16 %v1743, %v1743
        %v1808 = vpack.c.b16 %v1744, %v1744
        %v1809 = vpack.c.b16 %v1745, %v1745
        %v1810 = vpack.c.b16 %v1746, %v1746
        %v1811 = vpack.c.b16 %v1747, %v1747
        %v1812 = vpack.c.b16 %v1748, %v1748
        %v1813 = vpack.c.b16 %v1749, %v1749
        %v1814 = vpack.c.b16 %v1750, %v1750
        %v1815 = vpack.c.b16 %v1751, %v1751
        %v1816 = vpack.c.b16 %v1752, %v1752
        %v1817 = vpack.c.b16 %v1753, %v1753
        %v1818 = vpack.c.b16 %v1754, %v1754
        %v1819 = vpack.c.b16 %v1755, %v1755
        %v1820 = vpack.c.b16 %v1756, %v1756
        %v1821 = vpack.c.b16 %v1757, %v1757
        %v1822 = vpack.c.b16 %v1758, %v1758
        %v1823 = vpack.c.b16 %v1759, %v1759
        %v1824 = vpack.c.b16 %v1760, %v1760
        %v1825 = vpack.c.b16 %v1761, %v1761
        %v1826 = vpack.c.b16 %v1762, %v1762
        %v1827 = vpack.c.b16 %v1763, %v1763
        %v1828 = vpack.c.b16 %v1764, %v1764
        %v1829 = vpack.c.b16 %v1765, %v1765
        %v1830 = vpack.c.b16 %v1766, %v1766
        %v1831 = vpack.c.b16 %v1767, %v1767
        %v1832 = vpack.c.b16 %v1768, %v1768
        %v1833 = vpack.c.b16 %v1769, %v1769
        %v1834 = vpack.c.b16 %v1770, %v1770
        %v1835 = vpack.c.b16 %v1771, %v1771
        %v1836 = vpack.c.b16 %v1772, %v1772
        %v1837 = vpack.c.b16 %v1773, %v1773
        %v1838 = vpack.c.b16 %v1774, %v1774
        %v1839 = vpack.c.b16 %v1775, %v1775
        %v1840 = vpack.c.b16 %v1776, %v1776
        %v1841 = vpack.c.b16 %v1777, %v1777
        %v1842 = vpack.c.b16 %v1778, %v1778
        %v1843 = vpack.c.b16 %v1779, %v1779
        %v1844 = vpack.c.b16 %v1780, %v1780
        %v1845 = vpack.c.b16 %v1781, %v1781
        %v1846 = vpack.c.b16 %v1782, %v1782
        %v1847 = vpack.c.b16 %v1783, %v1783
        %v1848 = vpack.c.b16 %v1784, %v1784
        %v1849 = vpack.c.b16 %v1785, %v1785
        %v1850 = vpack.c.b16 %v1786, %v1786
        %v1851 = vpack.c.b16 %v1787, %v1787
        %v1852 = vpack.c.b16 %v1788, %v1788
        %v1853 = vpack.c.b16 %v1789, %v1789
        %v1854 = vpack.c.b16 %v1790, %v1790
        %v1855 = vpack.c.b16 %v1791, %v1791
        %vm1920 = vcmask 125952
        %1921 = vst.msk [vmem:[%s215] sm:$0xf] %vm1920, %v1792
        %1922 = vst.msk [vmem:[%s215 + $0x4] sm:$0xf] %vm1920, %v1793
        %1923 = vst.msk [vmem:[%s215 + $0x8] sm:$0xf] %vm1920, %v1794
        %1924 = vst.msk [vmem:[%s215 + $0xc] sm:$0xf] %vm1920, %v1795
        %1925 = vst.msk [vmem:[%s215 + $0x10] sm:$0xf] %vm1920, %v1796
        %1926 = vst.msk [vmem:[%s215 + $0x14] sm:$0xf] %vm1920, %v1797
        %1927 = vst.msk [vmem:[%s215 + $0x18] sm:$0xf] %vm1920, %v1798
        %1928 = vst.msk [vmem:[%s215 + $0x1c] sm:$0xf] %vm1920, %v1799
        %1929 = vst.msk [vmem:[%s215 + $0x20] sm:$0xf] %vm1920, %v1800
        %1930 = vst.msk [vmem:[%s215 + $0x24] sm:$0xf] %vm1920, %v1801
        %1931 = vst.msk [vmem:[%s215 + $0x28] sm:$0xf] %vm1920, %v1802
        %1932 = vst.msk [vmem:[%s215 + $0x2c] sm:$0xf] %vm1920, %v1803
        %1933 = vst.msk [vmem:[%s215 + $0x30] sm:$0xf] %vm1920, %v1804
        %1934 = vst.msk [vmem:[%s215 + $0x34] sm:$0xf] %vm1920, %v1805
        %1935 = vst.msk [vmem:[%s215 + $0x38] sm:$0xf] %vm1920, %v1806
        %1936 = vst.msk [vmem:[%s215 + $0x3c] sm:$0xf] %vm1920, %v1807
        %1937 = vst.msk [vmem:[%s215 + $0x40] sm:$0xf] %vm1920, %v1808
        %1938 = vst.msk [vmem:[%s215 + $0x44] sm:$0xf] %vm1920, %v1809
        %1939 = vst.msk [vmem:[%s215 + $0x48] sm:$0xf] %vm1920, %v1810
        %1940 = vst.msk [vmem:[%s215 + $0x4c] sm:$0xf] %vm1920, %v1811
        %1941 = vst.msk [vmem:[%s215 + $0x50] sm:$0xf] %vm1920, %v1812
        %1942 = vst.msk [vmem:[%s215 + $0x54] sm:$0xf] %vm1920, %v1813
        %1943 = vst.msk [vmem:[%s215 + $0x58] sm:$0xf] %vm1920, %v1814
        %1944 = vst.msk [vmem:[%s215 + $0x5c] sm:$0xf] %vm1920, %v1815
        %1945 = vst.msk [vmem:[%s215 + $0x60] sm:$0xf] %vm1920, %v1816
        %1946 = vst.msk [vmem:[%s215 + $0x64] sm:$0xf] %vm1920, %v1817
        %1947 = vst.msk [vmem:[%s215 + $0x68] sm:$0xf] %vm1920, %v1818
        %1948 = vst.msk [vmem:[%s215 + $0x6c] sm:$0xf] %vm1920, %v1819
        %1949 = vst.msk [vmem:[%s215 + $0x70] sm:$0xf] %vm1920, %v1820
        %1950 = vst.msk [vmem:[%s215 + $0x74] sm:$0xf] %vm1920, %v1821
        %1951 = vst.msk [vmem:[%s215 + $0x78] sm:$0xf] %vm1920, %v1822
        %1952 = vst.msk [vmem:[%s215 + $0x7c] sm:$0xf] %vm1920, %v1823
        %1953 = vst.msk [vmem:[%s215 + $0x80] sm:$0xf] %vm1920, %v1824
        %1954 = vst.msk [vmem:[%s215 + $0x84] sm:$0xf] %vm1920, %v1825
        %1955 = vst.msk [vmem:[%s215 + $0x88] sm:$0xf] %vm1920, %v1826
        %1956 = vst.msk [vmem:[%s215 + $0x8c] sm:$0xf] %vm1920, %v1827
        %1957 = vst.msk [vmem:[%s215 + $0x90] sm:$0xf] %vm1920, %v1828
        %1958 = vst.msk [vmem:[%s215 + $0x94] sm:$0xf] %vm1920, %v1829
        %1959 = vst.msk [vmem:[%s215 + $0x98] sm:$0xf] %vm1920, %v1830
        %1960 = vst.msk [vmem:[%s215 + $0x9c] sm:$0xf] %vm1920, %v1831
        %1961 = vst.msk [vmem:[%s215 + $0xa0] sm:$0xf] %vm1920, %v1832
        %1962 = vst.msk [vmem:[%s215 + $0xa4] sm:$0xf] %vm1920, %v1833
        %1963 = vst.msk [vmem:[%s215 + $0xa8] sm:$0xf] %vm1920, %v1834
        %1964 = vst.msk [vmem:[%s215 + $0xac] sm:$0xf] %vm1920, %v1835
        %1965 = vst.msk [vmem:[%s215 + $0xb0] sm:$0xf] %vm1920, %v1836
        %1966 = vst.msk [vmem:[%s215 + $0xb4] sm:$0xf] %vm1920, %v1837
        %1967 = vst.msk [vmem:[%s215 + $0xb8] sm:$0xf] %vm1920, %v1838
        %1968 = vst.msk [vmem:[%s215 + $0xbc] sm:$0xf] %vm1920, %v1839
        %1969 = vst.msk [vmem:[%s215 + $0xc0] sm:$0xf] %vm1920, %v1840
        %1970 = vst.msk [vmem:[%s215 + $0xc4] sm:$0xf] %vm1920, %v1841
        %1971 = vst.msk [vmem:[%s215 + $0xc8] sm:$0xf] %vm1920, %v1842
        %1972 = vst.msk [vmem:[%s215 + $0xcc] sm:$0xf] %vm1920, %v1843
        %1973 = vst.msk [vmem:[%s215 + $0xd0] sm:$0xf] %vm1920, %v1844
        %1974 = vst.msk [vmem:[%s215 + $0xd4] sm:$0xf] %vm1920, %v1845
        %1975 = vst.msk [vmem:[%s215 + $0xd8] sm:$0xf] %vm1920, %v1846
        %1976 = vst.msk [vmem:[%s215 + $0xdc] sm:$0xf] %vm1920, %v1847
        %1977 = vst.msk [vmem:[%s215 + $0xe0] sm:$0xf] %vm1920, %v1848
        %1978 = vst.msk [vmem:[%s215 + $0xe4] sm:$0xf] %vm1920, %v1849
        %1979 = vst.msk [vmem:[%s215 + $0xe8] sm:$0xf] %vm1920, %v1850
        %1980 = vst.msk [vmem:[%s215 + $0xec] sm:$0xf] %vm1920, %v1851
        %1981 = vst.msk [vmem:[%s215 + $0xf0] sm:$0xf] %vm1920, %v1852
        %1982 = vst.msk [vmem:[%s215 + $0xf4] sm:$0xf] %vm1920, %v1853
        %1983 = vst.msk [vmem:[%s215 + $0xf8] sm:$0xf] %vm1920, %v1854
        %1984 = vst.msk [vmem:[%s215 + $0xfc] sm:$0xf] %vm1920, %v1855
      $region48: #{discriminator_forward.6} parent=35 // pred_fallthru
        _
      %s1985 = smul.u32 %s19, %s20
      %s1986 = smul.u32 64, %s1985
      %p1987 = scmp.lt.s32.totalorder %s1986, 63
      %s1988 = scalar_select %p1987, %s1986, 63
      %s1989 = smul.addr %s1988, 4
      %s1990 = scalar_lea.vmem %s4, %s1989
      // Predicated region
      $region49: #{discriminator_forward.6} parent=35 // pred_check
        %p1991 = pneg %p136
      $region50: #{discriminator_forward.6} parent=35 // pred_check_branch
        %1993 = sbr.rel (%p1991) target = $region52
      $region51: #{discriminator_forward.6} parent=35 // pred_region
        %s1994 = smul.u32 %s19, %s20
        %s1995 = smul.u32 64, %s1994
      $region52: #{discriminator_forward.6} parent=35 // pred_fallthru
        _
    $region36: #{discriminator_forward.6} parent=5 // pred_fallthru
      _
    %p1996 = scmp.le.s32.totalorder 2, %s10
    // Predicated region
    $region53: #{discriminator_forward.6} parent=5 // pred_check
      %p1997 = pneg %p1996
    $region54: #{discriminator_forward.6} parent=5 // pred_check_branch
      %1999 = sbr.rel (%p1997) target = $region56
    $region55: #{discriminator_forward.6} parent=5 // pred_region
      %s2000 = ssub.s32 %s10, 2
      // Predicated region
      $region57: #{discriminator_forward.6} parent=55 // pred_check
        %p2001 = pneg %p142
      $region58: #{discriminator_forward.6} parent=55 // pred_check_branch
        %2003 = sbr.rel (%p2001) target = $region60
      $region59: #{discriminator_forward.6} parent=55 // pred_region
        %s2004 = smul.u32 %s21, %s22
        %s2005 = smul.u32 64, %s2004
        %p2006 = scmp.lt.s32.totalorder %s2005, 63
        %s2007 = scalar_select %p2006, %s2005, 63
        %s2008 = smul.addr %s2007, 4
        %s2009 = scalar_lea.vmem %s4, %s2008
      $region60: #{discriminator_forward.6} parent=55 // pred_fallthru
        _
    $region56: #{discriminator_forward.6} parent=5 // pred_fallthru
      _
  $region6: #{discriminator_forward.6} parent=0 // loop_footer
    %s14 = sadd.s32 1, %s10
  $region7: #{discriminator_forward.6} parent=0 // loop_footer_branch
    %9 = sbr.rel target = $region3
  $region8: #{discriminator_forward.6} parent=0 // loop_exit
    _

// kernel: discriminator_forward.7
$region0: #{discriminator_forward.7}
  #allocation0 [shape = 'u32[]', space=smem, size = 0x4, offset = 0x4, fixed_abs, tag = 'smem constant byte address 0x4 - core index']
  #allocation1 [shape = 'u32[144,128]{1,0:T(1,128)}', space=vmem, size = 0x12000, scoped, tag = 'internal scratch']
  #allocation2 [shape = 'f32[1,32]{1,0:T(1,128)}', space=vmem, size = 0x200, scoped, tag = 'scratch operand']
  #allocation3 [shape = 'f32[1,32]{1,0:T(1,128)}', space=vmem, size = 0x200, scoped, tag = 'scratch operand']
  %s0 = inlined_call_operand.vmem [shape: bf16[128,256], index: 0, kind: input, shape index: {}]
  %s1 = inlined_call_operand.vmem [shape: bf16[256,32], index: 1, kind: input, shape index: {}]
  %s2 = inlined_call_operand.vmem [shape: f32[1,32], index: 2, kind: input, shape index: {}]
  %s3 = inlined_call_operand.vmem [shape: f32[1,32], index: 3, kind: input, shape index: {}]
  %s4 = inlined_call_operand.vmem [shape: bf16[128,32], index: 4, kind: output, shape index: {}]
  %s5 = sld [smem:[#allocation0]]
  $region61: #{discriminator_forward.7} parent=0
    _
  %s7 = ssub.s32 1, %s5
  %s8 = scalar_select 0, %s7, %s5
  loop: start=0, step=1, limit=4
  $region2: #{discriminator_forward.7} parent=0 // loop_pre_header
    _
  $region3: #{discriminator_forward.7} parent=0 // loop_header
    %s10 = sphi 0, %s14
    %p11 = scmp.ge.s32.totalorder %s10, 4
    %s17 = sphi 0, %s29
    %s18 = sphi 0, %s25
    %s19 = sphi 0, %s17
    %s20 = sphi 0, %s18
    %s21 = sphi 0, %s19
    %s22 = sphi 0, %s20
    %s32 = sphi 0, %s34
    %s35 = sphi 0, %s32
    %s36 = sphi 0, %s35
    %s52 = sphi 0, %s36
    %s56 = sphi 0, %s56
    %s58 = sphi 0, %s56
    %s59 = sphi 0, %s58
    %s73 = sphi 0, %s59
    %s77 = sphi 0, %s77
    %s79 = sphi 0, %s77
    %s80 = sphi 0, %s79
    %s94 = sphi 0, %s80
    %s98 = sphi 0, %s98
    %s100 = sphi 0, %s98
    %s101 = sphi 0, %s100
    %s115 = sphi 0, %s101
    %s123 = sphi 0, %s125
    %s126 = sphi 0, %s123
    %s127 = sphi 0, %s126
    %s143 = sphi 0, %s127
  $region4: #{discriminator_forward.7} parent=0 // loop_header_branch
    %13 = sbr.rel (%p11) target = $region8
  $region5: #{discriminator_forward.7} parent=0 // loop_body
    %s15 = ssub.s32 %s10, 1
    %s16 = ssub.s32 %s10, 2
    %s23 = sadd.s32 1, %s18
    %p24 = scmp.ge.s32.totalorder %s23, 1
    %s25 = scalar_select %p24, 0, %s23
    %s26 = sadd.s32 1, %s17
    %s27 = scalar_select %p24, %s26, %s17
    %p28 = scmp.ge.s32.totalorder %s27, 2
    %s29 = scalar_select %p28, 0, %s27
    %s30 = ssub.s32 %s18, %s25
    %p31 = scmp.eq.s32.totalorder %s30, 0
    %s33 = sadd.s32 %s32, 1
    %s34 = scalar_select %p31, %s32, %s33
    %p37 = pneg %p31
    %p38 = scmp.eq.s32.totalorder %s10, 1
    %p39 = por %p37, %p38
    %p40 = scmp.ne.s32.totalorder %s32, %s35
    %p41 = scmp.eq.s32.totalorder %s10, 0
    %p42 = por %p40, %p41
    %p43 = scmp.ne.s32.totalorder %s32, %s35
    %p44 = scmp.eq.s32.totalorder %s15, 1
    %p45 = por %p43, %p44
    %p46 = scmp.ne.s32.totalorder %s35, %s36
    %p47 = scmp.eq.s32.totalorder %s15, 0
    %p48 = por %p46, %p47
    %p49 = scmp.ne.s32.totalorder %s35, %s36
    %p50 = scmp.eq.s32.totalorder %s16, 1
    %p51 = por %p49, %p50
    %p53 = scmp.ne.s32.totalorder %s36, %s52
    %p54 = scmp.eq.s32.totalorder %s16, 0
    %p55 = por %p53, %p54
    %s57 = sadd.s32 %s56, 1
    %p60 = scmp.eq.s32.totalorder %s10, 1
    %p61 = scmp.ne.s32.totalorder %s56, %s58
    %p62 = scmp.eq.s32.totalorder %s10, 0
    %p63 = por %p61, %p62
    %p64 = scmp.ne.s32.totalorder %s56, %s58
    %p65 = scmp.eq.s32.totalorder %s15, 1
    %p66 = por %p64, %p65
    %p67 = scmp.ne.s32.totalorder %s58, %s59
    %p68 = scmp.eq.s32.totalorder %s15, 0
    %p69 = por %p67, %p68
    %p70 = scmp.ne.s32.totalorder %s58, %s59
    %p71 = scmp.eq.s32.totalorder %s16, 1
    %p72 = por %p70, %p71
    %p74 = scmp.ne.s32.totalorder %s59, %s73
    %p75 = scmp.eq.s32.totalorder %s16, 0
    %p76 = por %p74, %p75
    %s78 = sadd.s32 %s77, 1
    %p81 = scmp.eq.s32.totalorder %s10, 1
    %p82 = scmp.ne.s32.totalorder %s77, %s79
    %p83 = scmp.eq.s32.totalorder %s10, 0
    %p84 = por %p82, %p83
    %p85 = scmp.ne.s32.totalorder %s77, %s79
    %p86 = scmp.eq.s32.totalorder %s15, 1
    %p87 = por %p85, %p86
    %p88 = scmp.ne.s32.totalorder %s79, %s80
    %p89 = scmp.eq.s32.totalorder %s15, 0
    %p90 = por %p88, %p89
    %p91 = scmp.ne.s32.totalorder %s79, %s80
    %p92 = scmp.eq.s32.totalorder %s16, 1
    %p93 = por %p91, %p92
    %p95 = scmp.ne.s32.totalorder %s80, %s94
    %p96 = scmp.eq.s32.totalorder %s16, 0
    %p97 = por %p95, %p96
    %s99 = sadd.s32 %s98, 1
    %p102 = scmp.eq.s32.totalorder %s10, 1
    %p103 = scmp.ne.s32.totalorder %s98, %s100
    %p104 = scmp.eq.s32.totalorder %s10, 0
    %p105 = por %p103, %p104
    %p106 = scmp.ne.s32.totalorder %s98, %s100
    %p107 = scmp.eq.s32.totalorder %s15, 1
    %p108 = por %p106, %p107
    %p109 = scmp.ne.s32.totalorder %s100, %s101
    %p110 = scmp.eq.s32.totalorder %s15, 0
    %p111 = por %p109, %p110
    %p112 = scmp.ne.s32.totalorder %s100, %s101
    %p113 = scmp.eq.s32.totalorder %s16, 1
    %p114 = por %p112, %p113
    %p116 = scmp.ne.s32.totalorder %s101, %s115
    %p117 = scmp.eq.s32.totalorder %s16, 0
    %p118 = por %p116, %p117
    %s119 = smul.u32 %s17, %s18
    %s120 = smul.u32 %s29, %s25
    %s121 = ssub.s32 %s119, %s120
    %p122 = scmp.eq.s32.totalorder %s121, 0
    %s124 = sadd.s32 %s123, 1
    %s125 = scalar_select %p122, %s123, %s124
    %p128 = pneg %p122
    %p129 = scmp.eq.s32.totalorder %s10, 1
    %p130 = por %p128, %p129
    %p131 = scmp.ne.s32.totalorder %s123, %s126
    %p132 = scmp.eq.s32.totalorder %s10, 0
    %p133 = por %p131, %p132
    %p134 = scmp.ne.s32.totalorder %s123, %s126
    %p135 = scmp.eq.s32.totalorder %s15, 1
    %p136 = por %p134, %p135
    %p137 = scmp.ne.s32.totalorder %s126, %s127
    %p138 = scmp.eq.s32.totalorder %s15, 0
    %p139 = por %p137, %p138
    %p140 = scmp.ne.s32.totalorder %s126, %s127
    %p141 = scmp.eq.s32.totalorder %s16, 1
    %p142 = por %p140, %p141
    %p144 = scmp.ne.s32.totalorder %s127, %s143
    %p145 = scmp.eq.s32.totalorder %s16, 0
    %p146 = por %p144, %p145
    %p147 = scmp.le.s32.totalorder 1, %s10
    %p148 = scmp.lt.s32.totalorder %s10, 3
    %p149 = pnand %p147, %p148
    %p150 = pneg %p149
    // Predicated region
    $region9: #{discriminator_forward.7} parent=5 // pred_check
      _
    $region10: #{discriminator_forward.7} parent=5 // pred_check_branch
      %152 = sbr.rel (%p149) target = $region12
    $region11: #{discriminator_forward.7} parent=5 // pred_region
      %s153 = ssub.s32 %s10, 1
      // Predicated region
      $region13: #{discriminator_forward.7} parent=11 // pred_check
        %p154 = pneg %p48
      $region14: #{discriminator_forward.7} parent=11 // pred_check_branch
        %156 = sbr.rel (%p154) target = $region16
      $region15: #{discriminator_forward.7} parent=11 // pred_region
        %s157 = smul.u32 16, %s20
        %p158 = scmp.lt.s32.totalorder %s157, 15
        %s159 = scalar_select %p158, %s157, 15
        %s160 = smul.addr %s159, 2
        %s161 = smul.addr %s160, 4
        %s162 = scalar_lea.vmem %s0, %s161
        %s163 = smul.u32 16, %s20
      $region16: #{discriminator_forward.7} parent=11 // pred_fallthru
        _
      // Predicated region
      $region17: #{discriminator_forward.7} parent=11 // pred_check
        %p164 = pneg %p69
      $region18: #{discriminator_forward.7} parent=11 // pred_check_branch
        %166 = sbr.rel (%p164) target = $region20
      $region19: #{discriminator_forward.7} parent=11 // pred_region
        _
      $region20: #{discriminator_forward.7} parent=11 // pred_fallthru
        _
      // Predicated region
      $region21: #{discriminator_forward.7} parent=11 // pred_check
        %p167 = pneg %p90
      $region22: #{discriminator_forward.7} parent=11 // pred_check_branch
        %169 = sbr.rel (%p167) target = $region24
      $region23: #{discriminator_forward.7} parent=11 // pred_region
        _
      $region24: #{discriminator_forward.7} parent=11 // pred_fallthru
        _
      // Predicated region
      $region25: #{discriminator_forward.7} parent=11 // pred_check
        %p170 = pneg %p111
      $region26: #{discriminator_forward.7} parent=11 // pred_check_branch
        %172 = sbr.rel (%p170) target = $region28
      $region27: #{discriminator_forward.7} parent=11 // pred_region
        _
      $region28: #{discriminator_forward.7} parent=11 // pred_fallthru
        _
    $region12: #{discriminator_forward.7} parent=5 // pred_fallthru
      _
    %p173 = scmp.lt.s32.totalorder %s10, 2
    // Predicated region
    $region29: #{discriminator_forward.7} parent=5 // pred_check
      %p174 = pneg %p173
    $region30: #{discriminator_forward.7} parent=5 // pred_check_branch
      %176 = sbr.rel (%p174) target = $region32
    $region31: #{discriminator_forward.7} parent=5 // pred_region
      _
    $region32: #{discriminator_forward.7} parent=5 // pred_fallthru
      _
    %p177 = scmp.le.s32.totalorder 1, %s10
    %p178 = scmp.lt.s32.totalorder %s10, 3
    %p179 = pnand %p177, %p178
    %p180 = pneg %p179
    // Predicated region
    $region33: #{discriminator_forward.7} parent=5 // pred_check
      _
    $region34: #{discriminator_forward.7} parent=5 // pred_check_branch
      %182 = sbr.rel (%p179) target = $region36
    $region35: #{discriminator_forward.7} parent=5 // pred_region
      %s183 = ssub.s32 %s10, 1
      %s184 = smul.u32 16, %s20
      %p185 = scmp.lt.s32.totalorder %s184, 15
      %s186 = scalar_select %p185, %s184, 15
      %s187 = smul.addr %s186, 2
      %s188 = smul.addr %s187, 4
      %s189 = scalar_lea.vmem %s0, %s188
      %p190 = pneg %p48
      %p191 = pneg %p45
      %p192 = pneg %p69
      %p193 = pneg %p66
      %p194 = pneg %p90
      %p195 = pneg %p87
      %p196 = pneg %p111
      %p197 = pneg %p108
      %p198 = pneg %p139
      %p199 = pneg %p136
      %s200 = smul.u32 %s19, %s20
      %s201 = smul.u32 16, %s200
      %p202 = scmp.lt.s32.totalorder %s201, 15
      %s203 = scalar_select %p202, %s201, 15
      %s204 = smul.addr %s203, 4
      %s205 = scalar_lea.vmem %s4, %s204
      %s206 = smul.u32 16, %s20
      %p207 = scmp.lt.s32.totalorder %s206, 15
      %s208 = scalar_select %p207, %s206, 15
      %s209 = smul.addr %s208, 2
      %s210 = smul.addr %s209, 4
      %s211 = scalar_lea.vmem %s0, %s210
      %s212 = smul.u32 16, %s20
      %s213 = smul.u32 %s19, %s20
      %s214 = smul.u32 16, %s213
      %p215 = scmp.lt.s32.totalorder %s214, 15
      %s216 = scalar_select %p215, %s214, 15
      %s217 = smul.addr %s216, 4
      %s218 = scalar_lea.vmem %s4, %s217
      %s219 = smul.u32 %s19, %s20
      %s220 = smul.u32 16, %s219
      %v222 = vld [vmem:[%s211] sm:$0xff]
      %v223 = vld [vmem:[%s211 + $0x8] sm:$0xff]
      %v224 = vld [vmem:[%s211 + $0x10] sm:$0xff]
      %v225 = vld [vmem:[%s211 + $0x18] sm:$0xff]
      %v226 = vld [vmem:[%s211 + $0x20] sm:$0xff]
      %v227 = vld [vmem:[%s211 + $0x28] sm:$0xff]
      %v228 = vld [vmem:[%s211 + $0x30] sm:$0xff]
      %v229 = vld [vmem:[%s211 + $0x38] sm:$0xff]
      %v230 = vld [vmem:[%s211 + $0x40] sm:$0xff]
      %v231 = vld [vmem:[%s211 + $0x48] sm:$0xff]
      %v232 = vld [vmem:[%s211 + $0x50] sm:$0xff]
      %v233 = vld [vmem:[%s211 + $0x58] sm:$0xff]
      %v234 = vld [vmem:[%s211 + $0x60] sm:$0xff]
      %v235 = vld [vmem:[%s211 + $0x68] sm:$0xff]
      %v236 = vld [vmem:[%s211 + $0x70] sm:$0xff]
      %v237 = vld [vmem:[%s211 + $0x78] sm:$0xff]
      %v238 = vld [vmem:[%s1] sm:$0xf]
      %v239 = vld [vmem:[%s1 + $0x4] sm:$0xf]
      %v240 = vld [vmem:[%s1 + $0x8] sm:$0xf]
      %v241 = vld [vmem:[%s1 + $0xc] sm:$0xf]
      %v242 = vld [vmem:[%s1 + $0x10] sm:$0xf]
      %v243 = vld [vmem:[%s1 + $0x14] sm:$0xf]
      %v244 = vld [vmem:[%s1 + $0x18] sm:$0xf]
      %v245 = vld [vmem:[%s1 + $0x1c] sm:$0xf]
      %v246 = vld [vmem:[%s1 + $0x20] sm:$0xf]
      %v247 = vld [vmem:[%s1 + $0x24] sm:$0xf]
      %v248 = vld [vmem:[%s1 + $0x28] sm:$0xf]
      %v249 = vld [vmem:[%s1 + $0x2c] sm:$0xf]
      %v250 = vld [vmem:[%s1 + $0x30] sm:$0xf]
      %v251 = vld [vmem:[%s1 + $0x34] sm:$0xf]
      %v252 = vld [vmem:[%s1 + $0x38] sm:$0xf]
      %v253 = vld [vmem:[%s1 + $0x3c] sm:$0xf]
      %v254 = vld [vmem:[%s1 + $0x40] sm:$0xf]
      %v255 = vld [vmem:[%s1 + $0x44] sm:$0xf]
      %v256 = vld [vmem:[%s1 + $0x48] sm:$0xf]
      %v257 = vld [vmem:[%s1 + $0x4c] sm:$0xf]
      %v258 = vld [vmem:[%s1 + $0x50] sm:$0xf]
      %v259 = vld [vmem:[%s1 + $0x54] sm:$0xf]
      %v260 = vld [vmem:[%s1 + $0x58] sm:$0xf]
      %v261 = vld [vmem:[%s1 + $0x5c] sm:$0xf]
      %v262 = vld [vmem:[%s1 + $0x60] sm:$0xf]
      %v263 = vld [vmem:[%s1 + $0x64] sm:$0xf]
      %v264 = vld [vmem:[%s1 + $0x68] sm:$0xf]
      %v265 = vld [vmem:[%s1 + $0x6c] sm:$0xf]
      %v266 = vld [vmem:[%s1 + $0x70] sm:$0xf]
      %v267 = vld [vmem:[%s1 + $0x74] sm:$0xf]
      %v268 = vld [vmem:[%s1 + $0x78] sm:$0xf]
      %v269 = vld [vmem:[%s1 + $0x7c] sm:$0xf]
      %v286 = vunpack.c.l.b16 %v222
      %v287 = vunpack.c.h.b16 %v222
      %v288 = vunpack.c.l.b16 %v223
      %v289 = vunpack.c.h.b16 %v223
      %v290 = vunpack.c.l.b16 %v224
      %v291 = vunpack.c.h.b16 %v224
      %v292 = vunpack.c.l.b16 %v225
      %v293 = vunpack.c.h.b16 %v225
      %v294 = vunpack.c.l.b16 %v226
      %v295 = vunpack.c.h.b16 %v226
      %v296 = vunpack.c.l.b16 %v227
      %v297 = vunpack.c.h.b16 %v227
      %v298 = vunpack.c.l.b16 %v228
      %v299 = vunpack.c.h.b16 %v228
      %v300 = vunpack.c.l.b16 %v229
      %v301 = vunpack.c.h.b16 %v229
      %v302 = vunpack.c.l.b16 %v230
      %v303 = vunpack.c.h.b16 %v230
      %v304 = vunpack.c.l.b16 %v231
      %v305 = vunpack.c.h.b16 %v231
      %v306 = vunpack.c.l.b16 %v232
      %v307 = vunpack.c.h.b16 %v232
      %v308 = vunpack.c.l.b16 %v233
      %v309 = vunpack.c.h.b16 %v233
      %v310 = vunpack.c.l.b16 %v234
      %v311 = vunpack.c.h.b16 %v234
      %v312 = vunpack.c.l.b16 %v235
      %v313 = vunpack.c.h.b16 %v235
      %v314 = vunpack.c.l.b16 %v236
      %v315 = vunpack.c.h.b16 %v236
      %v316 = vunpack.c.l.b16 %v237
      %v317 = vunpack.c.h.b16 %v237
      %v318 = vpack.c.b16 %v288, %v286
      %v319 = vpack.c.b16 %v289, %v287
      %v320 = vpack.c.b16 %v292, %v290
      %v321 = vpack.c.b16 %v293, %v291
      %v322 = vpack.c.b16 %v296, %v294
      %v323 = vpack.c.b16 %v297, %v295
      %v324 = vpack.c.b16 %v300, %v298
      %v325 = vpack.c.b16 %v301, %v299
      %v326 = vpack.c.b16 %v304, %v302
      %v327 = vpack.c.b16 %v305, %v303
      %v328 = vpack.c.b16 %v308, %v306
      %v329 = vpack.c.b16 %v309, %v307
      %v330 = vpack.c.b16 %v312, %v310
      %v331 = vpack.c.b16 %v313, %v311
      %v332 = vpack.c.b16 %v316, %v314
      %v333 = vpack.c.b16 %v317, %v315
      %v382 = vunpack.c.l.b16 %v238
      %v383 = vunpack.c.l.b16 %v239
      %v384 = vunpack.c.l.b16 %v240
      %v385 = vunpack.c.l.b16 %v241
      %v386 = vunpack.c.l.b16 %v242
      %v387 = vunpack.c.l.b16 %v243
      %v388 = vunpack.c.l.b16 %v244
      %v389 = vunpack.c.l.b16 %v245
      %v390 = vunpack.c.l.b16 %v246
      %v391 = vunpack.c.l.b16 %v247
      %v392 = vunpack.c.l.b16 %v248
      %v393 = vunpack.c.l.b16 %v249
      %v394 = vunpack.c.l.b16 %v250
      %v395 = vunpack.c.l.b16 %v251
      %v396 = vunpack.c.l.b16 %v252
      %v397 = vunpack.c.l.b16 %v253
      %v398 = vunpack.c.l.b16 %v254
      %v399 = vunpack.c.l.b16 %v255
      %v400 = vunpack.c.l.b16 %v256
      %v401 = vunpack.c.l.b16 %v257
      %v402 = vunpack.c.l.b16 %v258
      %v403 = vunpack.c.l.b16 %v259
      %v404 = vunpack.c.l.b16 %v260
      %v405 = vunpack.c.l.b16 %v261
      %v406 = vunpack.c.l.b16 %v262
      %v407 = vunpack.c.l.b16 %v263
      %v408 = vunpack.c.l.b16 %v264
      %v409 = vunpack.c.l.b16 %v265
      %v410 = vunpack.c.l.b16 %v266
      %v411 = vunpack.c.l.b16 %v267
      %v412 = vunpack.c.l.b16 %v268
      %v413 = vunpack.c.l.b16 %v269
      %v414 = vpack.c.b16 %v383, %v382
      %v415 = vpack.c.b16 %v385, %v384
      %v416 = vpack.c.b16 %v387, %v386
      %v417 = vpack.c.b16 %v389, %v388
      %v418 = vpack.c.b16 %v391, %v390
      %v419 = vpack.c.b16 %v393, %v392
      %v420 = vpack.c.b16 %v395, %v394
      %v421 = vpack.c.b16 %v397, %v396
      %v422 = vpack.c.b16 %v399, %v398
      %v423 = vpack.c.b16 %v401, %v400
      %v424 = vpack.c.b16 %v403, %v402
      %v425 = vpack.c.b16 %v405, %v404
      %v426 = vpack.c.b16 %v407, %v406
      %v427 = vpack.c.b16 %v409, %v408
      %v428 = vpack.c.b16 %v411, %v410
      %v429 = vpack.c.b16 %v413, %v412
      %446 = vmatprep.subr.bf16.mxu0 0
      %447 = vmatpush1.bf16.msra.mxu0 %v414
      %448 = vmatprep.subr.bf16.mxu0 0
      %449 = vmatpush1.bf16.msra.mxu0 %v415
      %450 = vmatprep.subr.bf16.mxu0 0
      %451 = vmatpush1.bf16.msra.mxu0 %v416
      %452 = vmatprep.subr.bf16.mxu0 0
      %453 = vmatpush1.bf16.msra.mxu0 %v417
      %454 = vmatprep.subr.bf16.mxu0 0
      %455 = vmatpush1.bf16.msra.mxu0 %v418
      %456 = vmatprep.subr.bf16.mxu0 0
      %457 = vmatpush1.bf16.msra.mxu0 %v419
      %458 = vmatprep.subr.bf16.mxu0 0
      %459 = vmatpush1.bf16.msra.mxu0 %v420
      %460 = vmatprep.subr.bf16.mxu0 0
      %461 = vmatpush1.bf16.msra.mxu0 %v421
      %462 = vmatprep.subr.bf16.mxu0 0
      %463 = vmatpush1.bf16.msra.mxu0 %v422
      %464 = vmatprep.subr.bf16.mxu0 0
      %465 = vmatpush1.bf16.msra.mxu0 %v423
      %466 = vmatprep.subr.bf16.mxu0 0
      %467 = vmatpush1.bf16.msra.mxu0 %v424
      %468 = vmatprep.subr.bf16.mxu0 0
      %469 = vmatpush1.bf16.msra.mxu0 %v425
      %470 = vmatprep.subr.bf16.mxu0 0
      %471 = vmatpush1.bf16.msra.mxu0 %v426
      %472 = vmatprep.subr.bf16.mxu0 0
      %473 = vmatpush1.bf16.msra.mxu0 %v427
      %474 = vmatprep.subr.bf16.mxu0 0
      %475 = vmatpush1.bf16.msra.mxu0 %v428
      %476 = vmatprep.subr.bf16.mxu0 0
      %477 = vmatpush1.bf16.msra.mxu0 %v429
      %478 = vmatprep.mubr.bf16.mxu0 %v319
      %479 = vmatmul.mubr.bf16.gmra.mrb[0].mxu0 %v318
      %v480 = vpop.f32.mrb[0].mxu0
      %v481 = vadd.f32 0.0, %v480
      %v482 = vpop.f32.mrb[0].mxu0
      %v483 = vpop.f32.mrb[0].mxu0
      %v484 = vadd.f32 0.0, %v483
      %v485 = vpop.f32.mrb[0].mxu0
      %486 = vmatprep.mubr.bf16.mxu0 %v321
      %487 = vmatmul.mubr.bf16.gmra.mrb[0].mxu0 %v320
      %v488 = vpop.f32.mrb[0].mxu0
      %v489 = vadd.f32 0.0, %v488
      %v490 = vpop.f32.mrb[0].mxu0
      %v491 = vpop.f32.mrb[0].mxu0
      %v492 = vadd.f32 0.0, %v491
      %v493 = vpop.f32.mrb[0].mxu0
      %494 = vmatprep.mubr.bf16.mxu0 %v323
      %495 = vmatmul.mubr.bf16.gmra.mrb[0].mxu0 %v322
      %v496 = vpop.f32.mrb[0].mxu0
      %v497 = vadd.f32 0.0, %v496
      %v498 = vpop.f32.mrb[0].mxu0
      %v499 = vpop.f32.mrb[0].mxu0
      %v500 = vadd.f32 0.0, %v499
      %v501 = vpop.f32.mrb[0].mxu0
      %502 = vmatprep.mubr.bf16.mxu0 %v325
      %503 = vmatmul.mubr.bf16.gmra.mrb[0].mxu0 %v324
      %v504 = vpop.f32.mrb[0].mxu0
      %v505 = vadd.f32 0.0, %v504
      %v506 = vpop.f32.mrb[0].mxu0
      %v507 = vpop.f32.mrb[0].mxu0
      %v508 = vadd.f32 0.0, %v507
      %v509 = vpop.f32.mrb[0].mxu0
      %510 = vmatprep.mubr.bf16.mxu0 %v327
      %511 = vmatmul.mubr.bf16.gmra.mrb[0].mxu0 %v326
      %v512 = vpop.f32.mrb[0].mxu0
      %v513 = vadd.f32 0.0, %v512
      %v514 = vpop.f32.mrb[0].mxu0
      %v515 = vpop.f32.mrb[0].mxu0
      %v516 = vadd.f32 0.0, %v515
      %v517 = vpop.f32.mrb[0].mxu0
      %518 = vmatprep.mubr.bf16.mxu0 %v329
      %519 = vmatmul.mubr.bf16.gmra.mrb[0].mxu0 %v328
      %v520 = vpop.f32.mrb[0].mxu0
      %v521 = vadd.f32 0.0, %v520
      %v522 = vpop.f32.mrb[0].mxu0
      %v523 = vpop.f32.mrb[0].mxu0
      %v524 = vadd.f32 0.0, %v523
      %v525 = vpop.f32.mrb[0].mxu0
      %526 = vmatprep.mubr.bf16.mxu0 %v331
      %527 = vmatmul.mubr.bf16.gmra.mrb[0].mxu0 %v330
      %v528 = vpop.f32.mrb[0].mxu0
      %v529 = vadd.f32 0.0, %v528
      %v530 = vpop.f32.mrb[0].mxu0
      %v531 = vpop.f32.mrb[0].mxu0
      %v532 = vadd.f32 0.0, %v531
      %v533 = vpop.f32.mrb[0].mxu0
      %534 = vmatprep.mubr.bf16.mxu0 %v333
      %535 = vmatmul.mubr.bf16.gmra.mrb[0].mxu0 %v332
      %v536 = vpop.f32.mrb[0].mxu0
      %v537 = vadd.f32 0.0, %v536
      %v538 = vpop.f32.mrb[0].mxu0
      %v539 = vpop.f32.mrb[0].mxu0
      %v540 = vadd.f32 0.0, %v539
      %v541 = vpop.f32.mrb[0].mxu0
      %542 = vdwg.mxu0
      %p543 = scmp.eq.s32.totalorder %s19, 0
      %p544 = scmp.eq.s32.totalorder %s20, 0
      %p545 = pnand %p543, %p544
      %p546 = pneg %p545
      // Predicated region
      $region37: #{discriminator_forward.7} parent=35 // pred_check
        _
      $region38: #{discriminator_forward.7} parent=35 // pred_check_branch
        %548 = sbr.rel (%p545) target = $region40
      $region39: #{discriminator_forward.7} parent=35 // pred_region
        %vm549 = vcmask 253952
        %550 = vst.msk [vmem:[#allocation2] sm:$0x1] %vm549, 0.0
        %551 = vst.msk [vmem:[#allocation3] sm:$0x1] %vm549, 0.0
      $region40: #{discriminator_forward.7} parent=35 // pred_fallthru
        _
      // Predicated region
      $region41: #{discriminator_forward.7} parent=35 // pred_check
        %p552 = pneg %p543
      $region42: #{discriminator_forward.7} parent=35 // pred_check_branch
        %554 = sbr.rel (%p552) target = $region44
      $region43: #{discriminator_forward.7} parent=35 // pred_region
        %v555 = vld [vmem:[#allocation2] sm:$0x1]
        %vm556 = vcmask 261120
        %v557 = vsel %vm556, %v481, 0.0
        %v558 = vsel %vm556, %v484, 0.0
        %v559 = vadd.f32 %v557, %v558
        %v560 = vsel %vm556, %v489, 0.0
        %v561 = vadd.f32 %v559, %v560
        %v562 = vsel %vm556, %v492, 0.0
        %v563 = vadd.f32 %v561, %v562
        %v564 = vsel %vm556, %v497, 0.0
        %v565 = vadd.f32 %v563, %v564
        %v566 = vsel %vm556, %v500, 0.0
        %v567 = vadd.f32 %v565, %v566
        %v568 = vsel %vm556, %v505, 0.0
        %v569 = vadd.f32 %v567, %v568
        %v570 = vsel %vm556, %v508, 0.0
        %v571 = vadd.f32 %v569, %v570
        %v572 = vsel %vm556, %v513, 0.0
        %v573 = vadd.f32 %v571, %v572
        %v574 = vsel %vm556, %v516, 0.0
        %v575 = vadd.f32 %v573, %v574
        %v576 = vsel %vm556, %v521, 0.0
        %v577 = vadd.f32 %v575, %v576
        %v578 = vsel %vm556, %v524, 0.0
        %v579 = vadd.f32 %v577, %v578
        %v580 = vsel %vm556, %v529, 0.0
        %v581 = vadd.f32 %v579, %v580
        %v582 = vsel %vm556, %v532, 0.0
        %v583 = vadd.f32 %v581, %v582
        %v584 = vsel %vm556, %v537, 0.0
        %v585 = vadd.f32 %v583, %v584
        %v586 = vsel %vm556, %v540, 0.0
        %v587 = vadd.f32 %v585, %v586
        %v588 = vrot.slane %v587, 4
        %v589 = vadd.f32 %v587, %v588
        %v590 = vrot.slane %v589, 2
        %v591 = vadd.f32 %v589, %v590
        %v592 = vrot.slane %v591, 1
        %v593 = vadd.f32 %v591, %v592
        %v594 = vadd.f32 %v555, %v593
        %vm595 = vcmask 253952
        %596 = vst.msk [vmem:[#allocation2] sm:$0x1] %vm595, %v594
        %v597 = vld [vmem:[#allocation3] sm:$0x1]
        %v598 = vmul.f32 %v481, %v481
        %v599 = vmul.f32 %v484, %v484
        %v600 = vmul.f32 %v489, %v489
        %v601 = vmul.f32 %v492, %v492
        %v602 = vmul.f32 %v497, %v497
        %v603 = vmul.f32 %v500, %v500
        %v604 = vmul.f32 %v505, %v505
        %v605 = vmul.f32 %v508, %v508
        %v606 = vmul.f32 %v513, %v513
        %v607 = vmul.f32 %v516, %v516
        %v608 = vmul.f32 %v521, %v521
        %v609 = vmul.f32 %v524, %v524
        %v610 = vmul.f32 %v529, %v529
        %v611 = vmul.f32 %v532, %v532
        %v612 = vmul.f32 %v537, %v537
        %v613 = vmul.f32 %v540, %v540
        %v614 = vsel %vm556, %v598, 0.0
        %v615 = vsel %vm556, %v599, 0.0
        %v616 = vadd.f32 %v614, %v615
        %v617 = vsel %vm556, %v600, 0.0
        %v618 = vadd.f32 %v616, %v617
        %v619 = vsel %vm556, %v601, 0.0
        %v620 = vadd.f32 %v618, %v619
        %v621 = vsel %vm556, %v602, 0.0
        %v622 = vadd.f32 %v620, %v621
        %v623 = vsel %vm556, %v603, 0.0
        %v624 = vadd.f32 %v622, %v623
        %v625 = vsel %vm556, %v604, 0.0
        %v626 = vadd.f32 %v624, %v625
        %v627 = vsel %vm556, %v605, 0.0
        %v628 = vadd.f32 %v626, %v627
        %v629 = vsel %vm556, %v606, 0.0
        %v630 = vadd.f32 %v628, %v629
        %v631 = vsel %vm556, %v607, 0.0
        %v632 = vadd.f32 %v630, %v631
        %v633 = vsel %vm556, %v608, 0.0
        %v634 = vadd.f32 %v632, %v633
        %v635 = vsel %vm556, %v609, 0.0
        %v636 = vadd.f32 %v634, %v635
        %v637 = vsel %vm556, %v610, 0.0
        %v638 = vadd.f32 %v636, %v637
        %v639 = vsel %vm556, %v611, 0.0
        %v640 = vadd.f32 %v638, %v639
        %v641 = vsel %vm556, %v612, 0.0
        %v642 = vadd.f32 %v640, %v641
        %v643 = vsel %vm556, %v613, 0.0
        %v644 = vadd.f32 %v642, %v643
        %v645 = vrot.slane %v644, 4
        %v646 = vadd.f32 %v644, %v645
        %v647 = vrot.slane %v646, 2
        %v648 = vadd.f32 %v646, %v647
        %v649 = vrot.slane %v648, 1
        %v650 = vadd.f32 %v648, %v649
        %v651 = vadd.f32 %v597, %v650
        %652 = vst.msk [vmem:[#allocation3] sm:$0x1] %vm595, %v651
      $region44: #{discriminator_forward.7} parent=35 // pred_fallthru
        _
      %p653 = scmp.eq.s32.totalorder %s19, 1
      // Predicated region
      $region45: #{discriminator_forward.7} parent=35 // pred_check
        %p654 = pneg %p653
      $region46: #{discriminator_forward.7} parent=35 // pred_check_branch
        %656 = sbr.rel (%p654) target = $region48
      $region47: #{discriminator_forward.7} parent=35 // pred_region
        %v657 = vld [vmem:[#allocation2] sm:$0x1]
        %v658 = vmul.f32 %v657, 0.0078125
        %v659 = vld [vmem:[#allocation3] sm:$0x1]
        %v660 = vmul.f32 %v659, 0.0078125
        %v661 = vmul.f32 %v658, %v658
        %v662 = vsub.f32 %v660, %v661
        %v664 = vlaneseq
        %v665 = vshrl.u32 %v664, 7
        %v666 = vsub.s32 0, %v665
        %v667 = vrot.slane %v658, %v666
        %v669 = vsub.f32 %v481, %v667
        %v670 = vsub.f32 %v484, %v667
        %v671 = vsub.f32 %v489, %v667
        %v672 = vsub.f32 %v492, %v667
        %v673 = vsub.f32 %v497, %v667
        %v674 = vsub.f32 %v500, %v667
        %v675 = vsub.f32 %v505, %v667
        %v676 = vsub.f32 %v508, %v667
        %v677 = vsub.f32 %v513, %v667
        %v678 = vsub.f32 %v516, %v667
        %v679 = vsub.f32 %v521, %v667
        %v680 = vsub.f32 %v524, %v667
        %v681 = vsub.f32 %v529, %v667
        %v682 = vsub.f32 %v532, %v667
        %v683 = vsub.f32 %v537, %v667
        %v684 = vsub.f32 %v540, %v667
        %v685 = vadd.f32 %v662, 1e-05
        %v686 = vrsqrt.pop %v685
        %v688 = vlaneseq
        %v689 = vshrl.u32 %v688, 7
        %v690 = vsub.s32 0, %v689
        %v691 = vrot.slane %v686, %v690
        %v693 = vmul.f32 %v669, %v691
        %v694 = vmul.f32 %v670, %v691
        %v695 = vmul.f32 %v671, %v691
        %v696 = vmul.f32 %v672, %v691
        %v697 = vmul.f32 %v673, %v691
        %v698 = vmul.f32 %v674, %v691
        %v699 = vmul.f32 %v675, %v691
        %v700 = vmul.f32 %v676, %v691
        %v701 = vmul.f32 %v677, %v691
        %v702 = vmul.f32 %v678, %v691
        %v703 = vmul.f32 %v679, %v691
        %v704 = vmul.f32 %v680, %v691
        %v705 = vmul.f32 %v681, %v691
        %v706 = vmul.f32 %v682, %v691
        %v707 = vmul.f32 %v683, %v691
        %v708 = vmul.f32 %v684, %v691
        %v709 = vld [vmem:[%s2] sm:$0x1]
        %v711 = vlaneseq
        %v712 = vshrl.u32 %v711, 7
        %v713 = vsub.s32 0, %v712
        %v714 = vrot.slane %v709, %v713
        %v716 = vmul.f32 %v693, %v714
        %v717 = vmul.f32 %v694, %v714
        %v718 = vmul.f32 %v695, %v714
        %v719 = vmul.f32 %v696, %v714
        %v720 = vmul.f32 %v697, %v714
        %v721 = vmul.f32 %v698, %v714
        %v722 = vmul.f32 %v699, %v714
        %v723 = vmul.f32 %v700, %v714
        %v724 = vmul.f32 %v701, %v714
        %v725 = vmul.f32 %v702, %v714
        %v726 = vmul.f32 %v703, %v714
        %v727 = vmul.f32 %v704, %v714
        %v728 = vmul.f32 %v705, %v714
        %v729 = vmul.f32 %v706, %v714
        %v730 = vmul.f32 %v707, %v714
        %v731 = vmul.f32 %v708, %v714
        %v732 = vld [vmem:[%s3] sm:$0x1]
        %v734 = vlaneseq
        %v735 = vshrl.u32 %v734, 7
        %v736 = vsub.s32 0, %v735
        %v737 = vrot.slane %v732, %v736
        %v739 = vadd.f32 %v716, %v737
        %v740 = vadd.f32 %v717, %v737
        %v741 = vadd.f32 %v718, %v737
        %v742 = vadd.f32 %v719, %v737
        %v743 = vadd.f32 %v720, %v737
        %v744 = vadd.f32 %v721, %v737
        %v745 = vadd.f32 %v722, %v737
        %v746 = vadd.f32 %v723, %v737
        %v747 = vadd.f32 %v724, %v737
        %v748 = vadd.f32 %v725, %v737
        %v749 = vadd.f32 %v726, %v737
        %v750 = vadd.f32 %v727, %v737
        %v751 = vadd.f32 %v728, %v737
        %v752 = vadd.f32 %v729, %v737
        %v753 = vadd.f32 %v730, %v737
        %v754 = vadd.f32 %v731, %v737
        %vm755 = vcmp.gt.f32.partialorder %v739, 0.0
        %vm756 = vcmp.gt.f32.partialorder %v740, 0.0
        %vm757 = vcmp.gt.f32.partialorder %v741, 0.0
        %vm758 = vcmp.gt.f32.partialorder %v742, 0.0
        %vm759 = vcmp.gt.f32.partialorder %v743, 0.0
        %vm760 = vcmp.gt.f32.partialorder %v744, 0.0
        %vm761 = vcmp.gt.f32.partialorder %v745, 0.0
        %vm762 = vcmp.gt.f32.partialorder %v746, 0.0
        %vm763 = vcmp.gt.f32.partialorder %v747, 0.0
        %vm764 = vcmp.gt.f32.partialorder %v748, 0.0
        %vm765 = vcmp.gt.f32.partialorder %v749, 0.0
        %vm766 = vcmp.gt.f32.partialorder %v750, 0.0
        %vm767 = vcmp.gt.f32.partialorder %v751, 0.0
        %vm768 = vcmp.gt.f32.partialorder %v752, 0.0
        %vm769 = vcmp.gt.f32.partialorder %v753, 0.0
        %vm770 = vcmp.gt.f32.partialorder %v754, 0.0
        %v771 = vmul.f32 %v739, 0.2
        %v772 = vmul.f32 %v740, 0.2
        %v773 = vmul.f32 %v741, 0.2
        %v774 = vmul.f32 %v742, 0.2
        %v775 = vmul.f32 %v743, 0.2
        %v776 = vmul.f32 %v744, 0.2
        %v777 = vmul.f32 %v745, 0.2
        %v778 = vmul.f32 %v746, 0.2
        %v779 = vmul.f32 %v747, 0.2
        %v780 = vmul.f32 %v748, 0.2
        %v781 = vmul.f32 %v749, 0.2
        %v782 = vmul.f32 %v750, 0.2
        %v783 = vmul.f32 %v751, 0.2
        %v784 = vmul.f32 %v752, 0.2
        %v785 = vmul.f32 %v753, 0.2
        %v786 = vmul.f32 %v754, 0.2
        %v787 = vsel %vm755, %v739, %v771
        %v788 = vsel %vm756, %v740, %v772
        %v789 = vsel %vm757, %v741, %v773
        %v790 = vsel %vm758, %v742, %v774
        %v791 = vsel %vm759, %v743, %v775
        %v792 = vsel %vm760, %v744, %v776
        %v793 = vsel %vm761, %v745, %v777
        %v794 = vsel %vm762, %v746, %v778
        %v795 = vsel %vm763, %v747, %v779
        %v796 = vsel %vm764, %v748, %v780
        %v797 = vsel %vm765, %v749, %v781
        %v798 = vsel %vm766, %v750, %v782
        %v799 = vsel %vm767, %v751, %v783
        %v800 = vsel %vm768, %v752, %v784
        %v801 = vsel %vm769, %v753, %v785
        %v802 = vsel %vm770, %v754, %v786
        %v803 = vpack.c.bf16 %v788, %v787
        %v804 = vpack.c.bf16 %v790, %v789
        %v805 = vpack.c.bf16 %v792, %v791
        %v806 = vpack.c.bf16 %v794, %v793
        %v807 = vpack.c.bf16 %v796, %v795
        %v808 = vpack.c.bf16 %v798, %v797
        %v809 = vpack.c.bf16 %v800, %v799
        %v810 = vpack.c.bf16 %v802, %v801
        %v819 = vunpack.c.l.b16 %v803
        %v820 = vunpack.c.h.b16 %v803
        %v821 = vunpack.c.l.b16 %v804
        %v822 = vunpack.c.h.b16 %v804
        %v823 = vunpack.c.l.b16 %v805
        %v824 = vunpack.c.h.b16 %v805
        %v825 = vunpack.c.l.b16 %v806
        %v826 = vunpack.c.h.b16 %v806
        %v827 = vunpack.c.l.b16 %v807
        %v828 = vunpack.c.h.b16 %v807
        %v829 = vunpack.c.l.b16 %v808
        %v830 = vunpack.c.h.b16 %v808
        %v831 = vunpack.c.l.b16 %v809
        %v832 = vunpack.c.h.b16 %v809
        %v833 = vunpack.c.l.b16 %v810
        %v834 = vunpack.c.h.b16 %v810
        %v835 = vpack.c.b16 %v819, %v819
        %v836 = vpack.c.b16 %v820, %v820
        %v837 = vpack.c.b16 %v821, %v821
        %v838 = vpack.c.b16 %v822, %v822
        %v839 = vpack.c.b16 %v823, %v823
        %v840 = vpack.c.b16 %v824, %v824
        %v841 = vpack.c.b16 %v825, %v825
        %v842 = vpack.c.b16 %v826, %v826
        %v843 = vpack.c.b16 %v827, %v827
        %v844 = vpack.c.b16 %v828, %v828
        %v845 = vpack.c.b16 %v829, %v829
        %v846 = vpack.c.b16 %v830, %v830
        %v847 = vpack.c.b16 %v831, %v831
        %v848 = vpack.c.b16 %v832, %v832
        %v849 = vpack.c.b16 %v833, %v833
        %v850 = vpack.c.b16 %v834, %v834
        %vm867 = vcmask 257024
        %868 = vst.msk [vmem:[%s218] sm:$0xf] %vm867, %v835
        %869 = vst.msk [vmem:[%s218 + $0x4] sm:$0xf] %vm867, %v836
        %870 = vst.msk [vmem:[%s218 + $0x8] sm:$0xf] %vm867, %v837
        %871 = vst.msk [vmem:[%s218 + $0xc] sm:$0xf] %vm867, %v838
        %872 = vst.msk [vmem:[%s218 + $0x10] sm:$0xf] %vm867, %v839
        %873 = vst.msk [vmem:[%s218 + $0x14] sm:$0xf] %vm867, %v840
        %874 = vst.msk [vmem:[%s218 + $0x18] sm:$0xf] %vm867, %v841
        %875 = vst.msk [vmem:[%s218 + $0x1c] sm:$0xf] %vm867, %v842
        %876 = vst.msk [vmem:[%s218 + $0x20] sm:$0xf] %vm867, %v843
        %877 = vst.msk [vmem:[%s218 + $0x24] sm:$0xf] %vm867, %v844
        %878 = vst.msk [vmem:[%s218 + $0x28] sm:$0xf] %vm867, %v845
        %879 = vst.msk [vmem:[%s218 + $0x2c] sm:$0xf] %vm867, %v846
        %880 = vst.msk [vmem:[%s218 + $0x30] sm:$0xf] %vm867, %v847
        %881 = vst.msk [vmem:[%s218 + $0x34] sm:$0xf] %vm867, %v848
        %882 = vst.msk [vmem:[%s218 + $0x38] sm:$0xf] %vm867, %v849
        %883 = vst.msk [vmem:[%s218 + $0x3c] sm:$0xf] %vm867, %v850
      $region48: #{discriminator_forward.7} parent=35 // pred_fallthru
        _
      %s884 = smul.u32 %s19, %s20
      %s885 = smul.u32 16, %s884
      %p886 = scmp.lt.s32.totalorder %s885, 15
      %s887 = scalar_select %p886, %s885, 15
      %s888 = smul.addr %s887, 4
      %s889 = scalar_lea.vmem %s4, %s888
      // Predicated region
      $region49: #{discriminator_forward.7} parent=35 // pred_check
        %p890 = pneg %p136
      $region50: #{discriminator_forward.7} parent=35 // pred_check_branch
        %892 = sbr.rel (%p890) target = $region52
      $region51: #{discriminator_forward.7} parent=35 // pred_region
        %s893 = smul.u32 %s19, %s20
        %s894 = smul.u32 16, %s893
      $region52: #{discriminator_forward.7} parent=35 // pred_fallthru
        _
    $region36: #{discriminator_forward.7} parent=5 // pred_fallthru
      _
    %p895 = scmp.le.s32.totalorder 2, %s10
    // Predicated region
    $region53: #{discriminator_forward.7} parent=5 // pred_check
      %p896 = pneg %p895
    $region54: #{discriminator_forward.7} parent=5 // pred_check_branch
      %898 = sbr.rel (%p896) target = $region56
    $region55: #{discriminator_forward.7} parent=5 // pred_region
      %s899 = ssub.s32 %s10, 2
      // Predicated region
      $region57: #{discriminator_forward.7} parent=55 // pred_check
        %p900 = pneg %p142
      $region58: #{discriminator_forward.7} parent=55 // pred_check_branch
        %902 = sbr.rel (%p900) target = $region60
      $region59: #{discriminator_forward.7} parent=55 // pred_region
        %s903 = smul.u32 %s21, %s22
        %s904 = smul.u32 16, %s903
        %p905 = scmp.lt.s32.totalorder %s904, 15
        %s906 = scalar_select %p905, %s904, 15
        %s907 = smul.addr %s906, 4
        %s908 = scalar_lea.vmem %s4, %s907
      $region60: #{discriminator_forward.7} parent=55 // pred_fallthru
        _
    $region56: #{discriminator_forward.7} parent=5 // pred_fallthru
      _
  $region6: #{discriminator_forward.7} parent=0 // loop_footer
    %s14 = sadd.s32 1, %s10
  $region7: #{discriminator_forward.7} parent=0 // loop_footer_branch
    %9 = sbr.rel target = $region3
  $region8: #{discriminator_forward.7} parent=0 // loop_exit
    _

// kernel: discriminator_forward.8
$region0: #{discriminator_forward.8}
  #allocation0 [shape = 'u32[]', space=smem, size = 0x4, offset = 0x4, fixed_abs, tag = 'smem constant byte address 0x4 - core index']
  #allocation1 [shape = 'u32[144,128]{1,0:T(1,128)}', space=vmem, size = 0x12000, scoped, tag = 'internal scratch']
  #allocation2 [shape = 'f32[1,64]{1,0:T(1,128)}', space=vmem, size = 0x200, scoped, tag = 'scratch operand']
  #allocation3 [shape = 'f32[1,64]{1,0:T(1,128)}', space=vmem, size = 0x200, scoped, tag = 'scratch operand']
  %s0 = inlined_call_operand.vmem [shape: bf16[32,512], index: 0, kind: input, shape index: {}]
  %s1 = inlined_call_operand.vmem [shape: bf16[512,64], index: 1, kind: input, shape index: {}]
  %s2 = inlined_call_operand.vmem [shape: f32[1,64], index: 2, kind: input, shape index: {}]
  %s3 = inlined_call_operand.vmem [shape: f32[1,64], index: 3, kind: input, shape index: {}]
  %s4 = inlined_call_operand.vmem [shape: bf16[32,64], index: 4, kind: output, shape index: {}]
  %s5 = sld [smem:[#allocation0]]
  $region61: #{discriminator_forward.8} parent=0
    _
  %s7 = ssub.s32 1, %s5
  %s8 = scalar_select 0, %s7, %s5
  loop: start=0, step=1, limit=4
  $region2: #{discriminator_forward.8} parent=0 // loop_pre_header
    _
  $region3: #{discriminator_forward.8} parent=0 // loop_header
    %s10 = sphi 0, %s14
    %p11 = scmp.ge.s32.totalorder %s10, 4
    %s17 = sphi 0, %s29
    %s18 = sphi 0, %s25
    %s19 = sphi 0, %s17
    %s20 = sphi 0, %s18
    %s21 = sphi 0, %s19
    %s22 = sphi 0, %s20
    %s32 = sphi 0, %s34
    %s35 = sphi 0, %s32
    %s36 = sphi 0, %s35
    %s52 = sphi 0, %s36
    %s56 = sphi 0, %s56
    %s58 = sphi 0, %s56
    %s59 = sphi 0, %s58
    %s73 = sphi 0, %s59
    %s77 = sphi 0, %s77
    %s79 = sphi 0, %s77
    %s80 = sphi 0, %s79
    %s94 = sphi 0, %s80
    %s98 = sphi 0, %s98
    %s100 = sphi 0, %s98
    %s101 = sphi 0, %s100
    %s115 = sphi 0, %s101
    %s123 = sphi 0, %s125
    %s126 = sphi 0, %s123
    %s127 = sphi 0, %s126
    %s143 = sphi 0, %s127
  $region4: #{discriminator_forward.8} parent=0 // loop_header_branch
    %13 = sbr.rel (%p11) target = $region8
  $region5: #{discriminator_forward.8} parent=0 // loop_body
    %s15 = ssub.s32 %s10, 1
    %s16 = ssub.s32 %s10, 2
    %s23 = sadd.s32 1, %s18
    %p24 = scmp.ge.s32.totalorder %s23, 1
    %s25 = scalar_select %p24, 0, %s23
    %s26 = sadd.s32 1, %s17
    %s27 = scalar_select %p24, %s26, %s17
    %p28 = scmp.ge.s32.totalorder %s27, 2
    %s29 = scalar_select %p28, 0, %s27
    %s30 = ssub.s32 %s18, %s25
    %p31 = scmp.eq.s32.totalorder %s30, 0
    %s33 = sadd.s32 %s32, 1
    %s34 = scalar_select %p31, %s32, %s33
    %p37 = pneg %p31
    %p38 = scmp.eq.s32.totalorder %s10, 1
    %p39 = por %p37, %p38
    %p40 = scmp.ne.s32.totalorder %s32, %s35
    %p41 = scmp.eq.s32.totalorder %s10, 0
    %p42 = por %p40, %p41
    %p43 = scmp.ne.s32.totalorder %s32, %s35
    %p44 = scmp.eq.s32.totalorder %s15, 1
    %p45 = por %p43, %p44
    %p46 = scmp.ne.s32.totalorder %s35, %s36
    %p47 = scmp.eq.s32.totalorder %s15, 0
    %p48 = por %p46, %p47
    %p49 = scmp.ne.s32.totalorder %s35, %s36
    %p50 = scmp.eq.s32.totalorder %s16, 1
    %p51 = por %p49, %p50
    %p53 = scmp.ne.s32.totalorder %s36, %s52
    %p54 = scmp.eq.s32.totalorder %s16, 0
    %p55 = por %p53, %p54
    %s57 = sadd.s32 %s56, 1
    %p60 = scmp.eq.s32.totalorder %s10, 1
    %p61 = scmp.ne.s32.totalorder %s56, %s58
    %p62 = scmp.eq.s32.totalorder %s10, 0
    %p63 = por %p61, %p62
    %p64 = scmp.ne.s32.totalorder %s56, %s58
    %p65 = scmp.eq.s32.totalorder %s15, 1
    %p66 = por %p64, %p65
    %p67 = scmp.ne.s32.totalorder %s58, %s59
    %p68 = scmp.eq.s32.totalorder %s15, 0
    %p69 = por %p67, %p68
    %p70 = scmp.ne.s32.totalorder %s58, %s59
    %p71 = scmp.eq.s32.totalorder %s16, 1
    %p72 = por %p70, %p71
    %p74 = scmp.ne.s32.totalorder %s59, %s73
    %p75 = scmp.eq.s32.totalorder %s16, 0
    %p76 = por %p74, %p75
    %s78 = sadd.s32 %s77, 1
    %p81 = scmp.eq.s32.totalorder %s10, 1
    %p82 = scmp.ne.s32.totalorder %s77, %s79
    %p83 = scmp.eq.s32.totalorder %s10, 0
    %p84 = por %p82, %p83
    %p85 = scmp.ne.s32.totalorder %s77, %s79
    %p86 = scmp.eq.s32.totalorder %s15, 1
    %p87 = por %p85, %p86
    %p88 = scmp.ne.s32.totalorder %s79, %s80
    %p89 = scmp.eq.s32.totalorder %s15, 0
    %p90 = por %p88, %p89
    %p91 = scmp.ne.s32.totalorder %s79, %s80
    %p92 = scmp.eq.s32.totalorder %s16, 1
    %p93 = por %p91, %p92
    %p95 = scmp.ne.s32.totalorder %s80, %s94
    %p96 = scmp.eq.s32.totalorder %s16, 0
    %p97 = por %p95, %p96
    %s99 = sadd.s32 %s98, 1
    %p102 = scmp.eq.s32.totalorder %s10, 1
    %p103 = scmp.ne.s32.totalorder %s98, %s100
    %p104 = scmp.eq.s32.totalorder %s10, 0
    %p105 = por %p103, %p104
    %p106 = scmp.ne.s32.totalorder %s98, %s100
    %p107 = scmp.eq.s32.totalorder %s15, 1
    %p108 = por %p106, %p107
    %p109 = scmp.ne.s32.totalorder %s100, %s101
    %p110 = scmp.eq.s32.totalorder %s15, 0
    %p111 = por %p109, %p110
    %p112 = scmp.ne.s32.totalorder %s100, %s101
    %p113 = scmp.eq.s32.totalorder %s16, 1
    %p114 = por %p112, %p113
    %p116 = scmp.ne.s32.totalorder %s101, %s115
    %p117 = scmp.eq.s32.totalorder %s16, 0
    %p118 = por %p116, %p117
    %s119 = smul.u32 %s17, %s18
    %s120 = smul.u32 %s29, %s25
    %s121 = ssub.s32 %s119, %s120
    %p122 = scmp.eq.s32.totalorder %s121, 0
    %s124 = sadd.s32 %s123, 1
    %s125 = scalar_select %p122, %s123, %s124
    %p128 = pneg %p122
    %p129 = scmp.eq.s32.totalorder %s10, 1
    %p130 = por %p128, %p129
    %p131 = scmp.ne.s32.totalorder %s123, %s126
    %p132 = scmp.eq.s32.totalorder %s10, 0
    %p133 = por %p131, %p132
    %p134 = scmp.ne.s32.totalorder %s123, %s126
    %p135 = scmp.eq.s32.totalorder %s15, 1
    %p136 = por %p134, %p135
    %p137 = scmp.ne.s32.totalorder %s126, %s127
    %p138 = scmp.eq.s32.totalorder %s15, 0
    %p139 = por %p137, %p138
    %p140 = scmp.ne.s32.totalorder %s126, %s127
    %p141 = scmp.eq.s32.totalorder %s16, 1
    %p142 = por %p140, %p141
    %p144 = scmp.ne.s32.totalorder %s127, %s143
    %p145 = scmp.eq.s32.totalorder %s16, 0
    %p146 = por %p144, %p145
    %p147 = scmp.le.s32.totalorder 1, %s10
    %p148 = scmp.lt.s32.totalorder %s10, 3
    %p149 = pnand %p147, %p148
    %p150 = pneg %p149
    // Predicated region
    $region9: #{discriminator_forward.8} parent=5 // pred_check
      _
    $region10: #{discriminator_forward.8} parent=5 // pred_check_branch
      %152 = sbr.rel (%p149) target = $region12
    $region11: #{discriminator_forward.8} parent=5 // pred_region
      %s153 = ssub.s32 %s10, 1
      // Predicated region
      $region13: #{discriminator_forward.8} parent=11 // pred_check
        %p154 = pneg %p48
      $region14: #{discriminator_forward.8} parent=11 // pred_check_branch
        %156 = sbr.rel (%p154) target = $region16
      $region15: #{discriminator_forward.8} parent=11 // pred_region
        %s157 = smul.u32 4, %s20
        %p158 = scmp.lt.s32.totalorder %s157, 3
        %s159 = scalar_select %p158, %s157, 3
        %s160 = smul.addr %s159, 4
        %s161 = smul.addr %s160, 4
        %s162 = scalar_lea.vmem %s0, %s161
        %s163 = smul.u32 4, %s20
      $region16: #{discriminator_forward.8} parent=11 // pred_fallthru
        _
      // Predicated region
      $region17: #{discriminator_forward.8} parent=11 // pred_check
        %p164 = pneg %p69
      $region18: #{discriminator_forward.8} parent=11 // pred_check_branch
        %166 = sbr.rel (%p164) target = $region20
      $region19: #{discriminator_forward.8} parent=11 // pred_region
        _
      $region20: #{discriminator_forward.8} parent=11 // pred_fallthru
        _
      // Predicated region
      $region21: #{discriminator_forward.8} parent=11 // pred_check
        %p167 = pneg %p90
      $region22: #{discriminator_forward.8} parent=11 // pred_check_branch
        %169 = sbr.rel (%p167) target = $region24
      $region23: #{discriminator_forward.8} parent=11 // pred_region
        _
      $region24: #{discriminator_forward.8} parent=11 // pred_fallthru
        _
      // Predicated region
      $region25: #{discriminator_forward.8} parent=11 // pred_check
        %p170 = pneg %p111
      $region26: #{discriminator_forward.8} parent=11 // pred_check_branch
        %172 = sbr.rel (%p170) target = $region28
      $region27: #{discriminator_forward.8} parent=11 // pred_region
        _
      $region28: #{discriminator_forward.8} parent=11 // pred_fallthru
        _
    $region12: #{discriminator_forward.8} parent=5 // pred_fallthru
      _
    %p173 = scmp.lt.s32.totalorder %s10, 2
    // Predicated region
    $region29: #{discriminator_forward.8} parent=5 // pred_check
      %p174 = pneg %p173
    $region30: #{discriminator_forward.8} parent=5 // pred_check_branch
      %176 = sbr.rel (%p174) target = $region32
    $region31: #{discriminator_forward.8} parent=5 // pred_region
      _
    $region32: #{discriminator_forward.8} parent=5 // pred_fallthru
      _
    %p177 = scmp.le.s32.totalorder 1, %s10
    %p178 = scmp.lt.s32.totalorder %s10, 3
    %p179 = pnand %p177, %p178
    %p180 = pneg %p179
    // Predicated region
    $region33: #{discriminator_forward.8} parent=5 // pred_check
      _
    $region34: #{discriminator_forward.8} parent=5 // pred_check_branch
      %182 = sbr.rel (%p179) target = $region36
    $region35: #{discriminator_forward.8} parent=5 // pred_region
      %s183 = ssub.s32 %s10, 1
      %s184 = smul.u32 4, %s20
      %p185 = scmp.lt.s32.totalorder %s184, 3
      %s186 = scalar_select %p185, %s184, 3
      %s187 = smul.addr %s186, 4
      %s188 = smul.addr %s187, 4
      %s189 = scalar_lea.vmem %s0, %s188
      %p190 = pneg %p48
      %p191 = pneg %p45
      %p192 = pneg %p69
      %p193 = pneg %p66
      %p194 = pneg %p90
      %p195 = pneg %p87
      %p196 = pneg %p111
      %p197 = pneg %p108
      %p198 = pneg %p139
      %p199 = pneg %p136
      %s200 = smul.u32 %s19, %s20
      %s201 = smul.u32 4, %s200
      %p202 = scmp.lt.s32.totalorder %s201, 3
      %s203 = scalar_select %p202, %s201, 3
      %s204 = smul.addr %s203, 4
      %s205 = scalar_lea.vmem %s4, %s204
      %s206 = smul.u32 4, %s20
      %p207 = scmp.lt.s32.totalorder %s206, 3
      %s208 = scalar_select %p207, %s206, 3
      %s209 = smul.addr %s208, 4
      %s210 = smul.addr %s209, 4
      %s211 = scalar_lea.vmem %s0, %s210
      %s212 = smul.u32 4, %s20
      %s213 = smul.u32 %s19, %s20
      %s214 = smul.u32 4, %s213
      %p215 = scmp.lt.s32.totalorder %s214, 3
      %s216 = scalar_select %p215, %s214, 3
      %s217 = smul.addr %s216, 4
      %s218 = scalar_lea.vmem %s4, %s217
      %s219 = smul.u32 %s19, %s20
      %s220 = smul.u32 4, %s219
      %v222 = vld [vmem:[%s211] sm:$0xff]
      %v223 = vld [vmem:[%s211 + $0x8] sm:$0xff]
      %v224 = vld [vmem:[%s211 + $0x10] sm:$0xff]
      %v225 = vld [vmem:[%s211 + $0x18] sm:$0xff]
      %v226 = vld [vmem:[%s211 + $0x20] sm:$0xff]
      %v227 = vld [vmem:[%s211 + $0x28] sm:$0xff]
      %v228 = vld [vmem:[%s211 + $0x30] sm:$0xff]
      %v229 = vld [vmem:[%s211 + $0x38] sm:$0xff]
      %v230 = vld [vmem:[%s1] sm:$0xf]
      %v231 = vld [vmem:[%s1 + $0x4] sm:$0xf]
      %v232 = vld [vmem:[%s1 + $0x8] sm:$0xf]
      %v233 = vld [vmem:[%s1 + $0xc] sm:$0xf]
      %v234 = vld [vmem:[%s1 + $0x10] sm:$0xf]
      %v235 = vld [vmem:[%s1 + $0x14] sm:$0xf]
      %v236 = vld [vmem:[%s1 + $0x18] sm:$0xf]
      %v237 = vld [vmem:[%s1 + $0x1c] sm:$0xf]
      %v238 = vld [vmem:[%s1 + $0x20] sm:$0xf]
      %v239 = vld [vmem:[%s1 + $0x24] sm:$0xf]
      %v240 = vld [vmem:[%s1 + $0x28] sm:$0xf]
      %v241 = vld [vmem:[%s1 + $0x2c] sm:$0xf]
      %v242 = vld [vmem:[%s1 + $0x30] sm:$0xf]
      %v243 = vld [vmem:[%s1 + $0x34] sm:$0xf]
      %v244 = vld [vmem:[%s1 + $0x38] sm:$0xf]
      %v245 = vld [vmem:[%s1 + $0x3c] sm:$0xf]
      %v246 = vld [vmem:[%s1 + $0x40] sm:$0xf]
      %v247 = vld [vmem:[%s1 + $0x44] sm:$0xf]
      %v248 = vld [vmem:[%s1 + $0x48] sm:$0xf]
      %v249 = vld [vmem:[%s1 + $0x4c] sm:$0xf]
      %v250 = vld [vmem:[%s1 + $0x50] sm:$0xf]
      %v251 = vld [vmem:[%s1 + $0x54] sm:$0xf]
      %v252 = vld [vmem:[%s1 + $0x58] sm:$0xf]
      %v253 = vld [vmem:[%s1 + $0x5c] sm:$0xf]
      %v254 = vld [vmem:[%s1 + $0x60] sm:$0xf]
      %v255 = vld [vmem:[%s1 + $0x64] sm:$0xf]
      %v256 = vld [vmem:[%s1 + $0x68] sm:$0xf]
      %v257 = vld [vmem:[%s1 + $0x6c] sm:$0xf]
      %v258 = vld [vmem:[%s1 + $0x70] sm:$0xf]
      %v259 = vld [vmem:[%s1 + $0x74] sm:$0xf]
      %v260 = vld [vmem:[%s1 + $0x78] sm:$0xf]
      %v261 = vld [vmem:[%s1 + $0x7c] sm:$0xf]
      %v262 = vld [vmem:[%s1 + $0x80] sm:$0xf]
      %v263 = vld [vmem:[%s1 + $0x84] sm:$0xf]
      %v264 = vld [vmem:[%s1 + $0x88] sm:$0xf]
      %v265 = vld [vmem:[%s1 + $0x8c] sm:$0xf]
      %v266 = vld [vmem:[%s1 + $0x90] sm:$0xf]
      %v267 = vld [vmem:[%s1 + $0x94] sm:$0xf]
      %v268 = vld [vmem:[%s1 + $0x98] sm:$0xf]
      %v269 = vld [vmem:[%s1 + $0x9c] sm:$0xf]
      %v270 = vld [vmem:[%s1 + $0xa0] sm:$0xf]
      %v271 = vld [vmem:[%s1 + $0xa4] sm:$0xf]
      %v272 = vld [vmem:[%s1 + $0xa8] sm:$0xf]
      %v273 = vld [vmem:[%s1 + $0xac] sm:$0xf]
      %v274 = vld [vmem:[%s1 + $0xb0] sm:$0xf]
      %v275 = vld [vmem:[%s1 + $0xb4] sm:$0xf]
      %v276 = vld [vmem:[%s1 + $0xb8] sm:$0xf]
      %v277 = vld [vmem:[%s1 + $0xbc] sm:$0xf]
      %v278 = vld [vmem:[%s1 + $0xc0] sm:$0xf]
      %v279 = vld [vmem:[%s1 + $0xc4] sm:$0xf]
      %v280 = vld [vmem:[%s1 + $0xc8] sm:$0xf]
      %v281 = vld [vmem:[%s1 + $0xcc] sm:$0xf]
      %v282 = vld [vmem:[%s1 + $0xd0] sm:$0xf]
      %v283 = vld [vmem:[%s1 + $0xd4] sm:$0xf]
      %v284 = vld [vmem:[%s1 + $0xd8] sm:$0xf]
      %v285 = vld [vmem:[%s1 + $0xdc] sm:$0xf]
      %v286 = vld [vmem:[%s1 + $0xe0] sm:$0xf]
      %v287 = vld [vmem:[%s1 + $0xe4] sm:$0xf]
      %v288 = vld [vmem:[%s1 + $0xe8] sm:$0xf]
      %v289 = vld [vmem:[%s1 + $0xec] sm:$0xf]
      %v290 = vld [vmem:[%s1 + $0xf0] sm:$0xf]
      %v291 = vld [vmem:[%s1 + $0xf4] sm:$0xf]
      %v292 = vld [vmem:[%s1 + $0xf8] sm:$0xf]
      %v293 = vld [vmem:[%s1 + $0xfc] sm:$0xf]
      %v302 = vunpack.c.l.b16 %v222
      %v303 = vunpack.c.h.b16 %v222
      %v304 = vunpack.c.l.b16 %v223
      %v305 = vunpack.c.h.b16 %v223
      %v306 = vunpack.c.l.b16 %v224
      %v307 = vunpack.c.h.b16 %v224
      %v308 = vunpack.c.l.b16 %v225
      %v309 = vunpack.c.h.b16 %v225
      %v310 = vunpack.c.l.b16 %v226
      %v311 = vunpack.c.h.b16 %v226
      %v312 = vunpack.c.l.b16 %v227
      %v313 = vunpack.c.h.b16 %v227
      %v314 = vunpack.c.l.b16 %v228
      %v315 = vunpack.c.h.b16 %v228
      %v316 = vunpack.c.l.b16 %v229
      %v317 = vunpack.c.h.b16 %v229
      %v318 = vpack.c.b16 %v306, %v302
      %v319 = vpack.c.b16 %v307, %v303
      %v320 = vpack.c.b16 %v308, %v304
      %v321 = vpack.c.b16 %v309, %v305
      %v322 = vpack.c.b16 %v314, %v310
      %v323 = vpack.c.b16 %v315, %v311
      %v324 = vpack.c.b16 %v316, %v312
      %v325 = vpack.c.b16 %v317, %v313
      %v398 = vunpack.c.l.b16 %v230
      %v399 = vunpack.c.l.b16 %v231
      %v400 = vunpack.c.l.b16 %v232
      %v401 = vunpack.c.l.b16 %v233
      %v402 = vunpack.c.l.b16 %v234
      %v403 = vunpack.c.l.b16 %v235
      %v404 = vunpack.c.l.b16 %v236
      %v405 = vunpack.c.l.b16 %v237
      %v406 = vunpack.c.l.b16 %v238
      %v407 = vunpack.c.l.b16 %v239
      %v408 = vunpack.c.l.b16 %v240
      %v409 = vunpack.c.l.b16 %v241
      %v410 = vunpack.c.l.b16 %v242
      %v411 = vunpack.c.l.b16 %v243
      %v412 = vunpack.c.l.b16 %v244
      %v413 = vunpack.c.l.b16 %v245
      %v414 = vunpack.c.l.b16 %v246
      %v415 = vunpack.c.l.b16 %v247
      %v416 = vunpack.c.l.b16 %v248
      %v417 = vunpack.c.l.b16 %v249
      %v418 = vunpack.c.l.b16 %v250
      %v419 = vunpack.c.l.b16 %v251
      %v420 = vunpack.c.l.b16 %v252
      %v421 = vunpack.c.l.b16 %v253
      %v422 = vunpack.c.l.b16 %v254
      %v423 = vunpack.c.l.b16 %v255
      %v424 = vunpack.c.l.b16 %v256
      %v425 = vunpack.c.l.b16 %v257
      %v426 = vunpack.c.l.b16 %v258
      %v427 = vunpack.c.l.b16 %v259
      %v428 = vunpack.c.l.b16 %v260
      %v429 = vunpack.c.l.b16 %v261
      %v430 = vunpack.c.l.b16 %v262
      %v431 = vunpack.c.l.b16 %v263
      %v432 = vunpack.c.l.b16 %v264
      %v433 = vunpack.c.l.b16 %v265
      %v434 = vunpack.c.l.b16 %v266
      %v435 = vunpack.c.l.b16 %v267
      %v436 = vunpack.c.l.b16 %v268
      %v437 = vunpack.c.l.b16 %v269
      %v438 = vunpack.c.l.b16 %v270
      %v439 = vunpack.c.l.b16 %v271
      %v440 = vunpack.c.l.b16 %v272
      %v441 = vunpack.c.l.b16 %v273
      %v442 = vunpack.c.l.b16 %v274
      %v443 = vunpack.c.l.b16 %v275
      %v444 = vunpack.c.l.b16 %v276
      %v445 = vunpack.c.l.b16 %v277
      %v446 = vunpack.c.l.b16 %v278
      %v447 = vunpack.c.l.b16 %v279
      %v448 = vunpack.c.l.b16 %v280
      %v449 = vunpack.c.l.b16 %v281
      %v450 = vunpack.c.l.b16 %v282
      %v451 = vunpack.c.l.b16 %v283
      %v452 = vunpack.c.l.b16 %v284
      %v453 = vunpack.c.l.b16 %v285
      %v454 = vunpack.c.l.b16 %v286
      %v455 = vunpack.c.l.b16 %v287
      %v456 = vunpack.c.l.b16 %v288
      %v457 = vunpack.c.l.b16 %v289
      %v458 = vunpack.c.l.b16 %v290
      %v459 = vunpack.c.l.b16 %v291
      %v460 = vunpack.c.l.b16 %v292
      %v461 = vunpack.c.l.b16 %v293
      %v462 = vpack.c.b16 %v399, %v398
      %v463 = vpack.c.b16 %v401, %v400
      %v464 = vpack.c.b16 %v403, %v402
      %v465 = vpack.c.b16 %v405, %v404
      %v466 = vpack.c.b16 %v407, %v406
      %v467 = vpack.c.b16 %v409, %v408
      %v468 = vpack.c.b16 %v411, %v410
      %v469 = vpack.c.b16 %v413, %v412
      %v470 = vpack.c.b16 %v415, %v414
      %v471 = vpack.c.b16 %v417, %v416
      %v472 = vpack.c.b16 %v419, %v418
      %v473 = vpack.c.b16 %v421, %v420
      %v474 = vpack.c.b16 %v423, %v422
      %v475 = vpack.c.b16 %v425, %v424
      %v476 = vpack.c.b16 %v427, %v426
      %v477 = vpack.c.b16 %v429, %v428
      %v478 = vpack.c.b16 %v431, %v430
      %v479 = vpack.c.b16 %v433, %v432
      %v480 = vpack.c.b16 %v435, %v434
      %v481 = vpack.c.b16 %v437, %v436
      %v482 = vpack.c.b16 %v439, %v438
      %v483 = vpack.c.b16 %v441, %v440
      %v484 = vpack.c.b16 %v443, %v442
      %v485 = vpack.c.b16 %v445, %v444
      %v486 = vpack.c.b16 %v447, %v446
      %v487 = vpack.c.b16 %v449, %v448
      %v488 = vpack.c.b16 %v451, %v450
      %v489 = vpack.c.b16 %v453, %v452
      %v490 = vpack.c.b16 %v455, %v454
      %v491 = vpack.c.b16 %v457, %v456
      %v492 = vpack.c.b16 %v459, %v458
      %v493 = vpack.c.b16 %v461, %v460
      %526 = vmatprep.subr.bf16.mxu0 0
      %527 = vmatpush1.bf16.msra.mxu0 %v462
      %528 = vmatprep.subr.bf16.mxu0 0
      %529 = vmatpush1.bf16.msra.mxu0 %v463
      %530 = vmatprep.subr.bf16.mxu0 0
      %531 = vmatpush1.bf16.msra.mxu0 %v464
      %532 = vmatprep.subr.bf16.mxu0 0
      %533 = vmatpush1.bf16.msra.mxu0 %v465
      %534 = vmatprep.subr.bf16.mxu0 0
      %535 = vmatpush1.bf16.msra.mxu0 %v466
      %536 = vmatprep.subr.bf16.mxu0 0
      %537 = vmatpush1.bf16.msra.mxu0 %v467
      %538 = vmatprep.subr.bf16.mxu0 0
      %539 = vmatpush1.bf16.msra.mxu0 %v468
      %540 = vmatprep.subr.bf16.mxu0 0
      %541 = vmatpush1.bf16.msra.mxu0 %v469
      %542 = vmatprep.subr.bf16.mxu0 0
      %543 = vmatpush1.bf16.msra.mxu0 %v470
      %544 = vmatprep.subr.bf16.mxu0 0
      %545 = vmatpush1.bf16.msra.mxu0 %v471
      %546 = vmatprep.subr.bf16.mxu0 0
      %547 = vmatpush1.bf16.msra.mxu0 %v472
      %548 = vmatprep.subr.bf16.mxu0 0
      %549 = vmatpush1.bf16.msra.mxu0 %v473
      %550 = vmatprep.subr.bf16.mxu0 0
      %551 = vmatpush1.bf16.msra.mxu0 %v474
      %552 = vmatprep.subr.bf16.mxu0 0
      %553 = vmatpush1.bf16.msra.mxu0 %v475
      %554 = vmatprep.subr.bf16.mxu0 0
      %555 = vmatpush1.bf16.msra.mxu0 %v476
      %556 = vmatprep.subr.bf16.mxu0 0
      %557 = vmatpush1.bf16.msra.mxu0 %v477
      %558 = vmatprep.mubr.bf16.mxu0 %v319
      %559 = vmatmul.mubr.bf16.gmra.mrb[0].mxu0 %v318
      %v560 = vpop.f32.mrb[0].mxu0
      %v561 = vadd.f32 0.0, %v560
      %v562 = vpop.f32.mrb[0].mxu0
      %v563 = vpop.f32.mrb[0].mxu0
      %v564 = vadd.f32 0.0, %v563
      %v565 = vpop.f32.mrb[0].mxu0
      %566 = vmatprep.mubr.bf16.mxu0 %v323
      %567 = vmatmul.mubr.bf16.gmra.mrb[0].mxu0 %v322
      %v568 = vpop.f32.mrb[0].mxu0
      %v569 = vadd.f32 0.0, %v568
      %v570 = vpop.f32.mrb[0].mxu0
      %v571 = vpop.f32.mrb[0].mxu0
      %v572 = vadd.f32 0.0, %v571
      %v573 = vpop.f32.mrb[0].mxu0
      %574 = vdwg.mxu0
      %575 = vmatprep.subr.bf16.mxu0 0
      %576 = vmatpush1.bf16.msra.mxu0 %v478
      %577 = vmatprep.subr.bf16.mxu0 0
      %578 = vmatpush1.bf16.msra.mxu0 %v479
      %579 = vmatprep.subr.bf16.mxu0 0
      %580 = vmatpush1.bf16.msra.mxu0 %v480
      %581 = vmatprep.subr.bf16.mxu0 0
      %582 = vmatpush1.bf16.msra.mxu0 %v481
      %583 = vmatprep.subr.bf16.mxu0 0
      %584 = vmatpush1.bf16.msra.mxu0 %v482
      %585 = vmatprep.subr.bf16.mxu0 0
      %586 = vmatpush1.bf16.msra.mxu0 %v483
      %587 = vmatprep.subr.bf16.mxu0 0
      %588 = vmatpush1.bf16.msra.mxu0 %v484
      %589 = vmatprep.subr.bf16.mxu0 0
      %590 = vmatpush1.bf16.msra.mxu0 %v485
      %591 = vmatprep.subr.bf16.mxu0 0
      %592 = vmatpush1.bf16.msra.mxu0 %v486
      %593 = vmatprep.subr.bf16.mxu0 0
      %594 = vmatpush1.bf16.msra.mxu0 %v487
      %595 = vmatprep.subr.bf16.mxu0 0
      %596 = vmatpush1.bf16.msra.mxu0 %v488
      %597 = vmatprep.subr.bf16.mxu0 0
      %598 = vmatpush1.bf16.msra.mxu0 %v489
      %599 = vmatprep.subr.bf16.mxu0 0
      %600 = vmatpush1.bf16.msra.mxu0 %v490
      %601 = vmatprep.subr.bf16.mxu0 0
      %602 = vmatpush1.bf16.msra.mxu0 %v491
      %603 = vmatprep.subr.bf16.mxu0 0
      %604 = vmatpush1.bf16.msra.mxu0 %v492
      %605 = vmatprep.subr.bf16.mxu0 0
      %606 = vmatpush1.bf16.msra.mxu0 %v493
      %607 = vmatprep.mubr.bf16.mxu0 %v321
      %608 = vmatmul.mubr.bf16.gmra.mrb[0].mxu0 %v320
      %v609 = vpop.f32.mrb[0].mxu0
      %v610 = vadd.f32 %v561, %v609
      %v611 = vpop.f32.mrb[0].mxu0
      %v612 = vpop.f32.mrb[0].mxu0
      %v613 = vadd.f32 %v564, %v612
      %v614 = vpop.f32.mrb[0].mxu0
      %615 = vmatprep.mubr.bf16.mxu0 %v325
      %616 = vmatmul.mubr.bf16.gmra.mrb[0].mxu0 %v324
      %v617 = vpop.f32.mrb[0].mxu0
      %v618 = vadd.f32 %v569, %v617
      %v619 = vpop.f32.mrb[0].mxu0
      %v620 = vpop.f32.mrb[0].mxu0
      %v621 = vadd.f32 %v572, %v620
      %v622 = vpop.f32.mrb[0].mxu0
      %623 = vdwg.mxu0
      %p624 = scmp.eq.s32.totalorder %s19, 0
      %p625 = scmp.eq.s32.totalorder %s20, 0
      %p626 = pnand %p624, %p625
      %p627 = pneg %p626
      // Predicated region
      $region37: #{discriminator_forward.8} parent=35 // pred_check
        _
      $region38: #{discriminator_forward.8} parent=35 // pred_check_branch
        %629 = sbr.rel (%p626) target = $region40
      $region39: #{discriminator_forward.8} parent=35 // pred_region
        %vm630 = vcmask 516096
        %631 = vst.msk [vmem:[#allocation2] sm:$0x1] %vm630, 0.0
        %632 = vst.msk [vmem:[#allocation3] sm:$0x1] %vm630, 0.0
      $region40: #{discriminator_forward.8} parent=35 // pred_fallthru
        _
      // Predicated region
      $region41: #{discriminator_forward.8} parent=35 // pred_check
        %p633 = pneg %p624
      $region42: #{discriminator_forward.8} parent=35 // pred_check_branch
        %635 = sbr.rel (%p633) target = $region44
      $region43: #{discriminator_forward.8} parent=35 // pred_region
        %v636 = vld [vmem:[#allocation2] sm:$0x1]
        %vm637 = vcmask 523264
        %v638 = vsel %vm637, %v610, 0.0
        %v639 = vsel %vm637, %v613, 0.0
        %v640 = vadd.f32 %v638, %v639
        %v641 = vsel %vm637, %v618, 0.0
        %v642 = vadd.f32 %v640, %v641
        %v643 = vsel %vm637, %v621, 0.0
        %v644 = vadd.f32 %v642, %v643
        %v645 = vrot.slane %v644, 4
        %v646 = vadd.f32 %v644, %v645
        %v647 = vrot.slane %v646, 2
        %v648 = vadd.f32 %v646, %v647
        %v649 = vrot.slane %v648, 1
        %v650 = vadd.f32 %v648, %v649
        %v651 = vadd.f32 %v636, %v650
        %vm652 = vcmask 516096
        %653 = vst.msk [vmem:[#allocation2] sm:$0x1] %vm652, %v651
        %v654 = vld [vmem:[#allocation3] sm:$0x1]
        %v655 = vmul.f32 %v610, %v610
        %v656 = vmul.f32 %v613, %v613
        %v657 = vmul.f32 %v618, %v618
        %v658 = vmul.f32 %v621, %v621
        %v659 = vsel %vm637, %v655, 0.0
        %v660 = vsel %vm637, %v656, 0.0
        %v661 = vadd.f32 %v659, %v660
        %v662 = vsel %vm637, %v657, 0.0
        %v663 = vadd.f32 %v661, %v662
        %v664 = vsel %vm637, %v658, 0.0
        %v665 = vadd.f32 %v663, %v664
        %v666 = vrot.slane %v665, 4
        %v667 = vadd.f32 %v665, %v666
        %v668 = vrot.slane %v667, 2
        %v669 = vadd.f32 %v667, %v668
        %v670 = vrot.slane %v669, 1
        %v671 = vadd.f32 %v669, %v670
        %v672 = vadd.f32 %v654, %v671
        %673 = vst.msk [vmem:[#allocation3] sm:$0x1] %vm652, %v672
      $region44: #{discriminator_forward.8} parent=35 // pred_fallthru
        _
      %p674 = scmp.eq.s32.totalorder %s19, 1
      // Predicated region
      $region45: #{discriminator_forward.8} parent=35 // pred_check
        %p675 = pneg %p674
      $region46: #{discriminator_forward.8} parent=35 // pred_check_branch
        %677 = sbr.rel (%p675) target = $region48
      $region47: #{discriminator_forward.8} parent=35 // pred_region
        %v678 = vld [vmem:[#allocation2] sm:$0x1]
        %v679 = vmul.f32 %v678, 0.03125
        %v680 = vld [vmem:[#allocation3] sm:$0x1]
        %v681 = vmul.f32 %v680, 0.03125
        %v682 = vmul.f32 %v679, %v679
        %v683 = vsub.f32 %v681, %v682
        %v685 = vlaneseq
        %v686 = vshrl.u32 %v685, 7
        %v687 = vsub.s32 0, %v686
        %v688 = vrot.slane %v679, %v687
        %v690 = vsub.f32 %v610, %v688
        %v691 = vsub.f32 %v613, %v688
        %v692 = vsub.f32 %v618, %v688
        %v693 = vsub.f32 %v621, %v688
        %v694 = vadd.f32 %v683, 1e-05
        %v695 = vrsqrt.pop %v694
        %v697 = vlaneseq
        %v698 = vshrl.u32 %v697, 7
        %v699 = vsub.s32 0, %v698
        %v700 = vrot.slane %v695, %v699
        %v702 = vmul.f32 %v690, %v700
        %v703 = vmul.f32 %v691, %v700
        %v704 = vmul.f32 %v692, %v700
        %v705 = vmul.f32 %v693, %v700
        %v706 = vld [vmem:[%s2] sm:$0x1]
        %v708 = vlaneseq
        %v709 = vshrl.u32 %v708, 7
        %v710 = vsub.s32 0, %v709
        %v711 = vrot.slane %v706, %v710
        %v713 = vmul.f32 %v702, %v711
        %v714 = vmul.f32 %v703, %v711
        %v715 = vmul.f32 %v704, %v711
        %v716 = vmul.f32 %v705, %v711
        %v717 = vld [vmem:[%s3] sm:$0x1]
        %v719 = vlaneseq
        %v720 = vshrl.u32 %v719, 7
        %v721 = vsub.s32 0, %v720
        %v722 = vrot.slane %v717, %v721
        %v724 = vadd.f32 %v713, %v722
        %v725 = vadd.f32 %v714, %v722
        %v726 = vadd.f32 %v715, %v722
        %v727 = vadd.f32 %v716, %v722
        %vm728 = vcmp.gt.f32.partialorder %v724, 0.0
        %vm729 = vcmp.gt.f32.partialorder %v725, 0.0
        %vm730 = vcmp.gt.f32.partialorder %v726, 0.0
        %vm731 = vcmp.gt.f32.partialorder %v727, 0.0
        %v732 = vmul.f32 %v724, 0.2
        %v733 = vmul.f32 %v725, 0.2
        %v734 = vmul.f32 %v726, 0.2
        %v735 = vmul.f32 %v727, 0.2
        %v736 = vsel %vm728, %v724, %v732
        %v737 = vsel %vm729, %v725, %v733
        %v738 = vsel %vm730, %v726, %v734
        %v739 = vsel %vm731, %v727, %v735
        %v740 = vpack.c.bf16 %v737, %v736
        %v741 = vpack.c.bf16 %v739, %v738
        %v744 = vunpack.c.l.b16 %v740
        %v745 = vunpack.c.h.b16 %v740
        %v746 = vunpack.c.l.b16 %v741
        %v747 = vunpack.c.h.b16 %v741
        %v748 = vpack.c.b16 %v744, %v744
        %v749 = vpack.c.b16 %v745, %v745
        %v750 = vpack.c.b16 %v746, %v746
        %v751 = vpack.c.b16 %v747, %v747
        %vm756 = vcmask 519168
        %757 = vst.msk [vmem:[%s218] sm:$0xf] %vm756, %v748
        %758 = vst.msk [vmem:[%s218 + $0x4] sm:$0xf] %vm756, %v749
        %759 = vst.msk [vmem:[%s218 + $0x8] sm:$0xf] %vm756, %v750
        %760 = vst.msk [vmem:[%s218 + $0xc] sm:$0xf] %vm756, %v751
      $region48: #{discriminator_forward.8} parent=35 // pred_fallthru
        _
      %s761 = smul.u32 %s19, %s20
      %s762 = smul.u32 4, %s761
      %p763 = scmp.lt.s32.totalorder %s762, 3
      %s764 = scalar_select %p763, %s762, 3
      %s765 = smul.addr %s764, 4
      %s766 = scalar_lea.vmem %s4, %s765
      // Predicated region
      $region49: #{discriminator_forward.8} parent=35 // pred_check
        %p767 = pneg %p136
      $region50: #{discriminator_forward.8} parent=35 // pred_check_branch
        %769 = sbr.rel (%p767) target = $region52
      $region51: #{discriminator_forward.8} parent=35 // pred_region
        %s770 = smul.u32 %s19, %s20
        %s771 = smul.u32 4, %s770
      $region52: #{discriminator_forward.8} parent=35 // pred_fallthru
        _
    $region36: #{discriminator_forward.8} parent=5 // pred_fallthru
      _
    %p772 = scmp.le.s32.totalorder 2, %s10
    // Predicated region
    $region53: #{discriminator_forward.8} parent=5 // pred_check
      %p773 = pneg %p772
    $region54: #{discriminator_forward.8} parent=5 // pred_check_branch
      %775 = sbr.rel (%p773) target = $region56
    $region55: #{discriminator_forward.8} parent=5 // pred_region
      %s776 = ssub.s32 %s10, 2
      // Predicated region
      $region57: #{discriminator_forward.8} parent=55 // pred_check
        %p777 = pneg %p142
      $region58: #{discriminator_forward.8} parent=55 // pred_check_branch
        %779 = sbr.rel (%p777) target = $region60
      $region59: #{discriminator_forward.8} parent=55 // pred_region
        %s780 = smul.u32 %s21, %s22
        %s781 = smul.u32 4, %s780
        %p782 = scmp.lt.s32.totalorder %s781, 3
        %s783 = scalar_select %p782, %s781, 3
        %s784 = smul.addr %s783, 4
        %s785 = scalar_lea.vmem %s4, %s784
      $region60: #{discriminator_forward.8} parent=55 // pred_fallthru
        _
    $region56: #{discriminator_forward.8} parent=5 // pred_fallthru
      _
  $region6: #{discriminator_forward.8} parent=0 // loop_footer
    %s14 = sadd.s32 1, %s10
  $region7: #{discriminator_forward.8} parent=0 // loop_footer_branch
    %9 = sbr.rel target = $region3
  $region8: #{discriminator_forward.8} parent=0 // loop_exit
    _

// kernel: discriminator_forward.9
$region0: #{discriminator_forward.9}
  #allocation0 [shape = 'u32[]', space=smem, size = 0x4, offset = 0x4, fixed_abs, tag = 'smem constant byte address 0x4 - core index']
  #allocation1 [shape = 'u32[144,128]{1,0:T(1,128)}', space=vmem, size = 0x12000, scoped, tag = 'internal scratch']
  %s0 = inlined_call_operand.vmem [shape: bf16[2,1024], index: 0, kind: input, shape index: {}]
  %s1 = inlined_call_operand.vmem [shape: bf16[1,1024], index: 1, kind: input, shape index: {}]
  %s2 = inlined_call_operand.vmem [shape: f32[2,1], index: 2, kind: output, shape index: {}]
  %s3 = sld [smem:[#allocation0]]
  $region18: #{discriminator_forward.9} parent=0
    _
  %s5 = ssub.s32 1, %s3
  %s6 = scalar_select 0, %s5, %s3
  // Predicated region
  $region2: #{discriminator_forward.9} parent=0 // pred_check
    _
  $region3: #{discriminator_forward.9} parent=0 // pred_check_branch
    %8 = sbr.rel (0) target = $region5
  $region4: #{discriminator_forward.9} parent=0 // pred_region
    _
  $region5: #{discriminator_forward.9} parent=0 // pred_fallthru
    _
  // Predicated region
  $region6: #{discriminator_forward.9} parent=0 // pred_check
    _
  $region7: #{discriminator_forward.9} parent=0 // pred_check_branch
    %10 = sbr.rel (0) target = $region9
  $region8: #{discriminator_forward.9} parent=0 // pred_region
    _
  $region9: #{discriminator_forward.9} parent=0 // pred_fallthru
    _
  %v11 = vld [vmem:[%s0] sm:$0xff]
  %v12 = vunpack.c.l.bf16 %v11
  %v13 = vunpack.c.h.bf16 %v11
  %v14 = vld [vmem:[%s1] sm:$0xff]
  %v15 = vunpack.c.l.bf16 %v14
  %v16 = vunpack.c.h.bf16 %v14
  %v19 = vlaneseq
  %v20 = vshrl.u32 %v19, 7
  %v21 = vsub.s32 0, %v20
  %v22 = vrot.slane %v15, %v21
  %v23 = vlaneseq
  %v24 = vshrl.u32 %v23, 7
  %v25 = vsub.s32 2, %v24
  %v26 = vrot.slane %v15, %v25
  %v27 = vlaneseq
  %v28 = vshrl.u32 %v27, 7
  %v29 = vsub.s32 4, %v28
  %v30 = vrot.slane %v15, %v29
  %v31 = vlaneseq
  %v32 = vshrl.u32 %v31, 7
  %v33 = vsub.s32 6, %v32
  %v34 = vrot.slane %v15, %v33
  %v35 = vlaneseq
  %v36 = vshrl.u32 %v35, 7
  %v37 = vsub.s32 0, %v36
  %v38 = vrot.slane %v16, %v37
  %v39 = vlaneseq
  %v40 = vshrl.u32 %v39, 7
  %v41 = vsub.s32 2, %v40
  %v42 = vrot.slane %v16, %v41
  %v43 = vlaneseq
  %v44 = vshrl.u32 %v43, 7
  %v45 = vsub.s32 4, %v44
  %v46 = vrot.slane %v16, %v45
  %v47 = vlaneseq
  %v48 = vshrl.u32 %v47, 7
  %v49 = vsub.s32 6, %v48
  %v50 = vrot.slane %v16, %v49
  %v59 = vlaneseq
  %v60 = vshrl.u32 %v59, 7
  %v61 = vsub.s32 0, %v60
  %v62 = vrot.slane %v22, %v61
  %v63 = vlaneseq
  %v64 = vshrl.u32 %v63, 7
  %v65 = vsub.s32 0, %v64
  %v66 = vrot.slane %v26, %v65
  %v67 = vlaneseq
  %v68 = vshrl.u32 %v67, 7
  %v69 = vsub.s32 0, %v68
  %v70 = vrot.slane %v30, %v69
  %v71 = vlaneseq
  %v72 = vshrl.u32 %v71, 7
  %v73 = vsub.s32 0, %v72
  %v74 = vrot.slane %v34, %v73
  %v75 = vlaneseq
  %v76 = vshrl.u32 %v75, 7
  %v77 = vsub.s32 0, %v76
  %v78 = vrot.slane %v38, %v77
  %v79 = vlaneseq
  %v80 = vshrl.u32 %v79, 7
  %v81 = vsub.s32 0, %v80
  %v82 = vrot.slane %v42, %v81
  %v83 = vlaneseq
  %v84 = vshrl.u32 %v83, 7
  %v85 = vsub.s32 0, %v84
  %v86 = vrot.slane %v46, %v85
  %v87 = vlaneseq
  %v88 = vshrl.u32 %v87, 7
  %v89 = vsub.s32 0, %v88
  %v90 = vrot.slane %v50, %v89
  %v99 = vcombine.low %v62, %v66
  %v100 = vcombine.low %v70, %v74
  %v102 = vunpack.c.l.s4 1983009808
  %v103 = vunpack.c.0.s8 %v102
  %v104 = vlaneseq
  %v105 = vshrl.u32 %v104, 7
  %v106 = vsub.s32 %v103, %v105
  %v107 = vrot.slane %v99, %v106
  %v109 = vunpack.c.l.s4 1983009808
  %v110 = vunpack.c.0.s8 %v109
  %v111 = vlaneseq
  %v112 = vshrl.u32 %v111, 7
  %v113 = vsub.s32 %v110, %v112
  %v114 = vrot.slane %v100, %v113
  %v115 = vcombine.low %v107, %v114
  %v116 = vcombine.low %v78, %v82
  %v117 = vcombine.low %v86, %v90
  %v119 = vunpack.c.l.s4 1983009808
  %v120 = vunpack.c.0.s8 %v119
  %v121 = vlaneseq
  %v122 = vshrl.u32 %v121, 7
  %v123 = vsub.s32 %v120, %v122
  %v124 = vrot.slane %v116, %v123
  %v126 = vunpack.c.l.s4 1983009808
  %v127 = vunpack.c.0.s8 %v126
  %v128 = vlaneseq
  %v129 = vshrl.u32 %v128, 7
  %v130 = vsub.s32 %v127, %v129
  %v131 = vrot.slane %v117, %v130
  %v132 = vcombine.low %v124, %v131
  %v135 = vmul.f32 %v12, %v115
  %v136 = vmul.f32 %v13, %v132
  %v139 = vcombine.high %v135, %v135
  %v141 = vunpack.c.l.s4 1983009808
  %v142 = vunpack.c.0.s8 %v141
  %v143 = vlaneseq
  %v144 = vshrl.u32 %v143, 7
  %v145 = vsub.s32 %v142, %v144
  %v146 = vrot.slane %v135, %v145
  %v148 = vunpack.c.l.s4 1983009808
  %v149 = vunpack.c.0.s8 %v148
  %v150 = vlaneseq
  %v151 = vshrl.u32 %v150, 7
  %v152 = vsub.s32 %v149, %v151
  %v153 = vrot.slane %v139, %v152
  %v154 = vcombine.high %v146, %v146
  %v155 = vcombine.high %v153, %v153
  %v156 = vcombine.high %v136, %v136
  %v158 = vunpack.c.l.s4 1983009808
  %v159 = vunpack.c.0.s8 %v158
  %v160 = vlaneseq
  %v161 = vshrl.u32 %v160, 7
  %v162 = vsub.s32 %v159, %v161
  %v163 = vrot.slane %v136, %v162
  %v165 = vunpack.c.l.s4 1983009808
  %v166 = vunpack.c.0.s8 %v165
  %v167 = vlaneseq
  %v168 = vshrl.u32 %v167, 7
  %v169 = vsub.s32 %v166, %v168
  %v170 = vrot.slane %v156, %v169
  %v171 = vcombine.high %v163, %v163
  %v172 = vcombine.high %v170, %v170
  %vm181 = vcmask 1041408
  %v182 = vsel %vm181, %v146, 0.0
  %v183 = vsel %vm181, %v154, 0.0
  %v184 = vadd.f32 %v182, %v183
  %v185 = vsel %vm181, %v153, 0.0
  %v186 = vadd.f32 %v184, %v185
  %v187 = vsel %vm181, %v155, 0.0
  %v188 = vadd.f32 %v186, %v187
  %v189 = vsel %vm181, %v163, 0.0
  %v190 = vadd.f32 %v188, %v189
  %v191 = vsel %vm181, %v171, 0.0
  %v192 = vadd.f32 %v190, %v191
  %v193 = vsel %vm181, %v170, 0.0
  %v194 = vadd.f32 %v192, %v193
  %v195 = vsel %vm181, %v172, 0.0
  %v196 = vadd.f32 %v194, %v195
  %197 = vadd.xlane.f32.xlu0 %v196
  %v198 = vpop.xlane.xlu0 %197
  %v199 = vxor.u32 %v198, 2147483648
  %v200 = vmul.f32 %v199, 1.442695
  %v201 = vpow.pop %v200
  %v202 = vadd.f32 %v201, 1.0
  %v203 = vrcp.pop %v202
  %v204 = vmul.f32 1.0, %v203
  %vm205 = vcmask 1024
  %206 = vst.msk [vmem:[%s2] sm:$0x3] %vm205, %v204
  // Predicated region
  $region10: #{discriminator_forward.9} parent=0 // pred_check
    _
  $region11: #{discriminator_forward.9} parent=0 // pred_check_branch
    %208 = sbr.rel (0) target = $region13
  $region12: #{discriminator_forward.9} parent=0 // pred_region
    _
  $region13: #{discriminator_forward.9} parent=0 // pred_fallthru
    _
  // Predicated region
  $region14: #{discriminator_forward.9} parent=0 // pred_check
    _
  $region15: #{discriminator_forward.9} parent=0 // pred_check_branch
    %210 = sbr.rel (0) target = $region17
  $region16: #{discriminator_forward.9} parent=0 // pred_region
    _
  $region17: #{discriminator_forward.9} parent=0 // pred_fallthru
    _

</llo_original>
